<compile_context>
chip_gen: v7x
topology: tpu7x:2x2x1
jax: 0.10.0
libtpu: 0.0.40
codegen_flags: <defaults>
</compile_context>

<pallas_src>
import jax
import jax.numpy as jnp
from jax.experimental import pallas as pl
from jax.experimental.pallas import tpu as pltpu


def _gated_conv1x1_kernel(gate_ref, w_ref, x_ref, o_ref):
    # gate_ref: (Cin, 1)    f32  pre-sigmoid per-channel gate
    # w_ref:    (Cout, Cin) bf16 1x1-conv weight (natural PyTorch layout)
    # x_ref:    (Cin, HW)   f32  activations in native (C, H*W) layout
    # o_ref:    (Cout, HW)  f32  output
    g = jax.nn.sigmoid(gate_ref[...])                      # (Cin, 1), EUP
    xg = (x_ref[...] * g).astype(jnp.bfloat16)             # (Cin, HW), VPU (row-scale)
    o_ref[...] = jnp.dot(
        w_ref[...], xg, preferred_element_type=jnp.float32  # MXU, f32 accumulate
    ).astype(o_ref.dtype)


def prepare_weight(weight):
    """One-time (init-time) weight prep, hoisted out of the per-call path:
    (Cout, Cin, 1, 1) f32 -> (Cout, Cin) bf16.  No transpose needed."""
    cout, cin = weight.shape[0], weight.shape[1]
    return weight.reshape(cout, cin).astype(jnp.bfloat16)


@jax.jit
def sigmoid_mul_conv1x1(x405, x401, w_mat):
    """x405: (1, Cin, 1, 1) gate (pre-sigmoid); x401: (1, Cin, H, W);
    w_mat: (Cout, Cin) bf16 from prepare_weight().  Returns (1, Cout, H, W)."""
    n, cin, h, w = x401.shape
    assert n == 1, "kernel written for batch 1 (as in the reference module)"
    cout = w_mat.shape[0]
    hw = h * w

    # Zero-copy layout changes (N == 1): no NCHW<->NHWC transposes.
    x_cols = x401.reshape(cin, hw)
    gate = x405.reshape(cin, 1).astype(jnp.float32)

    out = pl.pallas_call(
        _gated_conv1x1_kernel,
        out_shape=jax.ShapeDtypeStruct((cout, hw), x401.dtype),
        grid_spec=pltpu.PrefetchScalarGridSpec(
            num_scalar_prefetch=0,
            grid=(1,),
            in_specs=[
                pl.BlockSpec((cin, 1), lambda i: (0, 0)),      # gate (full)
                pl.BlockSpec((cout, cin), lambda i: (0, 0)),   # weight (full)
                pl.BlockSpec((cin, hw), lambda i: (0, 0)),     # x (full)
            ],
            out_specs=pl.BlockSpec((cout, hw), lambda i: (0, 0)),
        ),
        compiler_params=pltpu.CompilerParams(
            dimension_semantics=("arbitrary",),
        ),
        cost_estimate=pl.CostEstimate(
            flops=2 * hw * cin * cout,
            transcendentals=cin,
            bytes_accessed=cout * cin * 2 + cin * hw * 4 + cin * 4 + cout * hw * 4,
        ),
    )(gate, w_mat, x_cols)

    # (Cout, HW) -> (1, Cout, H, W): zero-copy reshape.
    return out.reshape(n, cout, h, w)


if __name__ == "__main__":
    key = jax.random.PRNGKey(0)
    k1, k2, k3 = jax.random.split(key, 3)

    # Shapes implied by the module's forward pass.
    x401 = jax.random.normal(k1, (1, 1536, 7, 7), dtype=jnp.float32)
    x405 = jax.random.normal(k2, (1, 1536, 1, 1), dtype=jnp.float32)
    weight = jax.random.normal(k3, (256, 1536, 1, 1), dtype=jnp.float32) * 0.02

    # Weight is packed once, outside the per-call path.
    w_mat = prepare_weight(weight)

    out = sigmoid_mul_conv1x1(x405, x401, w_mat)
    jax.block_until_ready(out)
    assert out.shape == (1, 256, 7, 7)

    # Reference 1: mimic the kernel's bf16 operand casting exactly (f32 accumulate).
    g_col = jax.nn.sigmoid(x405.reshape(1536, 1))
    xg = (x401.reshape(1536, 49) * g_col).astype(jnp.bfloat16).astype(jnp.float32)
    w_f = weight.reshape(256, 1536).astype(jnp.bfloat16).astype(jnp.float32)
    ref_bf16 = jnp.dot(w_f, xg, precision=jax.lax.Precision.HIGHEST).reshape(1, 256, 7, 7)
    assert jnp.allclose(out, ref_bf16, atol=1e-3, rtol=1e-3)

    # Reference 2: full-f32 module semantics (loose tolerance for bf16 matmul path).
    ref_f32 = jnp.einsum(
        "nchw,oc->nohw",
        jax.nn.sigmoid(x405) * x401,
        weight.reshape(256, 1536),
        precision=jax.lax.Precision.HIGHEST,
    )
    assert jnp.allclose(out, ref_f32, atol=2e-2, rtol=2e-2)

    print("KERNEL_OK")
</pallas_src>

<mosaic_0001>
module attributes {stable_mosaic.version = 11 : i64} {
  func.func @_gated_conv1x1_kernel(%arg0: i32, %arg1: memref<1536x1xf32, #tpu.memory_space<vmem>>, %arg2: memref<256x1536xbf16, #tpu.memory_space<vmem>>, %arg3: memref<1536x49xf32, #tpu.memory_space<vmem>>, %arg4: memref<256x49xf32, #tpu.memory_space<vmem>>) attributes {dimension_semantics = [#tpu.dimension_semantics<arbitrary>], iteration_bounds = array<i64: 1>, scalar_prefetch = 0 : i64, scratch_operands = 0 : i64, tpu.core_type = #tpu.core_type<tc>, window_params = [{pipeline_mode = #tpu.pipeline_mode<synchronous>, transform_indices = @transform_0, window_bounds = array<i64: 1536, 1>}, {pipeline_mode = #tpu.pipeline_mode<synchronous>, transform_indices = @transform_1, window_bounds = array<i64: 256, 1536>}, {pipeline_mode = #tpu.pipeline_mode<synchronous>, transform_indices = @transform_2, window_bounds = array<i64: 1536, 49>}, {pipeline_mode = #tpu.pipeline_mode<synchronous>, transform_indices = @transform_3, window_bounds = array<i64: 256, 49>}]} {
    %c0 = arith.constant 0 : index
    %c0_0 = arith.constant 0 : index
    %0 = vector.load %arg1[%c0, %c0_0] : memref<1536x1xf32, #tpu.memory_space<vmem>>, vector<1536x1xf32>
    %1 = arith.negf %0 : vector<1536x1xf32>
    %2 = math.exp %1 : vector<1536x1xf32>
    %cst = arith.constant 1.000000e+00 : f32
    %3 = vector.broadcast %cst : f32 to vector<1536x1xf32>
    %4 = arith.addf %3, %2 : vector<1536x1xf32>
    %5 = arith.divf %3, %4 : vector<1536x1xf32>
    %c0_1 = arith.constant 0 : index
    %c0_2 = arith.constant 0 : index
    %6 = vector.load %arg3[%c0_1, %c0_2] : memref<1536x49xf32, #tpu.memory_space<vmem>>, vector<1536x49xf32>
    %7 = vector.broadcast %5 : vector<1536x1xf32> to vector<1536x49xf32>
    %8 = arith.mulf %6, %7 : vector<1536x49xf32>
    %9 = arith.truncf %8 : vector<1536x49xf32> to vector<1536x49xbf16>
    %c0_3 = arith.constant 0 : index
    %c0_4 = arith.constant 0 : index
    %10 = vector.load %arg2[%c0_3, %c0_4] : memref<256x1536xbf16, #tpu.memory_space<vmem>>, vector<256x1536xbf16>
    %cst_5 = arith.constant dense<0.000000e+00> : vector<256x49xf32>
    %11 = tpu.matmul %10, %9, %cst_5 {dimension_numbers = #tpu.dot_dimension_numbers<[1], [0], [0], [1], [0, 0, 1, 1], [], []>} : vector<256x1536xbf16>, vector<1536x49xbf16>, vector<256x49xf32> -> vector<256x49xf32>
    %c0_6 = arith.constant 0 : index
    %c0_7 = arith.constant 0 : index
    %12 = vector.load %arg4[%c0_6, %c0_7] : memref<256x49xf32, #tpu.memory_space<vmem>>, vector<256x49xf32>
    tpu.vector_store %arg4[%c0_6, %c0_7], %11 {strides = array<i32>} : memref<256x49xf32, #tpu.memory_space<vmem>>, vector<256x49xf32>,
    return
  }
  func.func @transform_0(%arg0: i32) -> (i32, i32) {
    %c0_i32 = arith.constant 0 : i32
    %c0_i32_0 = arith.constant 0 : i32
    %c0_i32_1 = arith.constant 0 : i32
    return %c0_i32, %c0_i32_0 : i32, i32
  }
  func.func @transform_1(%arg0: i32) -> (i32, i32) {
    %c0_i32 = arith.constant 0 : i32
    %c0_i32_0 = arith.constant 0 : i32
    %c0_i32_1 = arith.constant 0 : i32
    return %c0_i32, %c0_i32_0 : i32, i32
  }
  func.func @transform_2(%arg0: i32) -> (i32, i32) {
    %c0_i32 = arith.constant 0 : i32
    %c0_i32_0 = arith.constant 0 : i32
    %c0_i32_1 = arith.constant 0 : i32
    return %c0_i32, %c0_i32_0 : i32, i32
  }
  func.func @transform_3(%arg0: i32) -> (i32, i32) {
    %c0_i32 = arith.constant 0 : i32
    %c0_i32_0 = arith.constant 0 : i32
    %c0_i32_1 = arith.constant 0 : i32
    return %c0_i32, %c0_i32_0 : i32, i32
  }
}

</mosaic_0001>

<llo_original>
// kernel: sigmoid_mul_conv1x1.1
$region0: #{sigmoid_mul_conv1x1.1}
  #allocation0 [shape = 'u32[]', space=smem, size = 0x4, offset = 0x4, fixed_abs, tag = 'smem constant byte address 0x4 - core index']
  #allocation1 [shape = 'u32[144,128]{1,0:T(1,128)}', space=vmem, size = 0x12000, scoped, tag = 'internal scratch']
  %s0 = inlined_call_operand.vmem [shape: f32[1536,1], index: 0, kind: input, shape index: {}]
  %s1 = inlined_call_operand.vmem [shape: bf16[256,1536], index: 1, kind: input, shape index: {}]
  %s2 = inlined_call_operand.vmem [shape: f32[1536,49], index: 2, kind: input, shape index: {}]
  %s3 = inlined_call_operand.vmem [shape: f32[256,49], index: 3, kind: output, shape index: {}]
  %s4 = sld [smem:[#allocation0]]
  $region22: #{sigmoid_mul_conv1x1.1} parent=0
    _
  %s6 = ssub.s32 1, %s4
  %s7 = scalar_select 0, %s6, %s4
  // Predicated region
  $region2: #{sigmoid_mul_conv1x1.1} parent=0 // pred_check
    _
  $region3: #{sigmoid_mul_conv1x1.1} parent=0 // pred_check_branch
    %9 = sbr.rel (0) target = $region5
  $region4: #{sigmoid_mul_conv1x1.1} parent=0 // pred_region
    _
  $region5: #{sigmoid_mul_conv1x1.1} parent=0 // pred_fallthru
    _
  // Predicated region
  $region6: #{sigmoid_mul_conv1x1.1} parent=0 // pred_check
    _
  $region7: #{sigmoid_mul_conv1x1.1} parent=0 // pred_check_branch
    %11 = sbr.rel (0) target = $region9
  $region8: #{sigmoid_mul_conv1x1.1} parent=0 // pred_region
    _
  $region9: #{sigmoid_mul_conv1x1.1} parent=0 // pred_fallthru
    _
  // Predicated region
  $region10: #{sigmoid_mul_conv1x1.1} parent=0 // pred_check
    _
  $region11: #{sigmoid_mul_conv1x1.1} parent=0 // pred_check_branch
    %13 = sbr.rel (0) target = $region13
  $region12: #{sigmoid_mul_conv1x1.1} parent=0 // pred_region
    _
  $region13: #{sigmoid_mul_conv1x1.1} parent=0 // pred_fallthru
    _
  %v15 = vld [vmem:[%s0] sm:$0xff]
  %v16 = vld [vmem:[%s0 + $0x8] sm:$0xff]
  %v17 = vld [vmem:[%s0 + $0x10] sm:$0xff]
  %v18 = vld [vmem:[%s0 + $0x18] sm:$0xff]
  %v19 = vld [vmem:[%s0 + $0x20] sm:$0xff]
  %v20 = vld [vmem:[%s0 + $0x28] sm:$0xff]
  %v21 = vld [vmem:[%s0 + $0x30] sm:$0xff]
  %v22 = vld [vmem:[%s0 + $0x38] sm:$0xff]
  %v23 = vld [vmem:[%s0 + $0x40] sm:$0xff]
  %v24 = vld [vmem:[%s0 + $0x48] sm:$0xff]
  %v25 = vld [vmem:[%s0 + $0x50] sm:$0xff]
  %v26 = vld [vmem:[%s0 + $0x58] sm:$0xff]
  %v27 = vld [vmem:[%s0 + $0x60] sm:$0xff]
  %v28 = vld [vmem:[%s0 + $0x68] sm:$0xff]
  %v29 = vld [vmem:[%s0 + $0x70] sm:$0xff]
  %v30 = vld [vmem:[%s0 + $0x78] sm:$0xff]
  %v31 = vld [vmem:[%s0 + $0x80] sm:$0xff]
  %v32 = vld [vmem:[%s0 + $0x88] sm:$0xff]
  %v33 = vld [vmem:[%s0 + $0x90] sm:$0xff]
  %v34 = vld [vmem:[%s0 + $0x98] sm:$0xff]
  %v35 = vld [vmem:[%s0 + $0xa0] sm:$0xff]
  %v36 = vld [vmem:[%s0 + $0xa8] sm:$0xff]
  %v37 = vld [vmem:[%s0 + $0xb0] sm:$0xff]
  %v38 = vld [vmem:[%s0 + $0xb8] sm:$0xff]
  %v39 = vld [vmem:[%s0 + $0xc0] sm:$0xff]
  %v40 = vld [vmem:[%s0 + $0xc8] sm:$0xff]
  %v41 = vld [vmem:[%s0 + $0xd0] sm:$0xff]
  %v42 = vld [vmem:[%s0 + $0xd8] sm:$0xff]
  %v43 = vld [vmem:[%s0 + $0xe0] sm:$0xff]
  %v44 = vld [vmem:[%s0 + $0xe8] sm:$0xff]
  %v45 = vld [vmem:[%s0 + $0xf0] sm:$0xff]
  %v46 = vld [vmem:[%s0 + $0xf8] sm:$0xff]
  %v47 = vld [vmem:[%s0 + $0x100] sm:$0xff]
  %v48 = vld [vmem:[%s0 + $0x108] sm:$0xff]
  %v49 = vld [vmem:[%s0 + $0x110] sm:$0xff]
  %v50 = vld [vmem:[%s0 + $0x118] sm:$0xff]
  %v51 = vld [vmem:[%s0 + $0x120] sm:$0xff]
  %v52 = vld [vmem:[%s0 + $0x128] sm:$0xff]
  %v53 = vld [vmem:[%s0 + $0x130] sm:$0xff]
  %v54 = vld [vmem:[%s0 + $0x138] sm:$0xff]
  %v55 = vld [vmem:[%s0 + $0x140] sm:$0xff]
  %v56 = vld [vmem:[%s0 + $0x148] sm:$0xff]
  %v57 = vld [vmem:[%s0 + $0x150] sm:$0xff]
  %v58 = vld [vmem:[%s0 + $0x158] sm:$0xff]
  %v59 = vld [vmem:[%s0 + $0x160] sm:$0xff]
  %v60 = vld [vmem:[%s0 + $0x168] sm:$0xff]
  %v61 = vld [vmem:[%s0 + $0x170] sm:$0xff]
  %v62 = vld [vmem:[%s0 + $0x178] sm:$0xff]
  %v63 = vld [vmem:[%s0 + $0x180] sm:$0xff]
  %v64 = vld [vmem:[%s0 + $0x188] sm:$0xff]
  %v65 = vld [vmem:[%s0 + $0x190] sm:$0xff]
  %v66 = vld [vmem:[%s0 + $0x198] sm:$0xff]
  %v67 = vld [vmem:[%s0 + $0x1a0] sm:$0xff]
  %v68 = vld [vmem:[%s0 + $0x1a8] sm:$0xff]
  %v69 = vld [vmem:[%s0 + $0x1b0] sm:$0xff]
  %v70 = vld [vmem:[%s0 + $0x1b8] sm:$0xff]
  %v71 = vld [vmem:[%s0 + $0x1c0] sm:$0xff]
  %v72 = vld [vmem:[%s0 + $0x1c8] sm:$0xff]
  %v73 = vld [vmem:[%s0 + $0x1d0] sm:$0xff]
  %v74 = vld [vmem:[%s0 + $0x1d8] sm:$0xff]
  %v75 = vld [vmem:[%s0 + $0x1e0] sm:$0xff]
  %v76 = vld [vmem:[%s0 + $0x1e8] sm:$0xff]
  %v77 = vld [vmem:[%s0 + $0x1f0] sm:$0xff]
  %v78 = vld [vmem:[%s0 + $0x1f8] sm:$0xff]
  %v79 = vld [vmem:[%s0 + $0x200] sm:$0xff]
  %v80 = vld [vmem:[%s0 + $0x208] sm:$0xff]
  %v81 = vld [vmem:[%s0 + $0x210] sm:$0xff]
  %v82 = vld [vmem:[%s0 + $0x218] sm:$0xff]
  %v83 = vld [vmem:[%s0 + $0x220] sm:$0xff]
  %v84 = vld [vmem:[%s0 + $0x228] sm:$0xff]
  %v85 = vld [vmem:[%s0 + $0x230] sm:$0xff]
  %v86 = vld [vmem:[%s0 + $0x238] sm:$0xff]
  %v87 = vld [vmem:[%s0 + $0x240] sm:$0xff]
  %v88 = vld [vmem:[%s0 + $0x248] sm:$0xff]
  %v89 = vld [vmem:[%s0 + $0x250] sm:$0xff]
  %v90 = vld [vmem:[%s0 + $0x258] sm:$0xff]
  %v91 = vld [vmem:[%s0 + $0x260] sm:$0xff]
  %v92 = vld [vmem:[%s0 + $0x268] sm:$0xff]
  %v93 = vld [vmem:[%s0 + $0x270] sm:$0xff]
  %v94 = vld [vmem:[%s0 + $0x278] sm:$0xff]
  %v95 = vld [vmem:[%s0 + $0x280] sm:$0xff]
  %v96 = vld [vmem:[%s0 + $0x288] sm:$0xff]
  %v97 = vld [vmem:[%s0 + $0x290] sm:$0xff]
  %v98 = vld [vmem:[%s0 + $0x298] sm:$0xff]
  %v99 = vld [vmem:[%s0 + $0x2a0] sm:$0xff]
  %v100 = vld [vmem:[%s0 + $0x2a8] sm:$0xff]
  %v101 = vld [vmem:[%s0 + $0x2b0] sm:$0xff]
  %v102 = vld [vmem:[%s0 + $0x2b8] sm:$0xff]
  %v103 = vld [vmem:[%s0 + $0x2c0] sm:$0xff]
  %v104 = vld [vmem:[%s0 + $0x2c8] sm:$0xff]
  %v105 = vld [vmem:[%s0 + $0x2d0] sm:$0xff]
  %v106 = vld [vmem:[%s0 + $0x2d8] sm:$0xff]
  %v107 = vld [vmem:[%s0 + $0x2e0] sm:$0xff]
  %v108 = vld [vmem:[%s0 + $0x2e8] sm:$0xff]
  %v109 = vld [vmem:[%s0 + $0x2f0] sm:$0xff]
  %v110 = vld [vmem:[%s0 + $0x2f8] sm:$0xff]
  %v111 = vld [vmem:[%s0 + $0x300] sm:$0xff]
  %v112 = vld [vmem:[%s0 + $0x308] sm:$0xff]
  %v113 = vld [vmem:[%s0 + $0x310] sm:$0xff]
  %v114 = vld [vmem:[%s0 + $0x318] sm:$0xff]
  %v115 = vld [vmem:[%s0 + $0x320] sm:$0xff]
  %v116 = vld [vmem:[%s0 + $0x328] sm:$0xff]
  %v117 = vld [vmem:[%s0 + $0x330] sm:$0xff]
  %v118 = vld [vmem:[%s0 + $0x338] sm:$0xff]
  %v119 = vld [vmem:[%s0 + $0x340] sm:$0xff]
  %v120 = vld [vmem:[%s0 + $0x348] sm:$0xff]
  %v121 = vld [vmem:[%s0 + $0x350] sm:$0xff]
  %v122 = vld [vmem:[%s0 + $0x358] sm:$0xff]
  %v123 = vld [vmem:[%s0 + $0x360] sm:$0xff]
  %v124 = vld [vmem:[%s0 + $0x368] sm:$0xff]
  %v125 = vld [vmem:[%s0 + $0x370] sm:$0xff]
  %v126 = vld [vmem:[%s0 + $0x378] sm:$0xff]
  %v127 = vld [vmem:[%s0 + $0x380] sm:$0xff]
  %v128 = vld [vmem:[%s0 + $0x388] sm:$0xff]
  %v129 = vld [vmem:[%s0 + $0x390] sm:$0xff]
  %v130 = vld [vmem:[%s0 + $0x398] sm:$0xff]
  %v131 = vld [vmem:[%s0 + $0x3a0] sm:$0xff]
  %v132 = vld [vmem:[%s0 + $0x3a8] sm:$0xff]
  %v133 = vld [vmem:[%s0 + $0x3b0] sm:$0xff]
  %v134 = vld [vmem:[%s0 + $0x3b8] sm:$0xff]
  %v135 = vld [vmem:[%s0 + $0x3c0] sm:$0xff]
  %v136 = vld [vmem:[%s0 + $0x3c8] sm:$0xff]
  %v137 = vld [vmem:[%s0 + $0x3d0] sm:$0xff]
  %v138 = vld [vmem:[%s0 + $0x3d8] sm:$0xff]
  %v139 = vld [vmem:[%s0 + $0x3e0] sm:$0xff]
  %v140 = vld [vmem:[%s0 + $0x3e8] sm:$0xff]
  %v141 = vld [vmem:[%s0 + $0x3f0] sm:$0xff]
  %v142 = vld [vmem:[%s0 + $0x3f8] sm:$0xff]
  %v143 = vld [vmem:[%s0 + $0x400] sm:$0xff]
  %v144 = vld [vmem:[%s0 + $0x408] sm:$0xff]
  %v145 = vld [vmem:[%s0 + $0x410] sm:$0xff]
  %v146 = vld [vmem:[%s0 + $0x418] sm:$0xff]
  %v147 = vld [vmem:[%s0 + $0x420] sm:$0xff]
  %v148 = vld [vmem:[%s0 + $0x428] sm:$0xff]
  %v149 = vld [vmem:[%s0 + $0x430] sm:$0xff]
  %v150 = vld [vmem:[%s0 + $0x438] sm:$0xff]
  %v151 = vld [vmem:[%s0 + $0x440] sm:$0xff]
  %v152 = vld [vmem:[%s0 + $0x448] sm:$0xff]
  %v153 = vld [vmem:[%s0 + $0x450] sm:$0xff]
  %v154 = vld [vmem:[%s0 + $0x458] sm:$0xff]
  %v155 = vld [vmem:[%s0 + $0x460] sm:$0xff]
  %v156 = vld [vmem:[%s0 + $0x468] sm:$0xff]
  %v157 = vld [vmem:[%s0 + $0x470] sm:$0xff]
  %v158 = vld [vmem:[%s0 + $0x478] sm:$0xff]
  %v159 = vld [vmem:[%s0 + $0x480] sm:$0xff]
  %v160 = vld [vmem:[%s0 + $0x488] sm:$0xff]
  %v161 = vld [vmem:[%s0 + $0x490] sm:$0xff]
  %v162 = vld [vmem:[%s0 + $0x498] sm:$0xff]
  %v163 = vld [vmem:[%s0 + $0x4a0] sm:$0xff]
  %v164 = vld [vmem:[%s0 + $0x4a8] sm:$0xff]
  %v165 = vld [vmem:[%s0 + $0x4b0] sm:$0xff]
  %v166 = vld [vmem:[%s0 + $0x4b8] sm:$0xff]
  %v167 = vld [vmem:[%s0 + $0x4c0] sm:$0xff]
  %v168 = vld [vmem:[%s0 + $0x4c8] sm:$0xff]
  %v169 = vld [vmem:[%s0 + $0x4d0] sm:$0xff]
  %v170 = vld [vmem:[%s0 + $0x4d8] sm:$0xff]
  %v171 = vld [vmem:[%s0 + $0x4e0] sm:$0xff]
  %v172 = vld [vmem:[%s0 + $0x4e8] sm:$0xff]
  %v173 = vld [vmem:[%s0 + $0x4f0] sm:$0xff]
  %v174 = vld [vmem:[%s0 + $0x4f8] sm:$0xff]
  %v175 = vld [vmem:[%s0 + $0x500] sm:$0xff]
  %v176 = vld [vmem:[%s0 + $0x508] sm:$0xff]
  %v177 = vld [vmem:[%s0 + $0x510] sm:$0xff]
  %v178 = vld [vmem:[%s0 + $0x518] sm:$0xff]
  %v179 = vld [vmem:[%s0 + $0x520] sm:$0xff]
  %v180 = vld [vmem:[%s0 + $0x528] sm:$0xff]
  %v181 = vld [vmem:[%s0 + $0x530] sm:$0xff]
  %v182 = vld [vmem:[%s0 + $0x538] sm:$0xff]
  %v183 = vld [vmem:[%s0 + $0x540] sm:$0xff]
  %v184 = vld [vmem:[%s0 + $0x548] sm:$0xff]
  %v185 = vld [vmem:[%s0 + $0x550] sm:$0xff]
  %v186 = vld [vmem:[%s0 + $0x558] sm:$0xff]
  %v187 = vld [vmem:[%s0 + $0x560] sm:$0xff]
  %v188 = vld [vmem:[%s0 + $0x568] sm:$0xff]
  %v189 = vld [vmem:[%s0 + $0x570] sm:$0xff]
  %v190 = vld [vmem:[%s0 + $0x578] sm:$0xff]
  %v191 = vld [vmem:[%s0 + $0x580] sm:$0xff]
  %v192 = vld [vmem:[%s0 + $0x588] sm:$0xff]
  %v193 = vld [vmem:[%s0 + $0x590] sm:$0xff]
  %v194 = vld [vmem:[%s0 + $0x598] sm:$0xff]
  %v195 = vld [vmem:[%s0 + $0x5a0] sm:$0xff]
  %v196 = vld [vmem:[%s0 + $0x5a8] sm:$0xff]
  %v197 = vld [vmem:[%s0 + $0x5b0] sm:$0xff]
  %v198 = vld [vmem:[%s0 + $0x5b8] sm:$0xff]
  %v199 = vld [vmem:[%s0 + $0x5c0] sm:$0xff]
  %v200 = vld [vmem:[%s0 + $0x5c8] sm:$0xff]
  %v201 = vld [vmem:[%s0 + $0x5d0] sm:$0xff]
  %v202 = vld [vmem:[%s0 + $0x5d8] sm:$0xff]
  %v203 = vld [vmem:[%s0 + $0x5e0] sm:$0xff]
  %v204 = vld [vmem:[%s0 + $0x5e8] sm:$0xff]
  %v205 = vld [vmem:[%s0 + $0x5f0] sm:$0xff]
  %v206 = vld [vmem:[%s0 + $0x5f8] sm:$0xff]
  %v207 = vxor.u32 %v15, 2147483648
  %v208 = vxor.u32 %v16, 2147483648
  %v209 = vxor.u32 %v17, 2147483648
  %v210 = vxor.u32 %v18, 2147483648
  %v211 = vxor.u32 %v19, 2147483648
  %v212 = vxor.u32 %v20, 2147483648
  %v213 = vxor.u32 %v21, 2147483648
  %v214 = vxor.u32 %v22, 2147483648
  %v215 = vxor.u32 %v23, 2147483648
  %v216 = vxor.u32 %v24, 2147483648
  %v217 = vxor.u32 %v25, 2147483648
  %v218 = vxor.u32 %v26, 2147483648
  %v219 = vxor.u32 %v27, 2147483648
  %v220 = vxor.u32 %v28, 2147483648
  %v221 = vxor.u32 %v29, 2147483648
  %v222 = vxor.u32 %v30, 2147483648
  %v223 = vxor.u32 %v31, 2147483648
  %v224 = vxor.u32 %v32, 2147483648
  %v225 = vxor.u32 %v33, 2147483648
  %v226 = vxor.u32 %v34, 2147483648
  %v227 = vxor.u32 %v35, 2147483648
  %v228 = vxor.u32 %v36, 2147483648
  %v229 = vxor.u32 %v37, 2147483648
  %v230 = vxor.u32 %v38, 2147483648
  %v231 = vxor.u32 %v39, 2147483648
  %v232 = vxor.u32 %v40, 2147483648
  %v233 = vxor.u32 %v41, 2147483648
  %v234 = vxor.u32 %v42, 2147483648
  %v235 = vxor.u32 %v43, 2147483648
  %v236 = vxor.u32 %v44, 2147483648
  %v237 = vxor.u32 %v45, 2147483648
  %v238 = vxor.u32 %v46, 2147483648
  %v239 = vxor.u32 %v47, 2147483648
  %v240 = vxor.u32 %v48, 2147483648
  %v241 = vxor.u32 %v49, 2147483648
  %v242 = vxor.u32 %v50, 2147483648
  %v243 = vxor.u32 %v51, 2147483648
  %v244 = vxor.u32 %v52, 2147483648
  %v245 = vxor.u32 %v53, 2147483648
  %v246 = vxor.u32 %v54, 2147483648
  %v247 = vxor.u32 %v55, 2147483648
  %v248 = vxor.u32 %v56, 2147483648
  %v249 = vxor.u32 %v57, 2147483648
  %v250 = vxor.u32 %v58, 2147483648
  %v251 = vxor.u32 %v59, 2147483648
  %v252 = vxor.u32 %v60, 2147483648
  %v253 = vxor.u32 %v61, 2147483648
  %v254 = vxor.u32 %v62, 2147483648
  %v255 = vxor.u32 %v63, 2147483648
  %v256 = vxor.u32 %v64, 2147483648
  %v257 = vxor.u32 %v65, 2147483648
  %v258 = vxor.u32 %v66, 2147483648
  %v259 = vxor.u32 %v67, 2147483648
  %v260 = vxor.u32 %v68, 2147483648
  %v261 = vxor.u32 %v69, 2147483648
  %v262 = vxor.u32 %v70, 2147483648
  %v263 = vxor.u32 %v71, 2147483648
  %v264 = vxor.u32 %v72, 2147483648
  %v265 = vxor.u32 %v73, 2147483648
  %v266 = vxor.u32 %v74, 2147483648
  %v267 = vxor.u32 %v75, 2147483648
  %v268 = vxor.u32 %v76, 2147483648
  %v269 = vxor.u32 %v77, 2147483648
  %v270 = vxor.u32 %v78, 2147483648
  %v271 = vxor.u32 %v79, 2147483648
  %v272 = vxor.u32 %v80, 2147483648
  %v273 = vxor.u32 %v81, 2147483648
  %v274 = vxor.u32 %v82, 2147483648
  %v275 = vxor.u32 %v83, 2147483648
  %v276 = vxor.u32 %v84, 2147483648
  %v277 = vxor.u32 %v85, 2147483648
  %v278 = vxor.u32 %v86, 2147483648
  %v279 = vxor.u32 %v87, 2147483648
  %v280 = vxor.u32 %v88, 2147483648
  %v281 = vxor.u32 %v89, 2147483648
  %v282 = vxor.u32 %v90, 2147483648
  %v283 = vxor.u32 %v91, 2147483648
  %v284 = vxor.u32 %v92, 2147483648
  %v285 = vxor.u32 %v93, 2147483648
  %v286 = vxor.u32 %v94, 2147483648
  %v287 = vxor.u32 %v95, 2147483648
  %v288 = vxor.u32 %v96, 2147483648
  %v289 = vxor.u32 %v97, 2147483648
  %v290 = vxor.u32 %v98, 2147483648
  %v291 = vxor.u32 %v99, 2147483648
  %v292 = vxor.u32 %v100, 2147483648
  %v293 = vxor.u32 %v101, 2147483648
  %v294 = vxor.u32 %v102, 2147483648
  %v295 = vxor.u32 %v103, 2147483648
  %v296 = vxor.u32 %v104, 2147483648
  %v297 = vxor.u32 %v105, 2147483648
  %v298 = vxor.u32 %v106, 2147483648
  %v299 = vxor.u32 %v107, 2147483648
  %v300 = vxor.u32 %v108, 2147483648
  %v301 = vxor.u32 %v109, 2147483648
  %v302 = vxor.u32 %v110, 2147483648
  %v303 = vxor.u32 %v111, 2147483648
  %v304 = vxor.u32 %v112, 2147483648
  %v305 = vxor.u32 %v113, 2147483648
  %v306 = vxor.u32 %v114, 2147483648
  %v307 = vxor.u32 %v115, 2147483648
  %v308 = vxor.u32 %v116, 2147483648
  %v309 = vxor.u32 %v117, 2147483648
  %v310 = vxor.u32 %v118, 2147483648
  %v311 = vxor.u32 %v119, 2147483648
  %v312 = vxor.u32 %v120, 2147483648
  %v313 = vxor.u32 %v121, 2147483648
  %v314 = vxor.u32 %v122, 2147483648
  %v315 = vxor.u32 %v123, 2147483648
  %v316 = vxor.u32 %v124, 2147483648
  %v317 = vxor.u32 %v125, 2147483648
  %v318 = vxor.u32 %v126, 2147483648
  %v319 = vxor.u32 %v127, 2147483648
  %v320 = vxor.u32 %v128, 2147483648
  %v321 = vxor.u32 %v129, 2147483648
  %v322 = vxor.u32 %v130, 2147483648
  %v323 = vxor.u32 %v131, 2147483648
  %v324 = vxor.u32 %v132, 2147483648
  %v325 = vxor.u32 %v133, 2147483648
  %v326 = vxor.u32 %v134, 2147483648
  %v327 = vxor.u32 %v135, 2147483648
  %v328 = vxor.u32 %v136, 2147483648
  %v329 = vxor.u32 %v137, 2147483648
  %v330 = vxor.u32 %v138, 2147483648
  %v331 = vxor.u32 %v139, 2147483648
  %v332 = vxor.u32 %v140, 2147483648
  %v333 = vxor.u32 %v141, 2147483648
  %v334 = vxor.u32 %v142, 2147483648
  %v335 = vxor.u32 %v143, 2147483648
  %v336 = vxor.u32 %v144, 2147483648
  %v337 = vxor.u32 %v145, 2147483648
  %v338 = vxor.u32 %v146, 2147483648
  %v339 = vxor.u32 %v147, 2147483648
  %v340 = vxor.u32 %v148, 2147483648
  %v341 = vxor.u32 %v149, 2147483648
  %v342 = vxor.u32 %v150, 2147483648
  %v343 = vxor.u32 %v151, 2147483648
  %v344 = vxor.u32 %v152, 2147483648
  %v345 = vxor.u32 %v153, 2147483648
  %v346 = vxor.u32 %v154, 2147483648
  %v347 = vxor.u32 %v155, 2147483648
  %v348 = vxor.u32 %v156, 2147483648
  %v349 = vxor.u32 %v157, 2147483648
  %v350 = vxor.u32 %v158, 2147483648
  %v351 = vxor.u32 %v159, 2147483648
  %v352 = vxor.u32 %v160, 2147483648
  %v353 = vxor.u32 %v161, 2147483648
  %v354 = vxor.u32 %v162, 2147483648
  %v355 = vxor.u32 %v163, 2147483648
  %v356 = vxor.u32 %v164, 2147483648
  %v357 = vxor.u32 %v165, 2147483648
  %v358 = vxor.u32 %v166, 2147483648
  %v359 = vxor.u32 %v167, 2147483648
  %v360 = vxor.u32 %v168, 2147483648
  %v361 = vxor.u32 %v169, 2147483648
  %v362 = vxor.u32 %v170, 2147483648
  %v363 = vxor.u32 %v171, 2147483648
  %v364 = vxor.u32 %v172, 2147483648
  %v365 = vxor.u32 %v173, 2147483648
  %v366 = vxor.u32 %v174, 2147483648
  %v367 = vxor.u32 %v175, 2147483648
  %v368 = vxor.u32 %v176, 2147483648
  %v369 = vxor.u32 %v177, 2147483648
  %v370 = vxor.u32 %v178, 2147483648
  %v371 = vxor.u32 %v179, 2147483648
  %v372 = vxor.u32 %v180, 2147483648
  %v373 = vxor.u32 %v181, 2147483648
  %v374 = vxor.u32 %v182, 2147483648
  %v375 = vxor.u32 %v183, 2147483648
  %v376 = vxor.u32 %v184, 2147483648
  %v377 = vxor.u32 %v185, 2147483648
  %v378 = vxor.u32 %v186, 2147483648
  %v379 = vxor.u32 %v187, 2147483648
  %v380 = vxor.u32 %v188, 2147483648
  %v381 = vxor.u32 %v189, 2147483648
  %v382 = vxor.u32 %v190, 2147483648
  %v383 = vxor.u32 %v191, 2147483648
  %v384 = vxor.u32 %v192, 2147483648
  %v385 = vxor.u32 %v193, 2147483648
  %v386 = vxor.u32 %v194, 2147483648
  %v387 = vxor.u32 %v195, 2147483648
  %v388 = vxor.u32 %v196, 2147483648
  %v389 = vxor.u32 %v197, 2147483648
  %v390 = vxor.u32 %v198, 2147483648
  %v391 = vxor.u32 %v199, 2147483648
  %v392 = vxor.u32 %v200, 2147483648
  %v393 = vxor.u32 %v201, 2147483648
  %v394 = vxor.u32 %v202, 2147483648
  %v395 = vxor.u32 %v203, 2147483648
  %v396 = vxor.u32 %v204, 2147483648
  %v397 = vxor.u32 %v205, 2147483648
  %v398 = vxor.u32 %v206, 2147483648
  %v399 = vmul.f32 %v207, 1.442695
  %v400 = vpow.pop %v399
  %v401 = vmul.f32 %v208, 1.442695
  %v402 = vpow.pop %v401
  %v403 = vmul.f32 %v209, 1.442695
  %v404 = vpow.pop %v403
  %v405 = vmul.f32 %v210, 1.442695
  %v406 = vpow.pop %v405
  %v407 = vmul.f32 %v211, 1.442695
  %v408 = vpow.pop %v407
  %v409 = vmul.f32 %v212, 1.442695
  %v410 = vpow.pop %v409
  %v411 = vmul.f32 %v213, 1.442695
  %v412 = vpow.pop %v411
  %v413 = vmul.f32 %v214, 1.442695
  %v414 = vpow.pop %v413
  %v415 = vmul.f32 %v215, 1.442695
  %v416 = vpow.pop %v415
  %v417 = vmul.f32 %v216, 1.442695
  %v418 = vpow.pop %v417
  %v419 = vmul.f32 %v217, 1.442695
  %v420 = vpow.pop %v419
  %v421 = vmul.f32 %v218, 1.442695
  %v422 = vpow.pop %v421
  %v423 = vmul.f32 %v219, 1.442695
  %v424 = vpow.pop %v423
  %v425 = vmul.f32 %v220, 1.442695
  %v426 = vpow.pop %v425
  %v427 = vmul.f32 %v221, 1.442695
  %v428 = vpow.pop %v427
  %v429 = vmul.f32 %v222, 1.442695
  %v430 = vpow.pop %v429
  %v431 = vmul.f32 %v223, 1.442695
  %v432 = vpow.pop %v431
  %v433 = vmul.f32 %v224, 1.442695
  %v434 = vpow.pop %v433
  %v435 = vmul.f32 %v225, 1.442695
  %v436 = vpow.pop %v435
  %v437 = vmul.f32 %v226, 1.442695
  %v438 = vpow.pop %v437
  %v439 = vmul.f32 %v227, 1.442695
  %v440 = vpow.pop %v439
  %v441 = vmul.f32 %v228, 1.442695
  %v442 = vpow.pop %v441
  %v443 = vmul.f32 %v229, 1.442695
  %v444 = vpow.pop %v443
  %v445 = vmul.f32 %v230, 1.442695
  %v446 = vpow.pop %v445
  %v447 = vmul.f32 %v231, 1.442695
  %v448 = vpow.pop %v447
  %v449 = vmul.f32 %v232, 1.442695
  %v450 = vpow.pop %v449
  %v451 = vmul.f32 %v233, 1.442695
  %v452 = vpow.pop %v451
  %v453 = vmul.f32 %v234, 1.442695
  %v454 = vpow.pop %v453
  %v455 = vmul.f32 %v235, 1.442695
  %v456 = vpow.pop %v455
  %v457 = vmul.f32 %v236, 1.442695
  %v458 = vpow.pop %v457
  %v459 = vmul.f32 %v237, 1.442695
  %v460 = vpow.pop %v459
  %v461 = vmul.f32 %v238, 1.442695
  %v462 = vpow.pop %v461
  %v463 = vmul.f32 %v239, 1.442695
  %v464 = vpow.pop %v463
  %v465 = vmul.f32 %v240, 1.442695
  %v466 = vpow.pop %v465
  %v467 = vmul.f32 %v241, 1.442695
  %v468 = vpow.pop %v467
  %v469 = vmul.f32 %v242, 1.442695
  %v470 = vpow.pop %v469
  %v471 = vmul.f32 %v243, 1.442695
  %v472 = vpow.pop %v471
  %v473 = vmul.f32 %v244, 1.442695
  %v474 = vpow.pop %v473
  %v475 = vmul.f32 %v245, 1.442695
  %v476 = vpow.pop %v475
  %v477 = vmul.f32 %v246, 1.442695
  %v478 = vpow.pop %v477
  %v479 = vmul.f32 %v247, 1.442695
  %v480 = vpow.pop %v479
  %v481 = vmul.f32 %v248, 1.442695
  %v482 = vpow.pop %v481
  %v483 = vmul.f32 %v249, 1.442695
  %v484 = vpow.pop %v483
  %v485 = vmul.f32 %v250, 1.442695
  %v486 = vpow.pop %v485
  %v487 = vmul.f32 %v251, 1.442695
  %v488 = vpow.pop %v487
  %v489 = vmul.f32 %v252, 1.442695
  %v490 = vpow.pop %v489
  %v491 = vmul.f32 %v253, 1.442695
  %v492 = vpow.pop %v491
  %v493 = vmul.f32 %v254, 1.442695
  %v494 = vpow.pop %v493
  %v495 = vmul.f32 %v255, 1.442695
  %v496 = vpow.pop %v495
  %v497 = vmul.f32 %v256, 1.442695
  %v498 = vpow.pop %v497
  %v499 = vmul.f32 %v257, 1.442695
  %v500 = vpow.pop %v499
  %v501 = vmul.f32 %v258, 1.442695
  %v502 = vpow.pop %v501
  %v503 = vmul.f32 %v259, 1.442695
  %v504 = vpow.pop %v503
  %v505 = vmul.f32 %v260, 1.442695
  %v506 = vpow.pop %v505
  %v507 = vmul.f32 %v261, 1.442695
  %v508 = vpow.pop %v507
  %v509 = vmul.f32 %v262, 1.442695
  %v510 = vpow.pop %v509
  %v511 = vmul.f32 %v263, 1.442695
  %v512 = vpow.pop %v511
  %v513 = vmul.f32 %v264, 1.442695
  %v514 = vpow.pop %v513
  %v515 = vmul.f32 %v265, 1.442695
  %v516 = vpow.pop %v515
  %v517 = vmul.f32 %v266, 1.442695
  %v518 = vpow.pop %v517
  %v519 = vmul.f32 %v267, 1.442695
  %v520 = vpow.pop %v519
  %v521 = vmul.f32 %v268, 1.442695
  %v522 = vpow.pop %v521
  %v523 = vmul.f32 %v269, 1.442695
  %v524 = vpow.pop %v523
  %v525 = vmul.f32 %v270, 1.442695
  %v526 = vpow.pop %v525
  %v527 = vmul.f32 %v271, 1.442695
  %v528 = vpow.pop %v527
  %v529 = vmul.f32 %v272, 1.442695
  %v530 = vpow.pop %v529
  %v531 = vmul.f32 %v273, 1.442695
  %v532 = vpow.pop %v531
  %v533 = vmul.f32 %v274, 1.442695
  %v534 = vpow.pop %v533
  %v535 = vmul.f32 %v275, 1.442695
  %v536 = vpow.pop %v535
  %v537 = vmul.f32 %v276, 1.442695
  %v538 = vpow.pop %v537
  %v539 = vmul.f32 %v277, 1.442695
  %v540 = vpow.pop %v539
  %v541 = vmul.f32 %v278, 1.442695
  %v542 = vpow.pop %v541
  %v543 = vmul.f32 %v279, 1.442695
  %v544 = vpow.pop %v543
  %v545 = vmul.f32 %v280, 1.442695
  %v546 = vpow.pop %v545
  %v547 = vmul.f32 %v281, 1.442695
  %v548 = vpow.pop %v547
  %v549 = vmul.f32 %v282, 1.442695
  %v550 = vpow.pop %v549
  %v551 = vmul.f32 %v283, 1.442695
  %v552 = vpow.pop %v551
  %v553 = vmul.f32 %v284, 1.442695
  %v554 = vpow.pop %v553
  %v555 = vmul.f32 %v285, 1.442695
  %v556 = vpow.pop %v555
  %v557 = vmul.f32 %v286, 1.442695
  %v558 = vpow.pop %v557
  %v559 = vmul.f32 %v287, 1.442695
  %v560 = vpow.pop %v559
  %v561 = vmul.f32 %v288, 1.442695
  %v562 = vpow.pop %v561
  %v563 = vmul.f32 %v289, 1.442695
  %v564 = vpow.pop %v563
  %v565 = vmul.f32 %v290, 1.442695
  %v566 = vpow.pop %v565
  %v567 = vmul.f32 %v291, 1.442695
  %v568 = vpow.pop %v567
  %v569 = vmul.f32 %v292, 1.442695
  %v570 = vpow.pop %v569
  %v571 = vmul.f32 %v293, 1.442695
  %v572 = vpow.pop %v571
  %v573 = vmul.f32 %v294, 1.442695
  %v574 = vpow.pop %v573
  %v575 = vmul.f32 %v295, 1.442695
  %v576 = vpow.pop %v575
  %v577 = vmul.f32 %v296, 1.442695
  %v578 = vpow.pop %v577
  %v579 = vmul.f32 %v297, 1.442695
  %v580 = vpow.pop %v579
  %v581 = vmul.f32 %v298, 1.442695
  %v582 = vpow.pop %v581
  %v583 = vmul.f32 %v299, 1.442695
  %v584 = vpow.pop %v583
  %v585 = vmul.f32 %v300, 1.442695
  %v586 = vpow.pop %v585
  %v587 = vmul.f32 %v301, 1.442695
  %v588 = vpow.pop %v587
  %v589 = vmul.f32 %v302, 1.442695
  %v590 = vpow.pop %v589
  %v591 = vmul.f32 %v303, 1.442695
  %v592 = vpow.pop %v591
  %v593 = vmul.f32 %v304, 1.442695
  %v594 = vpow.pop %v593
  %v595 = vmul.f32 %v305, 1.442695
  %v596 = vpow.pop %v595
  %v597 = vmul.f32 %v306, 1.442695
  %v598 = vpow.pop %v597
  %v599 = vmul.f32 %v307, 1.442695
  %v600 = vpow.pop %v599
  %v601 = vmul.f32 %v308, 1.442695
  %v602 = vpow.pop %v601
  %v603 = vmul.f32 %v309, 1.442695
  %v604 = vpow.pop %v603
  %v605 = vmul.f32 %v310, 1.442695
  %v606 = vpow.pop %v605
  %v607 = vmul.f32 %v311, 1.442695
  %v608 = vpow.pop %v607
  %v609 = vmul.f32 %v312, 1.442695
  %v610 = vpow.pop %v609
  %v611 = vmul.f32 %v313, 1.442695
  %v612 = vpow.pop %v611
  %v613 = vmul.f32 %v314, 1.442695
  %v614 = vpow.pop %v613
  %v615 = vmul.f32 %v315, 1.442695
  %v616 = vpow.pop %v615
  %v617 = vmul.f32 %v316, 1.442695
  %v618 = vpow.pop %v617
  %v619 = vmul.f32 %v317, 1.442695
  %v620 = vpow.pop %v619
  %v621 = vmul.f32 %v318, 1.442695
  %v622 = vpow.pop %v621
  %v623 = vmul.f32 %v319, 1.442695
  %v624 = vpow.pop %v623
  %v625 = vmul.f32 %v320, 1.442695
  %v626 = vpow.pop %v625
  %v627 = vmul.f32 %v321, 1.442695
  %v628 = vpow.pop %v627
  %v629 = vmul.f32 %v322, 1.442695
  %v630 = vpow.pop %v629
  %v631 = vmul.f32 %v323, 1.442695
  %v632 = vpow.pop %v631
  %v633 = vmul.f32 %v324, 1.442695
  %v634 = vpow.pop %v633
  %v635 = vmul.f32 %v325, 1.442695
  %v636 = vpow.pop %v635
  %v637 = vmul.f32 %v326, 1.442695
  %v638 = vpow.pop %v637
  %v639 = vmul.f32 %v327, 1.442695
  %v640 = vpow.pop %v639
  %v641 = vmul.f32 %v328, 1.442695
  %v642 = vpow.pop %v641
  %v643 = vmul.f32 %v329, 1.442695
  %v644 = vpow.pop %v643
  %v645 = vmul.f32 %v330, 1.442695
  %v646 = vpow.pop %v645
  %v647 = vmul.f32 %v331, 1.442695
  %v648 = vpow.pop %v647
  %v649 = vmul.f32 %v332, 1.442695
  %v650 = vpow.pop %v649
  %v651 = vmul.f32 %v333, 1.442695
  %v652 = vpow.pop %v651
  %v653 = vmul.f32 %v334, 1.442695
  %v654 = vpow.pop %v653
  %v655 = vmul.f32 %v335, 1.442695
  %v656 = vpow.pop %v655
  %v657 = vmul.f32 %v336, 1.442695
  %v658 = vpow.pop %v657
  %v659 = vmul.f32 %v337, 1.442695
  %v660 = vpow.pop %v659
  %v661 = vmul.f32 %v338, 1.442695
  %v662 = vpow.pop %v661
  %v663 = vmul.f32 %v339, 1.442695
  %v664 = vpow.pop %v663
  %v665 = vmul.f32 %v340, 1.442695
  %v666 = vpow.pop %v665
  %v667 = vmul.f32 %v341, 1.442695
  %v668 = vpow.pop %v667
  %v669 = vmul.f32 %v342, 1.442695
  %v670 = vpow.pop %v669
  %v671 = vmul.f32 %v343, 1.442695
  %v672 = vpow.pop %v671
  %v673 = vmul.f32 %v344, 1.442695
  %v674 = vpow.pop %v673
  %v675 = vmul.f32 %v345, 1.442695
  %v676 = vpow.pop %v675
  %v677 = vmul.f32 %v346, 1.442695
  %v678 = vpow.pop %v677
  %v679 = vmul.f32 %v347, 1.442695
  %v680 = vpow.pop %v679
  %v681 = vmul.f32 %v348, 1.442695
  %v682 = vpow.pop %v681
  %v683 = vmul.f32 %v349, 1.442695
  %v684 = vpow.pop %v683
  %v685 = vmul.f32 %v350, 1.442695
  %v686 = vpow.pop %v685
  %v687 = vmul.f32 %v351, 1.442695
  %v688 = vpow.pop %v687
  %v689 = vmul.f32 %v352, 1.442695
  %v690 = vpow.pop %v689
  %v691 = vmul.f32 %v353, 1.442695
  %v692 = vpow.pop %v691
  %v693 = vmul.f32 %v354, 1.442695
  %v694 = vpow.pop %v693
  %v695 = vmul.f32 %v355, 1.442695
  %v696 = vpow.pop %v695
  %v697 = vmul.f32 %v356, 1.442695
  %v698 = vpow.pop %v697
  %v699 = vmul.f32 %v357, 1.442695
  %v700 = vpow.pop %v699
  %v701 = vmul.f32 %v358, 1.442695
  %v702 = vpow.pop %v701
  %v703 = vmul.f32 %v359, 1.442695
  %v704 = vpow.pop %v703
  %v705 = vmul.f32 %v360, 1.442695
  %v706 = vpow.pop %v705
  %v707 = vmul.f32 %v361, 1.442695
  %v708 = vpow.pop %v707
  %v709 = vmul.f32 %v362, 1.442695
  %v710 = vpow.pop %v709
  %v711 = vmul.f32 %v363, 1.442695
  %v712 = vpow.pop %v711
  %v713 = vmul.f32 %v364, 1.442695
  %v714 = vpow.pop %v713
  %v715 = vmul.f32 %v365, 1.442695
  %v716 = vpow.pop %v715
  %v717 = vmul.f32 %v366, 1.442695
  %v718 = vpow.pop %v717
  %v719 = vmul.f32 %v367, 1.442695
  %v720 = vpow.pop %v719
  %v721 = vmul.f32 %v368, 1.442695
  %v722 = vpow.pop %v721
  %v723 = vmul.f32 %v369, 1.442695
  %v724 = vpow.pop %v723
  %v725 = vmul.f32 %v370, 1.442695
  %v726 = vpow.pop %v725
  %v727 = vmul.f32 %v371, 1.442695
  %v728 = vpow.pop %v727
  %v729 = vmul.f32 %v372, 1.442695
  %v730 = vpow.pop %v729
  %v731 = vmul.f32 %v373, 1.442695
  %v732 = vpow.pop %v731
  %v733 = vmul.f32 %v374, 1.442695
  %v734 = vpow.pop %v733
  %v735 = vmul.f32 %v375, 1.442695
  %v736 = vpow.pop %v735
  %v737 = vmul.f32 %v376, 1.442695
  %v738 = vpow.pop %v737
  %v739 = vmul.f32 %v377, 1.442695
  %v740 = vpow.pop %v739
  %v741 = vmul.f32 %v378, 1.442695
  %v742 = vpow.pop %v741
  %v743 = vmul.f32 %v379, 1.442695
  %v744 = vpow.pop %v743
  %v745 = vmul.f32 %v380, 1.442695
  %v746 = vpow.pop %v745
  %v747 = vmul.f32 %v381, 1.442695
  %v748 = vpow.pop %v747
  %v749 = vmul.f32 %v382, 1.442695
  %v750 = vpow.pop %v749
  %v751 = vmul.f32 %v383, 1.442695
  %v752 = vpow.pop %v751
  %v753 = vmul.f32 %v384, 1.442695
  %v754 = vpow.pop %v753
  %v755 = vmul.f32 %v385, 1.442695
  %v756 = vpow.pop %v755
  %v757 = vmul.f32 %v386, 1.442695
  %v758 = vpow.pop %v757
  %v759 = vmul.f32 %v387, 1.442695
  %v760 = vpow.pop %v759
  %v761 = vmul.f32 %v388, 1.442695
  %v762 = vpow.pop %v761
  %v763 = vmul.f32 %v389, 1.442695
  %v764 = vpow.pop %v763
  %v765 = vmul.f32 %v390, 1.442695
  %v766 = vpow.pop %v765
  %v767 = vmul.f32 %v391, 1.442695
  %v768 = vpow.pop %v767
  %v769 = vmul.f32 %v392, 1.442695
  %v770 = vpow.pop %v769
  %v771 = vmul.f32 %v393, 1.442695
  %v772 = vpow.pop %v771
  %v773 = vmul.f32 %v394, 1.442695
  %v774 = vpow.pop %v773
  %v775 = vmul.f32 %v395, 1.442695
  %v776 = vpow.pop %v775
  %v777 = vmul.f32 %v396, 1.442695
  %v778 = vpow.pop %v777
  %v779 = vmul.f32 %v397, 1.442695
  %v780 = vpow.pop %v779
  %v781 = vmul.f32 %v398, 1.442695
  %v782 = vpow.pop %v781
  %v783 = vadd.f32 %v400, 1.0
  %v784 = vadd.f32 %v402, 1.0
  %v785 = vadd.f32 %v404, 1.0
  %v786 = vadd.f32 %v406, 1.0
  %v787 = vadd.f32 %v408, 1.0
  %v788 = vadd.f32 %v410, 1.0
  %v789 = vadd.f32 %v412, 1.0
  %v790 = vadd.f32 %v414, 1.0
  %v791 = vadd.f32 %v416, 1.0
  %v792 = vadd.f32 %v418, 1.0
  %v793 = vadd.f32 %v420, 1.0
  %v794 = vadd.f32 %v422, 1.0
  %v795 = vadd.f32 %v424, 1.0
  %v796 = vadd.f32 %v426, 1.0
  %v797 = vadd.f32 %v428, 1.0
  %v798 = vadd.f32 %v430, 1.0
  %v799 = vadd.f32 %v432, 1.0
  %v800 = vadd.f32 %v434, 1.0
  %v801 = vadd.f32 %v436, 1.0
  %v802 = vadd.f32 %v438, 1.0
  %v803 = vadd.f32 %v440, 1.0
  %v804 = vadd.f32 %v442, 1.0
  %v805 = vadd.f32 %v444, 1.0
  %v806 = vadd.f32 %v446, 1.0
  %v807 = vadd.f32 %v448, 1.0
  %v808 = vadd.f32 %v450, 1.0
  %v809 = vadd.f32 %v452, 1.0
  %v810 = vadd.f32 %v454, 1.0
  %v811 = vadd.f32 %v456, 1.0
  %v812 = vadd.f32 %v458, 1.0
  %v813 = vadd.f32 %v460, 1.0
  %v814 = vadd.f32 %v462, 1.0
  %v815 = vadd.f32 %v464, 1.0
  %v816 = vadd.f32 %v466, 1.0
  %v817 = vadd.f32 %v468, 1.0
  %v818 = vadd.f32 %v470, 1.0
  %v819 = vadd.f32 %v472, 1.0
  %v820 = vadd.f32 %v474, 1.0
  %v821 = vadd.f32 %v476, 1.0
  %v822 = vadd.f32 %v478, 1.0
  %v823 = vadd.f32 %v480, 1.0
  %v824 = vadd.f32 %v482, 1.0
  %v825 = vadd.f32 %v484, 1.0
  %v826 = vadd.f32 %v486, 1.0
  %v827 = vadd.f32 %v488, 1.0
  %v828 = vadd.f32 %v490, 1.0
  %v829 = vadd.f32 %v492, 1.0
  %v830 = vadd.f32 %v494, 1.0
  %v831 = vadd.f32 %v496, 1.0
  %v832 = vadd.f32 %v498, 1.0
  %v833 = vadd.f32 %v500, 1.0
  %v834 = vadd.f32 %v502, 1.0
  %v835 = vadd.f32 %v504, 1.0
  %v836 = vadd.f32 %v506, 1.0
  %v837 = vadd.f32 %v508, 1.0
  %v838 = vadd.f32 %v510, 1.0
  %v839 = vadd.f32 %v512, 1.0
  %v840 = vadd.f32 %v514, 1.0
  %v841 = vadd.f32 %v516, 1.0
  %v842 = vadd.f32 %v518, 1.0
  %v843 = vadd.f32 %v520, 1.0
  %v844 = vadd.f32 %v522, 1.0
  %v845 = vadd.f32 %v524, 1.0
  %v846 = vadd.f32 %v526, 1.0
  %v847 = vadd.f32 %v528, 1.0
  %v848 = vadd.f32 %v530, 1.0
  %v849 = vadd.f32 %v532, 1.0
  %v850 = vadd.f32 %v534, 1.0
  %v851 = vadd.f32 %v536, 1.0
  %v852 = vadd.f32 %v538, 1.0
  %v853 = vadd.f32 %v540, 1.0
  %v854 = vadd.f32 %v542, 1.0
  %v855 = vadd.f32 %v544, 1.0
  %v856 = vadd.f32 %v546, 1.0
  %v857 = vadd.f32 %v548, 1.0
  %v858 = vadd.f32 %v550, 1.0
  %v859 = vadd.f32 %v552, 1.0
  %v860 = vadd.f32 %v554, 1.0
  %v861 = vadd.f32 %v556, 1.0
  %v862 = vadd.f32 %v558, 1.0
  %v863 = vadd.f32 %v560, 1.0
  %v864 = vadd.f32 %v562, 1.0
  %v865 = vadd.f32 %v564, 1.0
  %v866 = vadd.f32 %v566, 1.0
  %v867 = vadd.f32 %v568, 1.0
  %v868 = vadd.f32 %v570, 1.0
  %v869 = vadd.f32 %v572, 1.0
  %v870 = vadd.f32 %v574, 1.0
  %v871 = vadd.f32 %v576, 1.0
  %v872 = vadd.f32 %v578, 1.0
  %v873 = vadd.f32 %v580, 1.0
  %v874 = vadd.f32 %v582, 1.0
  %v875 = vadd.f32 %v584, 1.0
  %v876 = vadd.f32 %v586, 1.0
  %v877 = vadd.f32 %v588, 1.0
  %v878 = vadd.f32 %v590, 1.0
  %v879 = vadd.f32 %v592, 1.0
  %v880 = vadd.f32 %v594, 1.0
  %v881 = vadd.f32 %v596, 1.0
  %v882 = vadd.f32 %v598, 1.0
  %v883 = vadd.f32 %v600, 1.0
  %v884 = vadd.f32 %v602, 1.0
  %v885 = vadd.f32 %v604, 1.0
  %v886 = vadd.f32 %v606, 1.0
  %v887 = vadd.f32 %v608, 1.0
  %v888 = vadd.f32 %v610, 1.0
  %v889 = vadd.f32 %v612, 1.0
  %v890 = vadd.f32 %v614, 1.0
  %v891 = vadd.f32 %v616, 1.0
  %v892 = vadd.f32 %v618, 1.0
  %v893 = vadd.f32 %v620, 1.0
  %v894 = vadd.f32 %v622, 1.0
  %v895 = vadd.f32 %v624, 1.0
  %v896 = vadd.f32 %v626, 1.0
  %v897 = vadd.f32 %v628, 1.0
  %v898 = vadd.f32 %v630, 1.0
  %v899 = vadd.f32 %v632, 1.0
  %v900 = vadd.f32 %v634, 1.0
  %v901 = vadd.f32 %v636, 1.0
  %v902 = vadd.f32 %v638, 1.0
  %v903 = vadd.f32 %v640, 1.0
  %v904 = vadd.f32 %v642, 1.0
  %v905 = vadd.f32 %v644, 1.0
  %v906 = vadd.f32 %v646, 1.0
  %v907 = vadd.f32 %v648, 1.0
  %v908 = vadd.f32 %v650, 1.0
  %v909 = vadd.f32 %v652, 1.0
  %v910 = vadd.f32 %v654, 1.0
  %v911 = vadd.f32 %v656, 1.0
  %v912 = vadd.f32 %v658, 1.0
  %v913 = vadd.f32 %v660, 1.0
  %v914 = vadd.f32 %v662, 1.0
  %v915 = vadd.f32 %v664, 1.0
  %v916 = vadd.f32 %v666, 1.0
  %v917 = vadd.f32 %v668, 1.0
  %v918 = vadd.f32 %v670, 1.0
  %v919 = vadd.f32 %v672, 1.0
  %v920 = vadd.f32 %v674, 1.0
  %v921 = vadd.f32 %v676, 1.0
  %v922 = vadd.f32 %v678, 1.0
  %v923 = vadd.f32 %v680, 1.0
  %v924 = vadd.f32 %v682, 1.0
  %v925 = vadd.f32 %v684, 1.0
  %v926 = vadd.f32 %v686, 1.0
  %v927 = vadd.f32 %v688, 1.0
  %v928 = vadd.f32 %v690, 1.0
  %v929 = vadd.f32 %v692, 1.0
  %v930 = vadd.f32 %v694, 1.0
  %v931 = vadd.f32 %v696, 1.0
  %v932 = vadd.f32 %v698, 1.0
  %v933 = vadd.f32 %v700, 1.0
  %v934 = vadd.f32 %v702, 1.0
  %v935 = vadd.f32 %v704, 1.0
  %v936 = vadd.f32 %v706, 1.0
  %v937 = vadd.f32 %v708, 1.0
  %v938 = vadd.f32 %v710, 1.0
  %v939 = vadd.f32 %v712, 1.0
  %v940 = vadd.f32 %v714, 1.0
  %v941 = vadd.f32 %v716, 1.0
  %v942 = vadd.f32 %v718, 1.0
  %v943 = vadd.f32 %v720, 1.0
  %v944 = vadd.f32 %v722, 1.0
  %v945 = vadd.f32 %v724, 1.0
  %v946 = vadd.f32 %v726, 1.0
  %v947 = vadd.f32 %v728, 1.0
  %v948 = vadd.f32 %v730, 1.0
  %v949 = vadd.f32 %v732, 1.0
  %v950 = vadd.f32 %v734, 1.0
  %v951 = vadd.f32 %v736, 1.0
  %v952 = vadd.f32 %v738, 1.0
  %v953 = vadd.f32 %v740, 1.0
  %v954 = vadd.f32 %v742, 1.0
  %v955 = vadd.f32 %v744, 1.0
  %v956 = vadd.f32 %v746, 1.0
  %v957 = vadd.f32 %v748, 1.0
  %v958 = vadd.f32 %v750, 1.0
  %v959 = vadd.f32 %v752, 1.0
  %v960 = vadd.f32 %v754, 1.0
  %v961 = vadd.f32 %v756, 1.0
  %v962 = vadd.f32 %v758, 1.0
  %v963 = vadd.f32 %v760, 1.0
  %v964 = vadd.f32 %v762, 1.0
  %v965 = vadd.f32 %v764, 1.0
  %v966 = vadd.f32 %v766, 1.0
  %v967 = vadd.f32 %v768, 1.0
  %v968 = vadd.f32 %v770, 1.0
  %v969 = vadd.f32 %v772, 1.0
  %v970 = vadd.f32 %v774, 1.0
  %v971 = vadd.f32 %v776, 1.0
  %v972 = vadd.f32 %v778, 1.0
  %v973 = vadd.f32 %v780, 1.0
  %v974 = vadd.f32 %v782, 1.0
  %v975 = vrcp.pop %v783
  %v976 = vmul.f32 1.0, %v975
  %v977 = vrcp.pop %v784
  %v978 = vmul.f32 1.0, %v977
  %v979 = vrcp.pop %v785
  %v980 = vmul.f32 1.0, %v979
  %v981 = vrcp.pop %v786
  %v982 = vmul.f32 1.0, %v981
  %v983 = vrcp.pop %v787
  %v984 = vmul.f32 1.0, %v983
  %v985 = vrcp.pop %v788
  %v986 = vmul.f32 1.0, %v985
  %v987 = vrcp.pop %v789
  %v988 = vmul.f32 1.0, %v987
  %v989 = vrcp.pop %v790
  %v990 = vmul.f32 1.0, %v989
  %v991 = vrcp.pop %v791
  %v992 = vmul.f32 1.0, %v991
  %v993 = vrcp.pop %v792
  %v994 = vmul.f32 1.0, %v993
  %v995 = vrcp.pop %v793
  %v996 = vmul.f32 1.0, %v995
  %v997 = vrcp.pop %v794
  %v998 = vmul.f32 1.0, %v997
  %v999 = vrcp.pop %v795
  %v1000 = vmul.f32 1.0, %v999
  %v1001 = vrcp.pop %v796
  %v1002 = vmul.f32 1.0, %v1001
  %v1003 = vrcp.pop %v797
  %v1004 = vmul.f32 1.0, %v1003
  %v1005 = vrcp.pop %v798
  %v1006 = vmul.f32 1.0, %v1005
  %v1007 = vrcp.pop %v799
  %v1008 = vmul.f32 1.0, %v1007
  %v1009 = vrcp.pop %v800
  %v1010 = vmul.f32 1.0, %v1009
  %v1011 = vrcp.pop %v801
  %v1012 = vmul.f32 1.0, %v1011
  %v1013 = vrcp.pop %v802
  %v1014 = vmul.f32 1.0, %v1013
  %v1015 = vrcp.pop %v803
  %v1016 = vmul.f32 1.0, %v1015
  %v1017 = vrcp.pop %v804
  %v1018 = vmul.f32 1.0, %v1017
  %v1019 = vrcp.pop %v805
  %v1020 = vmul.f32 1.0, %v1019
  %v1021 = vrcp.pop %v806
  %v1022 = vmul.f32 1.0, %v1021
  %v1023 = vrcp.pop %v807
  %v1024 = vmul.f32 1.0, %v1023
  %v1025 = vrcp.pop %v808
  %v1026 = vmul.f32 1.0, %v1025
  %v1027 = vrcp.pop %v809
  %v1028 = vmul.f32 1.0, %v1027
  %v1029 = vrcp.pop %v810
  %v1030 = vmul.f32 1.0, %v1029
  %v1031 = vrcp.pop %v811
  %v1032 = vmul.f32 1.0, %v1031
  %v1033 = vrcp.pop %v812
  %v1034 = vmul.f32 1.0, %v1033
  %v1035 = vrcp.pop %v813
  %v1036 = vmul.f32 1.0, %v1035
  %v1037 = vrcp.pop %v814
  %v1038 = vmul.f32 1.0, %v1037
  %v1039 = vrcp.pop %v815
  %v1040 = vmul.f32 1.0, %v1039
  %v1041 = vrcp.pop %v816
  %v1042 = vmul.f32 1.0, %v1041
  %v1043 = vrcp.pop %v817
  %v1044 = vmul.f32 1.0, %v1043
  %v1045 = vrcp.pop %v818
  %v1046 = vmul.f32 1.0, %v1045
  %v1047 = vrcp.pop %v819
  %v1048 = vmul.f32 1.0, %v1047
  %v1049 = vrcp.pop %v820
  %v1050 = vmul.f32 1.0, %v1049
  %v1051 = vrcp.pop %v821
  %v1052 = vmul.f32 1.0, %v1051
  %v1053 = vrcp.pop %v822
  %v1054 = vmul.f32 1.0, %v1053
  %v1055 = vrcp.pop %v823
  %v1056 = vmul.f32 1.0, %v1055
  %v1057 = vrcp.pop %v824
  %v1058 = vmul.f32 1.0, %v1057
  %v1059 = vrcp.pop %v825
  %v1060 = vmul.f32 1.0, %v1059
  %v1061 = vrcp.pop %v826
  %v1062 = vmul.f32 1.0, %v1061
  %v1063 = vrcp.pop %v827
  %v1064 = vmul.f32 1.0, %v1063
  %v1065 = vrcp.pop %v828
  %v1066 = vmul.f32 1.0, %v1065
  %v1067 = vrcp.pop %v829
  %v1068 = vmul.f32 1.0, %v1067
  %v1069 = vrcp.pop %v830
  %v1070 = vmul.f32 1.0, %v1069
  %v1071 = vrcp.pop %v831
  %v1072 = vmul.f32 1.0, %v1071
  %v1073 = vrcp.pop %v832
  %v1074 = vmul.f32 1.0, %v1073
  %v1075 = vrcp.pop %v833
  %v1076 = vmul.f32 1.0, %v1075
  %v1077 = vrcp.pop %v834
  %v1078 = vmul.f32 1.0, %v1077
  %v1079 = vrcp.pop %v835
  %v1080 = vmul.f32 1.0, %v1079
  %v1081 = vrcp.pop %v836
  %v1082 = vmul.f32 1.0, %v1081
  %v1083 = vrcp.pop %v837
  %v1084 = vmul.f32 1.0, %v1083
  %v1085 = vrcp.pop %v838
  %v1086 = vmul.f32 1.0, %v1085
  %v1087 = vrcp.pop %v839
  %v1088 = vmul.f32 1.0, %v1087
  %v1089 = vrcp.pop %v840
  %v1090 = vmul.f32 1.0, %v1089
  %v1091 = vrcp.pop %v841
  %v1092 = vmul.f32 1.0, %v1091
  %v1093 = vrcp.pop %v842
  %v1094 = vmul.f32 1.0, %v1093
  %v1095 = vrcp.pop %v843
  %v1096 = vmul.f32 1.0, %v1095
  %v1097 = vrcp.pop %v844
  %v1098 = vmul.f32 1.0, %v1097
  %v1099 = vrcp.pop %v845
  %v1100 = vmul.f32 1.0, %v1099
  %v1101 = vrcp.pop %v846
  %v1102 = vmul.f32 1.0, %v1101
  %v1103 = vrcp.pop %v847
  %v1104 = vmul.f32 1.0, %v1103
  %v1105 = vrcp.pop %v848
  %v1106 = vmul.f32 1.0, %v1105
  %v1107 = vrcp.pop %v849
  %v1108 = vmul.f32 1.0, %v1107
  %v1109 = vrcp.pop %v850
  %v1110 = vmul.f32 1.0, %v1109
  %v1111 = vrcp.pop %v851
  %v1112 = vmul.f32 1.0, %v1111
  %v1113 = vrcp.pop %v852
  %v1114 = vmul.f32 1.0, %v1113
  %v1115 = vrcp.pop %v853
  %v1116 = vmul.f32 1.0, %v1115
  %v1117 = vrcp.pop %v854
  %v1118 = vmul.f32 1.0, %v1117
  %v1119 = vrcp.pop %v855
  %v1120 = vmul.f32 1.0, %v1119
  %v1121 = vrcp.pop %v856
  %v1122 = vmul.f32 1.0, %v1121
  %v1123 = vrcp.pop %v857
  %v1124 = vmul.f32 1.0, %v1123
  %v1125 = vrcp.pop %v858
  %v1126 = vmul.f32 1.0, %v1125
  %v1127 = vrcp.pop %v859
  %v1128 = vmul.f32 1.0, %v1127
  %v1129 = vrcp.pop %v860
  %v1130 = vmul.f32 1.0, %v1129
  %v1131 = vrcp.pop %v861
  %v1132 = vmul.f32 1.0, %v1131
  %v1133 = vrcp.pop %v862
  %v1134 = vmul.f32 1.0, %v1133
  %v1135 = vrcp.pop %v863
  %v1136 = vmul.f32 1.0, %v1135
  %v1137 = vrcp.pop %v864
  %v1138 = vmul.f32 1.0, %v1137
  %v1139 = vrcp.pop %v865
  %v1140 = vmul.f32 1.0, %v1139
  %v1141 = vrcp.pop %v866
  %v1142 = vmul.f32 1.0, %v1141
  %v1143 = vrcp.pop %v867
  %v1144 = vmul.f32 1.0, %v1143
  %v1145 = vrcp.pop %v868
  %v1146 = vmul.f32 1.0, %v1145
  %v1147 = vrcp.pop %v869
  %v1148 = vmul.f32 1.0, %v1147
  %v1149 = vrcp.pop %v870
  %v1150 = vmul.f32 1.0, %v1149
  %v1151 = vrcp.pop %v871
  %v1152 = vmul.f32 1.0, %v1151
  %v1153 = vrcp.pop %v872
  %v1154 = vmul.f32 1.0, %v1153
  %v1155 = vrcp.pop %v873
  %v1156 = vmul.f32 1.0, %v1155
  %v1157 = vrcp.pop %v874
  %v1158 = vmul.f32 1.0, %v1157
  %v1159 = vrcp.pop %v875
  %v1160 = vmul.f32 1.0, %v1159
  %v1161 = vrcp.pop %v876
  %v1162 = vmul.f32 1.0, %v1161
  %v1163 = vrcp.pop %v877
  %v1164 = vmul.f32 1.0, %v1163
  %v1165 = vrcp.pop %v878
  %v1166 = vmul.f32 1.0, %v1165
  %v1167 = vrcp.pop %v879
  %v1168 = vmul.f32 1.0, %v1167
  %v1169 = vrcp.pop %v880
  %v1170 = vmul.f32 1.0, %v1169
  %v1171 = vrcp.pop %v881
  %v1172 = vmul.f32 1.0, %v1171
  %v1173 = vrcp.pop %v882
  %v1174 = vmul.f32 1.0, %v1173
  %v1175 = vrcp.pop %v883
  %v1176 = vmul.f32 1.0, %v1175
  %v1177 = vrcp.pop %v884
  %v1178 = vmul.f32 1.0, %v1177
  %v1179 = vrcp.pop %v885
  %v1180 = vmul.f32 1.0, %v1179
  %v1181 = vrcp.pop %v886
  %v1182 = vmul.f32 1.0, %v1181
  %v1183 = vrcp.pop %v887
  %v1184 = vmul.f32 1.0, %v1183
  %v1185 = vrcp.pop %v888
  %v1186 = vmul.f32 1.0, %v1185
  %v1187 = vrcp.pop %v889
  %v1188 = vmul.f32 1.0, %v1187
  %v1189 = vrcp.pop %v890
  %v1190 = vmul.f32 1.0, %v1189
  %v1191 = vrcp.pop %v891
  %v1192 = vmul.f32 1.0, %v1191
  %v1193 = vrcp.pop %v892
  %v1194 = vmul.f32 1.0, %v1193
  %v1195 = vrcp.pop %v893
  %v1196 = vmul.f32 1.0, %v1195
  %v1197 = vrcp.pop %v894
  %v1198 = vmul.f32 1.0, %v1197
  %v1199 = vrcp.pop %v895
  %v1200 = vmul.f32 1.0, %v1199
  %v1201 = vrcp.pop %v896
  %v1202 = vmul.f32 1.0, %v1201
  %v1203 = vrcp.pop %v897
  %v1204 = vmul.f32 1.0, %v1203
  %v1205 = vrcp.pop %v898
  %v1206 = vmul.f32 1.0, %v1205
  %v1207 = vrcp.pop %v899
  %v1208 = vmul.f32 1.0, %v1207
  %v1209 = vrcp.pop %v900
  %v1210 = vmul.f32 1.0, %v1209
  %v1211 = vrcp.pop %v901
  %v1212 = vmul.f32 1.0, %v1211
  %v1213 = vrcp.pop %v902
  %v1214 = vmul.f32 1.0, %v1213
  %v1215 = vrcp.pop %v903
  %v1216 = vmul.f32 1.0, %v1215
  %v1217 = vrcp.pop %v904
  %v1218 = vmul.f32 1.0, %v1217
  %v1219 = vrcp.pop %v905
  %v1220 = vmul.f32 1.0, %v1219
  %v1221 = vrcp.pop %v906
  %v1222 = vmul.f32 1.0, %v1221
  %v1223 = vrcp.pop %v907
  %v1224 = vmul.f32 1.0, %v1223
  %v1225 = vrcp.pop %v908
  %v1226 = vmul.f32 1.0, %v1225
  %v1227 = vrcp.pop %v909
  %v1228 = vmul.f32 1.0, %v1227
  %v1229 = vrcp.pop %v910
  %v1230 = vmul.f32 1.0, %v1229
  %v1231 = vrcp.pop %v911
  %v1232 = vmul.f32 1.0, %v1231
  %v1233 = vrcp.pop %v912
  %v1234 = vmul.f32 1.0, %v1233
  %v1235 = vrcp.pop %v913
  %v1236 = vmul.f32 1.0, %v1235
  %v1237 = vrcp.pop %v914
  %v1238 = vmul.f32 1.0, %v1237
  %v1239 = vrcp.pop %v915
  %v1240 = vmul.f32 1.0, %v1239
  %v1241 = vrcp.pop %v916
  %v1242 = vmul.f32 1.0, %v1241
  %v1243 = vrcp.pop %v917
  %v1244 = vmul.f32 1.0, %v1243
  %v1245 = vrcp.pop %v918
  %v1246 = vmul.f32 1.0, %v1245
  %v1247 = vrcp.pop %v919
  %v1248 = vmul.f32 1.0, %v1247
  %v1249 = vrcp.pop %v920
  %v1250 = vmul.f32 1.0, %v1249
  %v1251 = vrcp.pop %v921
  %v1252 = vmul.f32 1.0, %v1251
  %v1253 = vrcp.pop %v922
  %v1254 = vmul.f32 1.0, %v1253
  %v1255 = vrcp.pop %v923
  %v1256 = vmul.f32 1.0, %v1255
  %v1257 = vrcp.pop %v924
  %v1258 = vmul.f32 1.0, %v1257
  %v1259 = vrcp.pop %v925
  %v1260 = vmul.f32 1.0, %v1259
  %v1261 = vrcp.pop %v926
  %v1262 = vmul.f32 1.0, %v1261
  %v1263 = vrcp.pop %v927
  %v1264 = vmul.f32 1.0, %v1263
  %v1265 = vrcp.pop %v928
  %v1266 = vmul.f32 1.0, %v1265
  %v1267 = vrcp.pop %v929
  %v1268 = vmul.f32 1.0, %v1267
  %v1269 = vrcp.pop %v930
  %v1270 = vmul.f32 1.0, %v1269
  %v1271 = vrcp.pop %v931
  %v1272 = vmul.f32 1.0, %v1271
  %v1273 = vrcp.pop %v932
  %v1274 = vmul.f32 1.0, %v1273
  %v1275 = vrcp.pop %v933
  %v1276 = vmul.f32 1.0, %v1275
  %v1277 = vrcp.pop %v934
  %v1278 = vmul.f32 1.0, %v1277
  %v1279 = vrcp.pop %v935
  %v1280 = vmul.f32 1.0, %v1279
  %v1281 = vrcp.pop %v936
  %v1282 = vmul.f32 1.0, %v1281
  %v1283 = vrcp.pop %v937
  %v1284 = vmul.f32 1.0, %v1283
  %v1285 = vrcp.pop %v938
  %v1286 = vmul.f32 1.0, %v1285
  %v1287 = vrcp.pop %v939
  %v1288 = vmul.f32 1.0, %v1287
  %v1289 = vrcp.pop %v940
  %v1290 = vmul.f32 1.0, %v1289
  %v1291 = vrcp.pop %v941
  %v1292 = vmul.f32 1.0, %v1291
  %v1293 = vrcp.pop %v942
  %v1294 = vmul.f32 1.0, %v1293
  %v1295 = vrcp.pop %v943
  %v1296 = vmul.f32 1.0, %v1295
  %v1297 = vrcp.pop %v944
  %v1298 = vmul.f32 1.0, %v1297
  %v1299 = vrcp.pop %v945
  %v1300 = vmul.f32 1.0, %v1299
  %v1301 = vrcp.pop %v946
  %v1302 = vmul.f32 1.0, %v1301
  %v1303 = vrcp.pop %v947
  %v1304 = vmul.f32 1.0, %v1303
  %v1305 = vrcp.pop %v948
  %v1306 = vmul.f32 1.0, %v1305
  %v1307 = vrcp.pop %v949
  %v1308 = vmul.f32 1.0, %v1307
  %v1309 = vrcp.pop %v950
  %v1310 = vmul.f32 1.0, %v1309
  %v1311 = vrcp.pop %v951
  %v1312 = vmul.f32 1.0, %v1311
  %v1313 = vrcp.pop %v952
  %v1314 = vmul.f32 1.0, %v1313
  %v1315 = vrcp.pop %v953
  %v1316 = vmul.f32 1.0, %v1315
  %v1317 = vrcp.pop %v954
  %v1318 = vmul.f32 1.0, %v1317
  %v1319 = vrcp.pop %v955
  %v1320 = vmul.f32 1.0, %v1319
  %v1321 = vrcp.pop %v956
  %v1322 = vmul.f32 1.0, %v1321
  %v1323 = vrcp.pop %v957
  %v1324 = vmul.f32 1.0, %v1323
  %v1325 = vrcp.pop %v958
  %v1326 = vmul.f32 1.0, %v1325
  %v1327 = vrcp.pop %v959
  %v1328 = vmul.f32 1.0, %v1327
  %v1329 = vrcp.pop %v960
  %v1330 = vmul.f32 1.0, %v1329
  %v1331 = vrcp.pop %v961
  %v1332 = vmul.f32 1.0, %v1331
  %v1333 = vrcp.pop %v962
  %v1334 = vmul.f32 1.0, %v1333
  %v1335 = vrcp.pop %v963
  %v1336 = vmul.f32 1.0, %v1335
  %v1337 = vrcp.pop %v964
  %v1338 = vmul.f32 1.0, %v1337
  %v1339 = vrcp.pop %v965
  %v1340 = vmul.f32 1.0, %v1339
  %v1341 = vrcp.pop %v966
  %v1342 = vmul.f32 1.0, %v1341
  %v1343 = vrcp.pop %v967
  %v1344 = vmul.f32 1.0, %v1343
  %v1345 = vrcp.pop %v968
  %v1346 = vmul.f32 1.0, %v1345
  %v1347 = vrcp.pop %v969
  %v1348 = vmul.f32 1.0, %v1347
  %v1349 = vrcp.pop %v970
  %v1350 = vmul.f32 1.0, %v1349
  %v1351 = vrcp.pop %v971
  %v1352 = vmul.f32 1.0, %v1351
  %v1353 = vrcp.pop %v972
  %v1354 = vmul.f32 1.0, %v1353
  %v1355 = vrcp.pop %v973
  %v1356 = vmul.f32 1.0, %v1355
  %v1357 = vrcp.pop %v974
  %v1358 = vmul.f32 1.0, %v1357
  %v1359 = vld [vmem:[%s2] sm:$0xff]
  %v1360 = vld [vmem:[%s2 + $0x8] sm:$0xff]
  %v1361 = vld [vmem:[%s2 + $0x10] sm:$0xff]
  %v1362 = vld [vmem:[%s2 + $0x18] sm:$0xff]
  %v1363 = vld [vmem:[%s2 + $0x20] sm:$0xff]
  %v1364 = vld [vmem:[%s2 + $0x28] sm:$0xff]
  %v1365 = vld [vmem:[%s2 + $0x30] sm:$0xff]
  %v1366 = vld [vmem:[%s2 + $0x38] sm:$0xff]
  %v1367 = vld [vmem:[%s2 + $0x40] sm:$0xff]
  %v1368 = vld [vmem:[%s2 + $0x48] sm:$0xff]
  %v1369 = vld [vmem:[%s2 + $0x50] sm:$0xff]
  %v1370 = vld [vmem:[%s2 + $0x58] sm:$0xff]
  %v1371 = vld [vmem:[%s2 + $0x60] sm:$0xff]
  %v1372 = vld [vmem:[%s2 + $0x68] sm:$0xff]
  %v1373 = vld [vmem:[%s2 + $0x70] sm:$0xff]
  %v1374 = vld [vmem:[%s2 + $0x78] sm:$0xff]
  %v1375 = vld [vmem:[%s2 + $0x80] sm:$0xff]
  %v1376 = vld [vmem:[%s2 + $0x88] sm:$0xff]
  %v1377 = vld [vmem:[%s2 + $0x90] sm:$0xff]
  %v1378 = vld [vmem:[%s2 + $0x98] sm:$0xff]
  %v1379 = vld [vmem:[%s2 + $0xa0] sm:$0xff]
  %v1380 = vld [vmem:[%s2 + $0xa8] sm:$0xff]
  %v1381 = vld [vmem:[%s2 + $0xb0] sm:$0xff]
  %v1382 = vld [vmem:[%s2 + $0xb8] sm:$0xff]
  %v1383 = vld [vmem:[%s2 + $0xc0] sm:$0xff]
  %v1384 = vld [vmem:[%s2 + $0xc8] sm:$0xff]
  %v1385 = vld [vmem:[%s2 + $0xd0] sm:$0xff]
  %v1386 = vld [vmem:[%s2 + $0xd8] sm:$0xff]
  %v1387 = vld [vmem:[%s2 + $0xe0] sm:$0xff]
  %v1388 = vld [vmem:[%s2 + $0xe8] sm:$0xff]
  %v1389 = vld [vmem:[%s2 + $0xf0] sm:$0xff]
  %v1390 = vld [vmem:[%s2 + $0xf8] sm:$0xff]
  %v1391 = vld [vmem:[%s2 + $0x100] sm:$0xff]
  %v1392 = vld [vmem:[%s2 + $0x108] sm:$0xff]
  %v1393 = vld [vmem:[%s2 + $0x110] sm:$0xff]
  %v1394 = vld [vmem:[%s2 + $0x118] sm:$0xff]
  %v1395 = vld [vmem:[%s2 + $0x120] sm:$0xff]
  %v1396 = vld [vmem:[%s2 + $0x128] sm:$0xff]
  %v1397 = vld [vmem:[%s2 + $0x130] sm:$0xff]
  %v1398 = vld [vmem:[%s2 + $0x138] sm:$0xff]
  %v1399 = vld [vmem:[%s2 + $0x140] sm:$0xff]
  %v1400 = vld [vmem:[%s2 + $0x148] sm:$0xff]
  %v1401 = vld [vmem:[%s2 + $0x150] sm:$0xff]
  %v1402 = vld [vmem:[%s2 + $0x158] sm:$0xff]
  %v1403 = vld [vmem:[%s2 + $0x160] sm:$0xff]
  %v1404 = vld [vmem:[%s2 + $0x168] sm:$0xff]
  %v1405 = vld [vmem:[%s2 + $0x170] sm:$0xff]
  %v1406 = vld [vmem:[%s2 + $0x178] sm:$0xff]
  %v1407 = vld [vmem:[%s2 + $0x180] sm:$0xff]
  %v1408 = vld [vmem:[%s2 + $0x188] sm:$0xff]
  %v1409 = vld [vmem:[%s2 + $0x190] sm:$0xff]
  %v1410 = vld [vmem:[%s2 + $0x198] sm:$0xff]
  %v1411 = vld [vmem:[%s2 + $0x1a0] sm:$0xff]
  %v1412 = vld [vmem:[%s2 + $0x1a8] sm:$0xff]
  %v1413 = vld [vmem:[%s2 + $0x1b0] sm:$0xff]
  %v1414 = vld [vmem:[%s2 + $0x1b8] sm:$0xff]
  %v1415 = vld [vmem:[%s2 + $0x1c0] sm:$0xff]
  %v1416 = vld [vmem:[%s2 + $0x1c8] sm:$0xff]
  %v1417 = vld [vmem:[%s2 + $0x1d0] sm:$0xff]
  %v1418 = vld [vmem:[%s2 + $0x1d8] sm:$0xff]
  %v1419 = vld [vmem:[%s2 + $0x1e0] sm:$0xff]
  %v1420 = vld [vmem:[%s2 + $0x1e8] sm:$0xff]
  %v1421 = vld [vmem:[%s2 + $0x1f0] sm:$0xff]
  %v1422 = vld [vmem:[%s2 + $0x1f8] sm:$0xff]
  %v1423 = vld [vmem:[%s2 + $0x200] sm:$0xff]
  %v1424 = vld [vmem:[%s2 + $0x208] sm:$0xff]
  %v1425 = vld [vmem:[%s2 + $0x210] sm:$0xff]
  %v1426 = vld [vmem:[%s2 + $0x218] sm:$0xff]
  %v1427 = vld [vmem:[%s2 + $0x220] sm:$0xff]
  %v1428 = vld [vmem:[%s2 + $0x228] sm:$0xff]
  %v1429 = vld [vmem:[%s2 + $0x230] sm:$0xff]
  %v1430 = vld [vmem:[%s2 + $0x238] sm:$0xff]
  %v1431 = vld [vmem:[%s2 + $0x240] sm:$0xff]
  %v1432 = vld [vmem:[%s2 + $0x248] sm:$0xff]
  %v1433 = vld [vmem:[%s2 + $0x250] sm:$0xff]
  %v1434 = vld [vmem:[%s2 + $0x258] sm:$0xff]
  %v1435 = vld [vmem:[%s2 + $0x260] sm:$0xff]
  %v1436 = vld [vmem:[%s2 + $0x268] sm:$0xff]
  %v1437 = vld [vmem:[%s2 + $0x270] sm:$0xff]
  %v1438 = vld [vmem:[%s2 + $0x278] sm:$0xff]
  %v1439 = vld [vmem:[%s2 + $0x280] sm:$0xff]
  %v1440 = vld [vmem:[%s2 + $0x288] sm:$0xff]
  %v1441 = vld [vmem:[%s2 + $0x290] sm:$0xff]
  %v1442 = vld [vmem:[%s2 + $0x298] sm:$0xff]
  %v1443 = vld [vmem:[%s2 + $0x2a0] sm:$0xff]
  %v1444 = vld [vmem:[%s2 + $0x2a8] sm:$0xff]
  %v1445 = vld [vmem:[%s2 + $0x2b0] sm:$0xff]
  %v1446 = vld [vmem:[%s2 + $0x2b8] sm:$0xff]
  %v1447 = vld [vmem:[%s2 + $0x2c0] sm:$0xff]
  %v1448 = vld [vmem:[%s2 + $0x2c8] sm:$0xff]
  %v1449 = vld [vmem:[%s2 + $0x2d0] sm:$0xff]
  %v1450 = vld [vmem:[%s2 + $0x2d8] sm:$0xff]
  %v1451 = vld [vmem:[%s2 + $0x2e0] sm:$0xff]
  %v1452 = vld [vmem:[%s2 + $0x2e8] sm:$0xff]
  %v1453 = vld [vmem:[%s2 + $0x2f0] sm:$0xff]
  %v1454 = vld [vmem:[%s2 + $0x2f8] sm:$0xff]
  %v1455 = vld [vmem:[%s2 + $0x300] sm:$0xff]
  %v1456 = vld [vmem:[%s2 + $0x308] sm:$0xff]
  %v1457 = vld [vmem:[%s2 + $0x310] sm:$0xff]
  %v1458 = vld [vmem:[%s2 + $0x318] sm:$0xff]
  %v1459 = vld [vmem:[%s2 + $0x320] sm:$0xff]
  %v1460 = vld [vmem:[%s2 + $0x328] sm:$0xff]
  %v1461 = vld [vmem:[%s2 + $0x330] sm:$0xff]
  %v1462 = vld [vmem:[%s2 + $0x338] sm:$0xff]
  %v1463 = vld [vmem:[%s2 + $0x340] sm:$0xff]
  %v1464 = vld [vmem:[%s2 + $0x348] sm:$0xff]
  %v1465 = vld [vmem:[%s2 + $0x350] sm:$0xff]
  %v1466 = vld [vmem:[%s2 + $0x358] sm:$0xff]
  %v1467 = vld [vmem:[%s2 + $0x360] sm:$0xff]
  %v1468 = vld [vmem:[%s2 + $0x368] sm:$0xff]
  %v1469 = vld [vmem:[%s2 + $0x370] sm:$0xff]
  %v1470 = vld [vmem:[%s2 + $0x378] sm:$0xff]
  %v1471 = vld [vmem:[%s2 + $0x380] sm:$0xff]
  %v1472 = vld [vmem:[%s2 + $0x388] sm:$0xff]
  %v1473 = vld [vmem:[%s2 + $0x390] sm:$0xff]
  %v1474 = vld [vmem:[%s2 + $0x398] sm:$0xff]
  %v1475 = vld [vmem:[%s2 + $0x3a0] sm:$0xff]
  %v1476 = vld [vmem:[%s2 + $0x3a8] sm:$0xff]
  %v1477 = vld [vmem:[%s2 + $0x3b0] sm:$0xff]
  %v1478 = vld [vmem:[%s2 + $0x3b8] sm:$0xff]
  %v1479 = vld [vmem:[%s2 + $0x3c0] sm:$0xff]
  %v1480 = vld [vmem:[%s2 + $0x3c8] sm:$0xff]
  %v1481 = vld [vmem:[%s2 + $0x3d0] sm:$0xff]
  %v1482 = vld [vmem:[%s2 + $0x3d8] sm:$0xff]
  %v1483 = vld [vmem:[%s2 + $0x3e0] sm:$0xff]
  %v1484 = vld [vmem:[%s2 + $0x3e8] sm:$0xff]
  %v1485 = vld [vmem:[%s2 + $0x3f0] sm:$0xff]
  %v1486 = vld [vmem:[%s2 + $0x3f8] sm:$0xff]
  %v1487 = vld [vmem:[%s2 + $0x400] sm:$0xff]
  %v1488 = vld [vmem:[%s2 + $0x408] sm:$0xff]
  %v1489 = vld [vmem:[%s2 + $0x410] sm:$0xff]
  %v1490 = vld [vmem:[%s2 + $0x418] sm:$0xff]
  %v1491 = vld [vmem:[%s2 + $0x420] sm:$0xff]
  %v1492 = vld [vmem:[%s2 + $0x428] sm:$0xff]
  %v1493 = vld [vmem:[%s2 + $0x430] sm:$0xff]
  %v1494 = vld [vmem:[%s2 + $0x438] sm:$0xff]
  %v1495 = vld [vmem:[%s2 + $0x440] sm:$0xff]
  %v1496 = vld [vmem:[%s2 + $0x448] sm:$0xff]
  %v1497 = vld [vmem:[%s2 + $0x450] sm:$0xff]
  %v1498 = vld [vmem:[%s2 + $0x458] sm:$0xff]
  %v1499 = vld [vmem:[%s2 + $0x460] sm:$0xff]
  %v1500 = vld [vmem:[%s2 + $0x468] sm:$0xff]
  %v1501 = vld [vmem:[%s2 + $0x470] sm:$0xff]
  %v1502 = vld [vmem:[%s2 + $0x478] sm:$0xff]
  %v1503 = vld [vmem:[%s2 + $0x480] sm:$0xff]
  %v1504 = vld [vmem:[%s2 + $0x488] sm:$0xff]
  %v1505 = vld [vmem:[%s2 + $0x490] sm:$0xff]
  %v1506 = vld [vmem:[%s2 + $0x498] sm:$0xff]
  %v1507 = vld [vmem:[%s2 + $0x4a0] sm:$0xff]
  %v1508 = vld [vmem:[%s2 + $0x4a8] sm:$0xff]
  %v1509 = vld [vmem:[%s2 + $0x4b0] sm:$0xff]
  %v1510 = vld [vmem:[%s2 + $0x4b8] sm:$0xff]
  %v1511 = vld [vmem:[%s2 + $0x4c0] sm:$0xff]
  %v1512 = vld [vmem:[%s2 + $0x4c8] sm:$0xff]
  %v1513 = vld [vmem:[%s2 + $0x4d0] sm:$0xff]
  %v1514 = vld [vmem:[%s2 + $0x4d8] sm:$0xff]
  %v1515 = vld [vmem:[%s2 + $0x4e0] sm:$0xff]
  %v1516 = vld [vmem:[%s2 + $0x4e8] sm:$0xff]
  %v1517 = vld [vmem:[%s2 + $0x4f0] sm:$0xff]
  %v1518 = vld [vmem:[%s2 + $0x4f8] sm:$0xff]
  %v1519 = vld [vmem:[%s2 + $0x500] sm:$0xff]
  %v1520 = vld [vmem:[%s2 + $0x508] sm:$0xff]
  %v1521 = vld [vmem:[%s2 + $0x510] sm:$0xff]
  %v1522 = vld [vmem:[%s2 + $0x518] sm:$0xff]
  %v1523 = vld [vmem:[%s2 + $0x520] sm:$0xff]
  %v1524 = vld [vmem:[%s2 + $0x528] sm:$0xff]
  %v1525 = vld [vmem:[%s2 + $0x530] sm:$0xff]
  %v1526 = vld [vmem:[%s2 + $0x538] sm:$0xff]
  %v1527 = vld [vmem:[%s2 + $0x540] sm:$0xff]
  %v1528 = vld [vmem:[%s2 + $0x548] sm:$0xff]
  %v1529 = vld [vmem:[%s2 + $0x550] sm:$0xff]
  %v1530 = vld [vmem:[%s2 + $0x558] sm:$0xff]
  %v1531 = vld [vmem:[%s2 + $0x560] sm:$0xff]
  %v1532 = vld [vmem:[%s2 + $0x568] sm:$0xff]
  %v1533 = vld [vmem:[%s2 + $0x570] sm:$0xff]
  %v1534 = vld [vmem:[%s2 + $0x578] sm:$0xff]
  %v1535 = vld [vmem:[%s2 + $0x580] sm:$0xff]
  %v1536 = vld [vmem:[%s2 + $0x588] sm:$0xff]
  %v1537 = vld [vmem:[%s2 + $0x590] sm:$0xff]
  %v1538 = vld [vmem:[%s2 + $0x598] sm:$0xff]
  %v1539 = vld [vmem:[%s2 + $0x5a0] sm:$0xff]
  %v1540 = vld [vmem:[%s2 + $0x5a8] sm:$0xff]
  %v1541 = vld [vmem:[%s2 + $0x5b0] sm:$0xff]
  %v1542 = vld [vmem:[%s2 + $0x5b8] sm:$0xff]
  %v1543 = vld [vmem:[%s2 + $0x5c0] sm:$0xff]
  %v1544 = vld [vmem:[%s2 + $0x5c8] sm:$0xff]
  %v1545 = vld [vmem:[%s2 + $0x5d0] sm:$0xff]
  %v1546 = vld [vmem:[%s2 + $0x5d8] sm:$0xff]
  %v1547 = vld [vmem:[%s2 + $0x5e0] sm:$0xff]
  %v1548 = vld [vmem:[%s2 + $0x5e8] sm:$0xff]
  %v1549 = vld [vmem:[%s2 + $0x5f0] sm:$0xff]
  %v1550 = vld [vmem:[%s2 + $0x5f8] sm:$0xff]
  %1552 = vset.pattern.permute.xlu0 0
  %1553 = vperm.xlu0 %1552, %v976
  %v1554 = vpop.permute.xlu0 %1553
  %1557 = vset.pattern.permute.xlu0 0
  %1558 = vperm.xlu0 %1557, %v978
  %v1559 = vpop.permute.xlu0 %1558
  %1562 = vset.pattern.permute.xlu0 0
  %1563 = vperm.xlu0 %1562, %v980
  %v1564 = vpop.permute.xlu0 %1563
  %1567 = vset.pattern.permute.xlu0 0
  %1568 = vperm.xlu0 %1567, %v982
  %v1569 = vpop.permute.xlu0 %1568
  %1572 = vset.pattern.permute.xlu0 0
  %1573 = vperm.xlu0 %1572, %v984
  %v1574 = vpop.permute.xlu0 %1573
  %1577 = vset.pattern.permute.xlu0 0
  %1578 = vperm.xlu0 %1577, %v986
  %v1579 = vpop.permute.xlu0 %1578
  %1582 = vset.pattern.permute.xlu0 0
  %1583 = vperm.xlu0 %1582, %v988
  %v1584 = vpop.permute.xlu0 %1583
  %1587 = vset.pattern.permute.xlu0 0
  %1588 = vperm.xlu0 %1587, %v990
  %v1589 = vpop.permute.xlu0 %1588
  %1592 = vset.pattern.permute.xlu0 0
  %1593 = vperm.xlu0 %1592, %v992
  %v1594 = vpop.permute.xlu0 %1593
  %1597 = vset.pattern.permute.xlu0 0
  %1598 = vperm.xlu0 %1597, %v994
  %v1599 = vpop.permute.xlu0 %1598
  %1602 = vset.pattern.permute.xlu0 0
  %1603 = vperm.xlu0 %1602, %v996
  %v1604 = vpop.permute.xlu0 %1603
  %1607 = vset.pattern.permute.xlu0 0
  %1608 = vperm.xlu0 %1607, %v998
  %v1609 = vpop.permute.xlu0 %1608
  %1612 = vset.pattern.permute.xlu0 0
  %1613 = vperm.xlu0 %1612, %v1000
  %v1614 = vpop.permute.xlu0 %1613
  %1617 = vset.pattern.permute.xlu0 0
  %1618 = vperm.xlu0 %1617, %v1002
  %v1619 = vpop.permute.xlu0 %1618
  %1622 = vset.pattern.permute.xlu0 0
  %1623 = vperm.xlu0 %1622, %v1004
  %v1624 = vpop.permute.xlu0 %1623
  %1627 = vset.pattern.permute.xlu0 0
  %1628 = vperm.xlu0 %1627, %v1006
  %v1629 = vpop.permute.xlu0 %1628
  %1632 = vset.pattern.permute.xlu0 0
  %1633 = vperm.xlu0 %1632, %v1008
  %v1634 = vpop.permute.xlu0 %1633
  %1637 = vset.pattern.permute.xlu0 0
  %1638 = vperm.xlu0 %1637, %v1010
  %v1639 = vpop.permute.xlu0 %1638
  %1642 = vset.pattern.permute.xlu0 0
  %1643 = vperm.xlu0 %1642, %v1012
  %v1644 = vpop.permute.xlu0 %1643
  %1647 = vset.pattern.permute.xlu0 0
  %1648 = vperm.xlu0 %1647, %v1014
  %v1649 = vpop.permute.xlu0 %1648
  %1652 = vset.pattern.permute.xlu0 0
  %1653 = vperm.xlu0 %1652, %v1016
  %v1654 = vpop.permute.xlu0 %1653
  %1657 = vset.pattern.permute.xlu0 0
  %1658 = vperm.xlu0 %1657, %v1018
  %v1659 = vpop.permute.xlu0 %1658
  %1662 = vset.pattern.permute.xlu0 0
  %1663 = vperm.xlu0 %1662, %v1020
  %v1664 = vpop.permute.xlu0 %1663
  %1667 = vset.pattern.permute.xlu0 0
  %1668 = vperm.xlu0 %1667, %v1022
  %v1669 = vpop.permute.xlu0 %1668
  %1672 = vset.pattern.permute.xlu0 0
  %1673 = vperm.xlu0 %1672, %v1024
  %v1674 = vpop.permute.xlu0 %1673
  %1677 = vset.pattern.permute.xlu0 0
  %1678 = vperm.xlu0 %1677, %v1026
  %v1679 = vpop.permute.xlu0 %1678
  %1682 = vset.pattern.permute.xlu0 0
  %1683 = vperm.xlu0 %1682, %v1028
  %v1684 = vpop.permute.xlu0 %1683
  %1687 = vset.pattern.permute.xlu0 0
  %1688 = vperm.xlu0 %1687, %v1030
  %v1689 = vpop.permute.xlu0 %1688
  %1692 = vset.pattern.permute.xlu0 0
  %1693 = vperm.xlu0 %1692, %v1032
  %v1694 = vpop.permute.xlu0 %1693
  %1697 = vset.pattern.permute.xlu0 0
  %1698 = vperm.xlu0 %1697, %v1034
  %v1699 = vpop.permute.xlu0 %1698
  %1702 = vset.pattern.permute.xlu0 0
  %1703 = vperm.xlu0 %1702, %v1036
  %v1704 = vpop.permute.xlu0 %1703
  %1707 = vset.pattern.permute.xlu0 0
  %1708 = vperm.xlu0 %1707, %v1038
  %v1709 = vpop.permute.xlu0 %1708
  %1712 = vset.pattern.permute.xlu0 0
  %1713 = vperm.xlu0 %1712, %v1040
  %v1714 = vpop.permute.xlu0 %1713
  %1717 = vset.pattern.permute.xlu0 0
  %1718 = vperm.xlu0 %1717, %v1042
  %v1719 = vpop.permute.xlu0 %1718
  %1722 = vset.pattern.permute.xlu0 0
  %1723 = vperm.xlu0 %1722, %v1044
  %v1724 = vpop.permute.xlu0 %1723
  %1727 = vset.pattern.permute.xlu0 0
  %1728 = vperm.xlu0 %1727, %v1046
  %v1729 = vpop.permute.xlu0 %1728
  %1732 = vset.pattern.permute.xlu0 0
  %1733 = vperm.xlu0 %1732, %v1048
  %v1734 = vpop.permute.xlu0 %1733
  %1737 = vset.pattern.permute.xlu0 0
  %1738 = vperm.xlu0 %1737, %v1050
  %v1739 = vpop.permute.xlu0 %1738
  %1742 = vset.pattern.permute.xlu0 0
  %1743 = vperm.xlu0 %1742, %v1052
  %v1744 = vpop.permute.xlu0 %1743
  %1747 = vset.pattern.permute.xlu0 0
  %1748 = vperm.xlu0 %1747, %v1054
  %v1749 = vpop.permute.xlu0 %1748
  %1752 = vset.pattern.permute.xlu0 0
  %1753 = vperm.xlu0 %1752, %v1056
  %v1754 = vpop.permute.xlu0 %1753
  %1757 = vset.pattern.permute.xlu0 0
  %1758 = vperm.xlu0 %1757, %v1058
  %v1759 = vpop.permute.xlu0 %1758
  %1762 = vset.pattern.permute.xlu0 0
  %1763 = vperm.xlu0 %1762, %v1060
  %v1764 = vpop.permute.xlu0 %1763
  %1767 = vset.pattern.permute.xlu0 0
  %1768 = vperm.xlu0 %1767, %v1062
  %v1769 = vpop.permute.xlu0 %1768
  %1772 = vset.pattern.permute.xlu0 0
  %1773 = vperm.xlu0 %1772, %v1064
  %v1774 = vpop.permute.xlu0 %1773
  %1777 = vset.pattern.permute.xlu0 0
  %1778 = vperm.xlu0 %1777, %v1066
  %v1779 = vpop.permute.xlu0 %1778
  %1782 = vset.pattern.permute.xlu0 0
  %1783 = vperm.xlu0 %1782, %v1068
  %v1784 = vpop.permute.xlu0 %1783
  %1787 = vset.pattern.permute.xlu0 0
  %1788 = vperm.xlu0 %1787, %v1070
  %v1789 = vpop.permute.xlu0 %1788
  %1792 = vset.pattern.permute.xlu0 0
  %1793 = vperm.xlu0 %1792, %v1072
  %v1794 = vpop.permute.xlu0 %1793
  %1797 = vset.pattern.permute.xlu0 0
  %1798 = vperm.xlu0 %1797, %v1074
  %v1799 = vpop.permute.xlu0 %1798
  %1802 = vset.pattern.permute.xlu0 0
  %1803 = vperm.xlu0 %1802, %v1076
  %v1804 = vpop.permute.xlu0 %1803
  %1807 = vset.pattern.permute.xlu0 0
  %1808 = vperm.xlu0 %1807, %v1078
  %v1809 = vpop.permute.xlu0 %1808
  %1812 = vset.pattern.permute.xlu0 0
  %1813 = vperm.xlu0 %1812, %v1080
  %v1814 = vpop.permute.xlu0 %1813
  %1817 = vset.pattern.permute.xlu0 0
  %1818 = vperm.xlu0 %1817, %v1082
  %v1819 = vpop.permute.xlu0 %1818
  %1822 = vset.pattern.permute.xlu0 0
  %1823 = vperm.xlu0 %1822, %v1084
  %v1824 = vpop.permute.xlu0 %1823
  %1827 = vset.pattern.permute.xlu0 0
  %1828 = vperm.xlu0 %1827, %v1086
  %v1829 = vpop.permute.xlu0 %1828
  %1832 = vset.pattern.permute.xlu0 0
  %1833 = vperm.xlu0 %1832, %v1088
  %v1834 = vpop.permute.xlu0 %1833
  %1837 = vset.pattern.permute.xlu0 0
  %1838 = vperm.xlu0 %1837, %v1090
  %v1839 = vpop.permute.xlu0 %1838
  %1842 = vset.pattern.permute.xlu0 0
  %1843 = vperm.xlu0 %1842, %v1092
  %v1844 = vpop.permute.xlu0 %1843
  %1847 = vset.pattern.permute.xlu0 0
  %1848 = vperm.xlu0 %1847, %v1094
  %v1849 = vpop.permute.xlu0 %1848
  %1852 = vset.pattern.permute.xlu0 0
  %1853 = vperm.xlu0 %1852, %v1096
  %v1854 = vpop.permute.xlu0 %1853
  %1857 = vset.pattern.permute.xlu0 0
  %1858 = vperm.xlu0 %1857, %v1098
  %v1859 = vpop.permute.xlu0 %1858
  %1862 = vset.pattern.permute.xlu0 0
  %1863 = vperm.xlu0 %1862, %v1100
  %v1864 = vpop.permute.xlu0 %1863
  %1867 = vset.pattern.permute.xlu0 0
  %1868 = vperm.xlu0 %1867, %v1102
  %v1869 = vpop.permute.xlu0 %1868
  %1872 = vset.pattern.permute.xlu0 0
  %1873 = vperm.xlu0 %1872, %v1104
  %v1874 = vpop.permute.xlu0 %1873
  %1877 = vset.pattern.permute.xlu0 0
  %1878 = vperm.xlu0 %1877, %v1106
  %v1879 = vpop.permute.xlu0 %1878
  %1882 = vset.pattern.permute.xlu0 0
  %1883 = vperm.xlu0 %1882, %v1108
  %v1884 = vpop.permute.xlu0 %1883
  %1887 = vset.pattern.permute.xlu0 0
  %1888 = vperm.xlu0 %1887, %v1110
  %v1889 = vpop.permute.xlu0 %1888
  %1892 = vset.pattern.permute.xlu0 0
  %1893 = vperm.xlu0 %1892, %v1112
  %v1894 = vpop.permute.xlu0 %1893
  %1897 = vset.pattern.permute.xlu0 0
  %1898 = vperm.xlu0 %1897, %v1114
  %v1899 = vpop.permute.xlu0 %1898
  %1902 = vset.pattern.permute.xlu0 0
  %1903 = vperm.xlu0 %1902, %v1116
  %v1904 = vpop.permute.xlu0 %1903
  %1907 = vset.pattern.permute.xlu0 0
  %1908 = vperm.xlu0 %1907, %v1118
  %v1909 = vpop.permute.xlu0 %1908
  %1912 = vset.pattern.permute.xlu0 0
  %1913 = vperm.xlu0 %1912, %v1120
  %v1914 = vpop.permute.xlu0 %1913
  %1917 = vset.pattern.permute.xlu0 0
  %1918 = vperm.xlu0 %1917, %v1122
  %v1919 = vpop.permute.xlu0 %1918
  %1922 = vset.pattern.permute.xlu0 0
  %1923 = vperm.xlu0 %1922, %v1124
  %v1924 = vpop.permute.xlu0 %1923
  %1927 = vset.pattern.permute.xlu0 0
  %1928 = vperm.xlu0 %1927, %v1126
  %v1929 = vpop.permute.xlu0 %1928
  %1932 = vset.pattern.permute.xlu0 0
  %1933 = vperm.xlu0 %1932, %v1128
  %v1934 = vpop.permute.xlu0 %1933
  %1937 = vset.pattern.permute.xlu0 0
  %1938 = vperm.xlu0 %1937, %v1130
  %v1939 = vpop.permute.xlu0 %1938
  %1942 = vset.pattern.permute.xlu0 0
  %1943 = vperm.xlu0 %1942, %v1132
  %v1944 = vpop.permute.xlu0 %1943
  %1947 = vset.pattern.permute.xlu0 0
  %1948 = vperm.xlu0 %1947, %v1134
  %v1949 = vpop.permute.xlu0 %1948
  %1952 = vset.pattern.permute.xlu0 0
  %1953 = vperm.xlu0 %1952, %v1136
  %v1954 = vpop.permute.xlu0 %1953
  %1957 = vset.pattern.permute.xlu0 0
  %1958 = vperm.xlu0 %1957, %v1138
  %v1959 = vpop.permute.xlu0 %1958
  %1962 = vset.pattern.permute.xlu0 0
  %1963 = vperm.xlu0 %1962, %v1140
  %v1964 = vpop.permute.xlu0 %1963
  %1967 = vset.pattern.permute.xlu0 0
  %1968 = vperm.xlu0 %1967, %v1142
  %v1969 = vpop.permute.xlu0 %1968
  %1972 = vset.pattern.permute.xlu0 0
  %1973 = vperm.xlu0 %1972, %v1144
  %v1974 = vpop.permute.xlu0 %1973
  %1977 = vset.pattern.permute.xlu0 0
  %1978 = vperm.xlu0 %1977, %v1146
  %v1979 = vpop.permute.xlu0 %1978
  %1982 = vset.pattern.permute.xlu0 0
  %1983 = vperm.xlu0 %1982, %v1148
  %v1984 = vpop.permute.xlu0 %1983
  %1987 = vset.pattern.permute.xlu0 0
  %1988 = vperm.xlu0 %1987, %v1150
  %v1989 = vpop.permute.xlu0 %1988
  %1992 = vset.pattern.permute.xlu0 0
  %1993 = vperm.xlu0 %1992, %v1152
  %v1994 = vpop.permute.xlu0 %1993
  %1997 = vset.pattern.permute.xlu0 0
  %1998 = vperm.xlu0 %1997, %v1154
  %v1999 = vpop.permute.xlu0 %1998
  %2002 = vset.pattern.permute.xlu0 0
  %2003 = vperm.xlu0 %2002, %v1156
  %v2004 = vpop.permute.xlu0 %2003
  %2007 = vset.pattern.permute.xlu0 0
  %2008 = vperm.xlu0 %2007, %v1158
  %v2009 = vpop.permute.xlu0 %2008
  %2012 = vset.pattern.permute.xlu0 0
  %2013 = vperm.xlu0 %2012, %v1160
  %v2014 = vpop.permute.xlu0 %2013
  %2017 = vset.pattern.permute.xlu0 0
  %2018 = vperm.xlu0 %2017, %v1162
  %v2019 = vpop.permute.xlu0 %2018
  %2022 = vset.pattern.permute.xlu0 0
  %2023 = vperm.xlu0 %2022, %v1164
  %v2024 = vpop.permute.xlu0 %2023
  %2027 = vset.pattern.permute.xlu0 0
  %2028 = vperm.xlu0 %2027, %v1166
  %v2029 = vpop.permute.xlu0 %2028
  %2032 = vset.pattern.permute.xlu0 0
  %2033 = vperm.xlu0 %2032, %v1168
  %v2034 = vpop.permute.xlu0 %2033
  %2037 = vset.pattern.permute.xlu0 0
  %2038 = vperm.xlu0 %2037, %v1170
  %v2039 = vpop.permute.xlu0 %2038
  %2042 = vset.pattern.permute.xlu0 0
  %2043 = vperm.xlu0 %2042, %v1172
  %v2044 = vpop.permute.xlu0 %2043
  %2047 = vset.pattern.permute.xlu0 0
  %2048 = vperm.xlu0 %2047, %v1174
  %v2049 = vpop.permute.xlu0 %2048
  %2052 = vset.pattern.permute.xlu0 0
  %2053 = vperm.xlu0 %2052, %v1176
  %v2054 = vpop.permute.xlu0 %2053
  %2057 = vset.pattern.permute.xlu0 0
  %2058 = vperm.xlu0 %2057, %v1178
  %v2059 = vpop.permute.xlu0 %2058
  %2062 = vset.pattern.permute.xlu0 0
  %2063 = vperm.xlu0 %2062, %v1180
  %v2064 = vpop.permute.xlu0 %2063
  %2067 = vset.pattern.permute.xlu0 0
  %2068 = vperm.xlu0 %2067, %v1182
  %v2069 = vpop.permute.xlu0 %2068
  %2072 = vset.pattern.permute.xlu0 0
  %2073 = vperm.xlu0 %2072, %v1184
  %v2074 = vpop.permute.xlu0 %2073
  %2077 = vset.pattern.permute.xlu0 0
  %2078 = vperm.xlu0 %2077, %v1186
  %v2079 = vpop.permute.xlu0 %2078
  %2082 = vset.pattern.permute.xlu0 0
  %2083 = vperm.xlu0 %2082, %v1188
  %v2084 = vpop.permute.xlu0 %2083
  %2087 = vset.pattern.permute.xlu0 0
  %2088 = vperm.xlu0 %2087, %v1190
  %v2089 = vpop.permute.xlu0 %2088
  %2092 = vset.pattern.permute.xlu0 0
  %2093 = vperm.xlu0 %2092, %v1192
  %v2094 = vpop.permute.xlu0 %2093
  %2097 = vset.pattern.permute.xlu0 0
  %2098 = vperm.xlu0 %2097, %v1194
  %v2099 = vpop.permute.xlu0 %2098
  %2102 = vset.pattern.permute.xlu0 0
  %2103 = vperm.xlu0 %2102, %v1196
  %v2104 = vpop.permute.xlu0 %2103
  %2107 = vset.pattern.permute.xlu0 0
  %2108 = vperm.xlu0 %2107, %v1198
  %v2109 = vpop.permute.xlu0 %2108
  %2112 = vset.pattern.permute.xlu0 0
  %2113 = vperm.xlu0 %2112, %v1200
  %v2114 = vpop.permute.xlu0 %2113
  %2117 = vset.pattern.permute.xlu0 0
  %2118 = vperm.xlu0 %2117, %v1202
  %v2119 = vpop.permute.xlu0 %2118
  %2122 = vset.pattern.permute.xlu0 0
  %2123 = vperm.xlu0 %2122, %v1204
  %v2124 = vpop.permute.xlu0 %2123
  %2127 = vset.pattern.permute.xlu0 0
  %2128 = vperm.xlu0 %2127, %v1206
  %v2129 = vpop.permute.xlu0 %2128
  %2132 = vset.pattern.permute.xlu0 0
  %2133 = vperm.xlu0 %2132, %v1208
  %v2134 = vpop.permute.xlu0 %2133
  %2137 = vset.pattern.permute.xlu0 0
  %2138 = vperm.xlu0 %2137, %v1210
  %v2139 = vpop.permute.xlu0 %2138
  %2142 = vset.pattern.permute.xlu0 0
  %2143 = vperm.xlu0 %2142, %v1212
  %v2144 = vpop.permute.xlu0 %2143
  %2147 = vset.pattern.permute.xlu0 0
  %2148 = vperm.xlu0 %2147, %v1214
  %v2149 = vpop.permute.xlu0 %2148
  %2152 = vset.pattern.permute.xlu0 0
  %2153 = vperm.xlu0 %2152, %v1216
  %v2154 = vpop.permute.xlu0 %2153
  %2157 = vset.pattern.permute.xlu0 0
  %2158 = vperm.xlu0 %2157, %v1218
  %v2159 = vpop.permute.xlu0 %2158
  %2162 = vset.pattern.permute.xlu0 0
  %2163 = vperm.xlu0 %2162, %v1220
  %v2164 = vpop.permute.xlu0 %2163
  %2167 = vset.pattern.permute.xlu0 0
  %2168 = vperm.xlu0 %2167, %v1222
  %v2169 = vpop.permute.xlu0 %2168
  %2172 = vset.pattern.permute.xlu0 0
  %2173 = vperm.xlu0 %2172, %v1224
  %v2174 = vpop.permute.xlu0 %2173
  %2177 = vset.pattern.permute.xlu0 0
  %2178 = vperm.xlu0 %2177, %v1226
  %v2179 = vpop.permute.xlu0 %2178
  %2182 = vset.pattern.permute.xlu0 0
  %2183 = vperm.xlu0 %2182, %v1228
  %v2184 = vpop.permute.xlu0 %2183
  %2187 = vset.pattern.permute.xlu0 0
  %2188 = vperm.xlu0 %2187, %v1230
  %v2189 = vpop.permute.xlu0 %2188
  %2192 = vset.pattern.permute.xlu0 0
  %2193 = vperm.xlu0 %2192, %v1232
  %v2194 = vpop.permute.xlu0 %2193
  %2197 = vset.pattern.permute.xlu0 0
  %2198 = vperm.xlu0 %2197, %v1234
  %v2199 = vpop.permute.xlu0 %2198
  %2202 = vset.pattern.permute.xlu0 0
  %2203 = vperm.xlu0 %2202, %v1236
  %v2204 = vpop.permute.xlu0 %2203
  %2207 = vset.pattern.permute.xlu0 0
  %2208 = vperm.xlu0 %2207, %v1238
  %v2209 = vpop.permute.xlu0 %2208
  %2212 = vset.pattern.permute.xlu0 0
  %2213 = vperm.xlu0 %2212, %v1240
  %v2214 = vpop.permute.xlu0 %2213
  %2217 = vset.pattern.permute.xlu0 0
  %2218 = vperm.xlu0 %2217, %v1242
  %v2219 = vpop.permute.xlu0 %2218
  %2222 = vset.pattern.permute.xlu0 0
  %2223 = vperm.xlu0 %2222, %v1244
  %v2224 = vpop.permute.xlu0 %2223
  %2227 = vset.pattern.permute.xlu0 0
  %2228 = vperm.xlu0 %2227, %v1246
  %v2229 = vpop.permute.xlu0 %2228
  %2232 = vset.pattern.permute.xlu0 0
  %2233 = vperm.xlu0 %2232, %v1248
  %v2234 = vpop.permute.xlu0 %2233
  %2237 = vset.pattern.permute.xlu0 0
  %2238 = vperm.xlu0 %2237, %v1250
  %v2239 = vpop.permute.xlu0 %2238
  %2242 = vset.pattern.permute.xlu0 0
  %2243 = vperm.xlu0 %2242, %v1252
  %v2244 = vpop.permute.xlu0 %2243
  %2247 = vset.pattern.permute.xlu0 0
  %2248 = vperm.xlu0 %2247, %v1254
  %v2249 = vpop.permute.xlu0 %2248
  %2252 = vset.pattern.permute.xlu0 0
  %2253 = vperm.xlu0 %2252, %v1256
  %v2254 = vpop.permute.xlu0 %2253
  %2257 = vset.pattern.permute.xlu0 0
  %2258 = vperm.xlu0 %2257, %v1258
  %v2259 = vpop.permute.xlu0 %2258
  %2262 = vset.pattern.permute.xlu0 0
  %2263 = vperm.xlu0 %2262, %v1260
  %v2264 = vpop.permute.xlu0 %2263
  %2267 = vset.pattern.permute.xlu0 0
  %2268 = vperm.xlu0 %2267, %v1262
  %v2269 = vpop.permute.xlu0 %2268
  %2272 = vset.pattern.permute.xlu0 0
  %2273 = vperm.xlu0 %2272, %v1264
  %v2274 = vpop.permute.xlu0 %2273
  %2277 = vset.pattern.permute.xlu0 0
  %2278 = vperm.xlu0 %2277, %v1266
  %v2279 = vpop.permute.xlu0 %2278
  %2282 = vset.pattern.permute.xlu0 0
  %2283 = vperm.xlu0 %2282, %v1268
  %v2284 = vpop.permute.xlu0 %2283
  %2287 = vset.pattern.permute.xlu0 0
  %2288 = vperm.xlu0 %2287, %v1270
  %v2289 = vpop.permute.xlu0 %2288
  %2292 = vset.pattern.permute.xlu0 0
  %2293 = vperm.xlu0 %2292, %v1272
  %v2294 = vpop.permute.xlu0 %2293
  %2297 = vset.pattern.permute.xlu0 0
  %2298 = vperm.xlu0 %2297, %v1274
  %v2299 = vpop.permute.xlu0 %2298
  %2302 = vset.pattern.permute.xlu0 0
  %2303 = vperm.xlu0 %2302, %v1276
  %v2304 = vpop.permute.xlu0 %2303
  %2307 = vset.pattern.permute.xlu0 0
  %2308 = vperm.xlu0 %2307, %v1278
  %v2309 = vpop.permute.xlu0 %2308
  %2312 = vset.pattern.permute.xlu0 0
  %2313 = vperm.xlu0 %2312, %v1280
  %v2314 = vpop.permute.xlu0 %2313
  %2317 = vset.pattern.permute.xlu0 0
  %2318 = vperm.xlu0 %2317, %v1282
  %v2319 = vpop.permute.xlu0 %2318
  %2322 = vset.pattern.permute.xlu0 0
  %2323 = vperm.xlu0 %2322, %v1284
  %v2324 = vpop.permute.xlu0 %2323
  %2327 = vset.pattern.permute.xlu0 0
  %2328 = vperm.xlu0 %2327, %v1286
  %v2329 = vpop.permute.xlu0 %2328
  %2332 = vset.pattern.permute.xlu0 0
  %2333 = vperm.xlu0 %2332, %v1288
  %v2334 = vpop.permute.xlu0 %2333
  %2337 = vset.pattern.permute.xlu0 0
  %2338 = vperm.xlu0 %2337, %v1290
  %v2339 = vpop.permute.xlu0 %2338
  %2342 = vset.pattern.permute.xlu0 0
  %2343 = vperm.xlu0 %2342, %v1292
  %v2344 = vpop.permute.xlu0 %2343
  %2347 = vset.pattern.permute.xlu0 0
  %2348 = vperm.xlu0 %2347, %v1294
  %v2349 = vpop.permute.xlu0 %2348
  %2352 = vset.pattern.permute.xlu0 0
  %2353 = vperm.xlu0 %2352, %v1296
  %v2354 = vpop.permute.xlu0 %2353
  %2357 = vset.pattern.permute.xlu0 0
  %2358 = vperm.xlu0 %2357, %v1298
  %v2359 = vpop.permute.xlu0 %2358
  %2362 = vset.pattern.permute.xlu0 0
  %2363 = vperm.xlu0 %2362, %v1300
  %v2364 = vpop.permute.xlu0 %2363
  %2367 = vset.pattern.permute.xlu0 0
  %2368 = vperm.xlu0 %2367, %v1302
  %v2369 = vpop.permute.xlu0 %2368
  %2372 = vset.pattern.permute.xlu0 0
  %2373 = vperm.xlu0 %2372, %v1304
  %v2374 = vpop.permute.xlu0 %2373
  %2377 = vset.pattern.permute.xlu0 0
  %2378 = vperm.xlu0 %2377, %v1306
  %v2379 = vpop.permute.xlu0 %2378
  %2382 = vset.pattern.permute.xlu0 0
  %2383 = vperm.xlu0 %2382, %v1308
  %v2384 = vpop.permute.xlu0 %2383
  %2387 = vset.pattern.permute.xlu0 0
  %2388 = vperm.xlu0 %2387, %v1310
  %v2389 = vpop.permute.xlu0 %2388
  %2392 = vset.pattern.permute.xlu0 0
  %2393 = vperm.xlu0 %2392, %v1312
  %v2394 = vpop.permute.xlu0 %2393
  %2397 = vset.pattern.permute.xlu0 0
  %2398 = vperm.xlu0 %2397, %v1314
  %v2399 = vpop.permute.xlu0 %2398
  %2402 = vset.pattern.permute.xlu0 0
  %2403 = vperm.xlu0 %2402, %v1316
  %v2404 = vpop.permute.xlu0 %2403
  %2407 = vset.pattern.permute.xlu0 0
  %2408 = vperm.xlu0 %2407, %v1318
  %v2409 = vpop.permute.xlu0 %2408
  %2412 = vset.pattern.permute.xlu0 0
  %2413 = vperm.xlu0 %2412, %v1320
  %v2414 = vpop.permute.xlu0 %2413
  %2417 = vset.pattern.permute.xlu0 0
  %2418 = vperm.xlu0 %2417, %v1322
  %v2419 = vpop.permute.xlu0 %2418
  %2422 = vset.pattern.permute.xlu0 0
  %2423 = vperm.xlu0 %2422, %v1324
  %v2424 = vpop.permute.xlu0 %2423
  %2427 = vset.pattern.permute.xlu0 0
  %2428 = vperm.xlu0 %2427, %v1326
  %v2429 = vpop.permute.xlu0 %2428
  %2432 = vset.pattern.permute.xlu0 0
  %2433 = vperm.xlu0 %2432, %v1328
  %v2434 = vpop.permute.xlu0 %2433
  %2437 = vset.pattern.permute.xlu0 0
  %2438 = vperm.xlu0 %2437, %v1330
  %v2439 = vpop.permute.xlu0 %2438
  %2442 = vset.pattern.permute.xlu0 0
  %2443 = vperm.xlu0 %2442, %v1332
  %v2444 = vpop.permute.xlu0 %2443
  %2447 = vset.pattern.permute.xlu0 0
  %2448 = vperm.xlu0 %2447, %v1334
  %v2449 = vpop.permute.xlu0 %2448
  %2452 = vset.pattern.permute.xlu0 0
  %2453 = vperm.xlu0 %2452, %v1336
  %v2454 = vpop.permute.xlu0 %2453
  %2457 = vset.pattern.permute.xlu0 0
  %2458 = vperm.xlu0 %2457, %v1338
  %v2459 = vpop.permute.xlu0 %2458
  %2462 = vset.pattern.permute.xlu0 0
  %2463 = vperm.xlu0 %2462, %v1340
  %v2464 = vpop.permute.xlu0 %2463
  %2467 = vset.pattern.permute.xlu0 0
  %2468 = vperm.xlu0 %2467, %v1342
  %v2469 = vpop.permute.xlu0 %2468
  %2472 = vset.pattern.permute.xlu0 0
  %2473 = vperm.xlu0 %2472, %v1344
  %v2474 = vpop.permute.xlu0 %2473
  %2477 = vset.pattern.permute.xlu0 0
  %2478 = vperm.xlu0 %2477, %v1346
  %v2479 = vpop.permute.xlu0 %2478
  %2482 = vset.pattern.permute.xlu0 0
  %2483 = vperm.xlu0 %2482, %v1348
  %v2484 = vpop.permute.xlu0 %2483
  %2487 = vset.pattern.permute.xlu0 0
  %2488 = vperm.xlu0 %2487, %v1350
  %v2489 = vpop.permute.xlu0 %2488
  %2492 = vset.pattern.permute.xlu0 0
  %2493 = vperm.xlu0 %2492, %v1352
  %v2494 = vpop.permute.xlu0 %2493
  %2497 = vset.pattern.permute.xlu0 0
  %2498 = vperm.xlu0 %2497, %v1354
  %v2499 = vpop.permute.xlu0 %2498
  %2502 = vset.pattern.permute.xlu0 0
  %2503 = vperm.xlu0 %2502, %v1356
  %v2504 = vpop.permute.xlu0 %2503
  %2507 = vset.pattern.permute.xlu0 0
  %2508 = vperm.xlu0 %2507, %v1358
  %v2509 = vpop.permute.xlu0 %2508
  %v2511 = vmul.f32 %v1359, %v1554
  %v2512 = vmul.f32 %v1360, %v1559
  %v2513 = vmul.f32 %v1361, %v1564
  %v2514 = vmul.f32 %v1362, %v1569
  %v2515 = vmul.f32 %v1363, %v1574
  %v2516 = vmul.f32 %v1364, %v1579
  %v2517 = vmul.f32 %v1365, %v1584
  %v2518 = vmul.f32 %v1366, %v1589
  %v2519 = vmul.f32 %v1367, %v1594
  %v2520 = vmul.f32 %v1368, %v1599
  %v2521 = vmul.f32 %v1369, %v1604
  %v2522 = vmul.f32 %v1370, %v1609
  %v2523 = vmul.f32 %v1371, %v1614
  %v2524 = vmul.f32 %v1372, %v1619
  %v2525 = vmul.f32 %v1373, %v1624
  %v2526 = vmul.f32 %v1374, %v1629
  %v2527 = vmul.f32 %v1375, %v1634
  %v2528 = vmul.f32 %v1376, %v1639
  %v2529 = vmul.f32 %v1377, %v1644
  %v2530 = vmul.f32 %v1378, %v1649
  %v2531 = vmul.f32 %v1379, %v1654
  %v2532 = vmul.f32 %v1380, %v1659
  %v2533 = vmul.f32 %v1381, %v1664
  %v2534 = vmul.f32 %v1382, %v1669
  %v2535 = vmul.f32 %v1383, %v1674
  %v2536 = vmul.f32 %v1384, %v1679
  %v2537 = vmul.f32 %v1385, %v1684
  %v2538 = vmul.f32 %v1386, %v1689
  %v2539 = vmul.f32 %v1387, %v1694
  %v2540 = vmul.f32 %v1388, %v1699
  %v2541 = vmul.f32 %v1389, %v1704
  %v2542 = vmul.f32 %v1390, %v1709
  %v2543 = vmul.f32 %v1391, %v1714
  %v2544 = vmul.f32 %v1392, %v1719
  %v2545 = vmul.f32 %v1393, %v1724
  %v2546 = vmul.f32 %v1394, %v1729
  %v2547 = vmul.f32 %v1395, %v1734
  %v2548 = vmul.f32 %v1396, %v1739
  %v2549 = vmul.f32 %v1397, %v1744
  %v2550 = vmul.f32 %v1398, %v1749
  %v2551 = vmul.f32 %v1399, %v1754
  %v2552 = vmul.f32 %v1400, %v1759
  %v2553 = vmul.f32 %v1401, %v1764
  %v2554 = vmul.f32 %v1402, %v1769
  %v2555 = vmul.f32 %v1403, %v1774
  %v2556 = vmul.f32 %v1404, %v1779
  %v2557 = vmul.f32 %v1405, %v1784
  %v2558 = vmul.f32 %v1406, %v1789
  %v2559 = vmul.f32 %v1407, %v1794
  %v2560 = vmul.f32 %v1408, %v1799
  %v2561 = vmul.f32 %v1409, %v1804
  %v2562 = vmul.f32 %v1410, %v1809
  %v2563 = vmul.f32 %v1411, %v1814
  %v2564 = vmul.f32 %v1412, %v1819
  %v2565 = vmul.f32 %v1413, %v1824
  %v2566 = vmul.f32 %v1414, %v1829
  %v2567 = vmul.f32 %v1415, %v1834
  %v2568 = vmul.f32 %v1416, %v1839
  %v2569 = vmul.f32 %v1417, %v1844
  %v2570 = vmul.f32 %v1418, %v1849
  %v2571 = vmul.f32 %v1419, %v1854
  %v2572 = vmul.f32 %v1420, %v1859
  %v2573 = vmul.f32 %v1421, %v1864
  %v2574 = vmul.f32 %v1422, %v1869
  %v2575 = vmul.f32 %v1423, %v1874
  %v2576 = vmul.f32 %v1424, %v1879
  %v2577 = vmul.f32 %v1425, %v1884
  %v2578 = vmul.f32 %v1426, %v1889
  %v2579 = vmul.f32 %v1427, %v1894
  %v2580 = vmul.f32 %v1428, %v1899
  %v2581 = vmul.f32 %v1429, %v1904
  %v2582 = vmul.f32 %v1430, %v1909
  %v2583 = vmul.f32 %v1431, %v1914
  %v2584 = vmul.f32 %v1432, %v1919
  %v2585 = vmul.f32 %v1433, %v1924
  %v2586 = vmul.f32 %v1434, %v1929
  %v2587 = vmul.f32 %v1435, %v1934
  %v2588 = vmul.f32 %v1436, %v1939
  %v2589 = vmul.f32 %v1437, %v1944
  %v2590 = vmul.f32 %v1438, %v1949
  %v2591 = vmul.f32 %v1439, %v1954
  %v2592 = vmul.f32 %v1440, %v1959
  %v2593 = vmul.f32 %v1441, %v1964
  %v2594 = vmul.f32 %v1442, %v1969
  %v2595 = vmul.f32 %v1443, %v1974
  %v2596 = vmul.f32 %v1444, %v1979
  %v2597 = vmul.f32 %v1445, %v1984
  %v2598 = vmul.f32 %v1446, %v1989
  %v2599 = vmul.f32 %v1447, %v1994
  %v2600 = vmul.f32 %v1448, %v1999
  %v2601 = vmul.f32 %v1449, %v2004
  %v2602 = vmul.f32 %v1450, %v2009
  %v2603 = vmul.f32 %v1451, %v2014
  %v2604 = vmul.f32 %v1452, %v2019
  %v2605 = vmul.f32 %v1453, %v2024
  %v2606 = vmul.f32 %v1454, %v2029
  %v2607 = vmul.f32 %v1455, %v2034
  %v2608 = vmul.f32 %v1456, %v2039
  %v2609 = vmul.f32 %v1457, %v2044
  %v2610 = vmul.f32 %v1458, %v2049
  %v2611 = vmul.f32 %v1459, %v2054
  %v2612 = vmul.f32 %v1460, %v2059
  %v2613 = vmul.f32 %v1461, %v2064
  %v2614 = vmul.f32 %v1462, %v2069
  %v2615 = vmul.f32 %v1463, %v2074
  %v2616 = vmul.f32 %v1464, %v2079
  %v2617 = vmul.f32 %v1465, %v2084
  %v2618 = vmul.f32 %v1466, %v2089
  %v2619 = vmul.f32 %v1467, %v2094
  %v2620 = vmul.f32 %v1468, %v2099
  %v2621 = vmul.f32 %v1469, %v2104
  %v2622 = vmul.f32 %v1470, %v2109
  %v2623 = vmul.f32 %v1471, %v2114
  %v2624 = vmul.f32 %v1472, %v2119
  %v2625 = vmul.f32 %v1473, %v2124
  %v2626 = vmul.f32 %v1474, %v2129
  %v2627 = vmul.f32 %v1475, %v2134
  %v2628 = vmul.f32 %v1476, %v2139
  %v2629 = vmul.f32 %v1477, %v2144
  %v2630 = vmul.f32 %v1478, %v2149
  %v2631 = vmul.f32 %v1479, %v2154
  %v2632 = vmul.f32 %v1480, %v2159
  %v2633 = vmul.f32 %v1481, %v2164
  %v2634 = vmul.f32 %v1482, %v2169
  %v2635 = vmul.f32 %v1483, %v2174
  %v2636 = vmul.f32 %v1484, %v2179
  %v2637 = vmul.f32 %v1485, %v2184
  %v2638 = vmul.f32 %v1486, %v2189
  %v2639 = vmul.f32 %v1487, %v2194
  %v2640 = vmul.f32 %v1488, %v2199
  %v2641 = vmul.f32 %v1489, %v2204
  %v2642 = vmul.f32 %v1490, %v2209
  %v2643 = vmul.f32 %v1491, %v2214
  %v2644 = vmul.f32 %v1492, %v2219
  %v2645 = vmul.f32 %v1493, %v2224
  %v2646 = vmul.f32 %v1494, %v2229
  %v2647 = vmul.f32 %v1495, %v2234
  %v2648 = vmul.f32 %v1496, %v2239
  %v2649 = vmul.f32 %v1497, %v2244
  %v2650 = vmul.f32 %v1498, %v2249
  %v2651 = vmul.f32 %v1499, %v2254
  %v2652 = vmul.f32 %v1500, %v2259
  %v2653 = vmul.f32 %v1501, %v2264
  %v2654 = vmul.f32 %v1502, %v2269
  %v2655 = vmul.f32 %v1503, %v2274
  %v2656 = vmul.f32 %v1504, %v2279
  %v2657 = vmul.f32 %v1505, %v2284
  %v2658 = vmul.f32 %v1506, %v2289
  %v2659 = vmul.f32 %v1507, %v2294
  %v2660 = vmul.f32 %v1508, %v2299
  %v2661 = vmul.f32 %v1509, %v2304
  %v2662 = vmul.f32 %v1510, %v2309
  %v2663 = vmul.f32 %v1511, %v2314
  %v2664 = vmul.f32 %v1512, %v2319
  %v2665 = vmul.f32 %v1513, %v2324
  %v2666 = vmul.f32 %v1514, %v2329
  %v2667 = vmul.f32 %v1515, %v2334
  %v2668 = vmul.f32 %v1516, %v2339
  %v2669 = vmul.f32 %v1517, %v2344
  %v2670 = vmul.f32 %v1518, %v2349
  %v2671 = vmul.f32 %v1519, %v2354
  %v2672 = vmul.f32 %v1520, %v2359
  %v2673 = vmul.f32 %v1521, %v2364
  %v2674 = vmul.f32 %v1522, %v2369
  %v2675 = vmul.f32 %v1523, %v2374
  %v2676 = vmul.f32 %v1524, %v2379
  %v2677 = vmul.f32 %v1525, %v2384
  %v2678 = vmul.f32 %v1526, %v2389
  %v2679 = vmul.f32 %v1527, %v2394
  %v2680 = vmul.f32 %v1528, %v2399
  %v2681 = vmul.f32 %v1529, %v2404
  %v2682 = vmul.f32 %v1530, %v2409
  %v2683 = vmul.f32 %v1531, %v2414
  %v2684 = vmul.f32 %v1532, %v2419
  %v2685 = vmul.f32 %v1533, %v2424
  %v2686 = vmul.f32 %v1534, %v2429
  %v2687 = vmul.f32 %v1535, %v2434
  %v2688 = vmul.f32 %v1536, %v2439
  %v2689 = vmul.f32 %v1537, %v2444
  %v2690 = vmul.f32 %v1538, %v2449
  %v2691 = vmul.f32 %v1539, %v2454
  %v2692 = vmul.f32 %v1540, %v2459
  %v2693 = vmul.f32 %v1541, %v2464
  %v2694 = vmul.f32 %v1542, %v2469
  %v2695 = vmul.f32 %v1543, %v2474
  %v2696 = vmul.f32 %v1544, %v2479
  %v2697 = vmul.f32 %v1545, %v2484
  %v2698 = vmul.f32 %v1546, %v2489
  %v2699 = vmul.f32 %v1547, %v2494
  %v2700 = vmul.f32 %v1548, %v2499
  %v2701 = vmul.f32 %v1549, %v2504
  %v2702 = vmul.f32 %v1550, %v2509
  %v2703 = vpack.c.bf16 %v2512, %v2511
  %v2704 = vpack.c.bf16 %v2514, %v2513
  %v2705 = vpack.c.bf16 %v2516, %v2515
  %v2706 = vpack.c.bf16 %v2518, %v2517
  %v2707 = vpack.c.bf16 %v2520, %v2519
  %v2708 = vpack.c.bf16 %v2522, %v2521
  %v2709 = vpack.c.bf16 %v2524, %v2523
  %v2710 = vpack.c.bf16 %v2526, %v2525
  %v2711 = vpack.c.bf16 %v2528, %v2527
  %v2712 = vpack.c.bf16 %v2530, %v2529
  %v2713 = vpack.c.bf16 %v2532, %v2531
  %v2714 = vpack.c.bf16 %v2534, %v2533
  %v2715 = vpack.c.bf16 %v2536, %v2535
  %v2716 = vpack.c.bf16 %v2538, %v2537
  %v2717 = vpack.c.bf16 %v2540, %v2539
  %v2718 = vpack.c.bf16 %v2542, %v2541
  %v2719 = vpack.c.bf16 %v2544, %v2543
  %v2720 = vpack.c.bf16 %v2546, %v2545
  %v2721 = vpack.c.bf16 %v2548, %v2547
  %v2722 = vpack.c.bf16 %v2550, %v2549
  %v2723 = vpack.c.bf16 %v2552, %v2551
  %v2724 = vpack.c.bf16 %v2554, %v2553
  %v2725 = vpack.c.bf16 %v2556, %v2555
  %v2726 = vpack.c.bf16 %v2558, %v2557
  %v2727 = vpack.c.bf16 %v2560, %v2559
  %v2728 = vpack.c.bf16 %v2562, %v2561
  %v2729 = vpack.c.bf16 %v2564, %v2563
  %v2730 = vpack.c.bf16 %v2566, %v2565
  %v2731 = vpack.c.bf16 %v2568, %v2567
  %v2732 = vpack.c.bf16 %v2570, %v2569
  %v2733 = vpack.c.bf16 %v2572, %v2571
  %v2734 = vpack.c.bf16 %v2574, %v2573
  %v2735 = vpack.c.bf16 %v2576, %v2575
  %v2736 = vpack.c.bf16 %v2578, %v2577
  %v2737 = vpack.c.bf16 %v2580, %v2579
  %v2738 = vpack.c.bf16 %v2582, %v2581
  %v2739 = vpack.c.bf16 %v2584, %v2583
  %v2740 = vpack.c.bf16 %v2586, %v2585
  %v2741 = vpack.c.bf16 %v2588, %v2587
  %v2742 = vpack.c.bf16 %v2590, %v2589
  %v2743 = vpack.c.bf16 %v2592, %v2591
  %v2744 = vpack.c.bf16 %v2594, %v2593
  %v2745 = vpack.c.bf16 %v2596, %v2595
  %v2746 = vpack.c.bf16 %v2598, %v2597
  %v2747 = vpack.c.bf16 %v2600, %v2599
  %v2748 = vpack.c.bf16 %v2602, %v2601
  %v2749 = vpack.c.bf16 %v2604, %v2603
  %v2750 = vpack.c.bf16 %v2606, %v2605
  %v2751 = vpack.c.bf16 %v2608, %v2607
  %v2752 = vpack.c.bf16 %v2610, %v2609
  %v2753 = vpack.c.bf16 %v2612, %v2611
  %v2754 = vpack.c.bf16 %v2614, %v2613
  %v2755 = vpack.c.bf16 %v2616, %v2615
  %v2756 = vpack.c.bf16 %v2618, %v2617
  %v2757 = vpack.c.bf16 %v2620, %v2619
  %v2758 = vpack.c.bf16 %v2622, %v2621
  %v2759 = vpack.c.bf16 %v2624, %v2623
  %v2760 = vpack.c.bf16 %v2626, %v2625
  %v2761 = vpack.c.bf16 %v2628, %v2627
  %v2762 = vpack.c.bf16 %v2630, %v2629
  %v2763 = vpack.c.bf16 %v2632, %v2631
  %v2764 = vpack.c.bf16 %v2634, %v2633
  %v2765 = vpack.c.bf16 %v2636, %v2635
  %v2766 = vpack.c.bf16 %v2638, %v2637
  %v2767 = vpack.c.bf16 %v2640, %v2639
  %v2768 = vpack.c.bf16 %v2642, %v2641
  %v2769 = vpack.c.bf16 %v2644, %v2643
  %v2770 = vpack.c.bf16 %v2646, %v2645
  %v2771 = vpack.c.bf16 %v2648, %v2647
  %v2772 = vpack.c.bf16 %v2650, %v2649
  %v2773 = vpack.c.bf16 %v2652, %v2651
  %v2774 = vpack.c.bf16 %v2654, %v2653
  %v2775 = vpack.c.bf16 %v2656, %v2655
  %v2776 = vpack.c.bf16 %v2658, %v2657
  %v2777 = vpack.c.bf16 %v2660, %v2659
  %v2778 = vpack.c.bf16 %v2662, %v2661
  %v2779 = vpack.c.bf16 %v2664, %v2663
  %v2780 = vpack.c.bf16 %v2666, %v2665
  %v2781 = vpack.c.bf16 %v2668, %v2667
  %v2782 = vpack.c.bf16 %v2670, %v2669
  %v2783 = vpack.c.bf16 %v2672, %v2671
  %v2784 = vpack.c.bf16 %v2674, %v2673
  %v2785 = vpack.c.bf16 %v2676, %v2675
  %v2786 = vpack.c.bf16 %v2678, %v2677
  %v2787 = vpack.c.bf16 %v2680, %v2679
  %v2788 = vpack.c.bf16 %v2682, %v2681
  %v2789 = vpack.c.bf16 %v2684, %v2683
  %v2790 = vpack.c.bf16 %v2686, %v2685
  %v2791 = vpack.c.bf16 %v2688, %v2687
  %v2792 = vpack.c.bf16 %v2690, %v2689
  %v2793 = vpack.c.bf16 %v2692, %v2691
  %v2794 = vpack.c.bf16 %v2694, %v2693
  %v2795 = vpack.c.bf16 %v2696, %v2695
  %v2796 = vpack.c.bf16 %v2698, %v2697
  %v2797 = vpack.c.bf16 %v2700, %v2699
  %v2798 = vpack.c.bf16 %v2702, %v2701
  %v2799 = vld [vmem:[%s1] sm:$0xff]
  %v2800 = vld [vmem:[%s1 + $0x8] sm:$0xff]
  %v2801 = vld [vmem:[%s1 + $0x10] sm:$0xff]
  %v2802 = vld [vmem:[%s1 + $0x18] sm:$0xff]
  %v2803 = vld [vmem:[%s1 + $0x20] sm:$0xff]
  %v2804 = vld [vmem:[%s1 + $0x28] sm:$0xff]
  %v2805 = vld [vmem:[%s1 + $0x30] sm:$0xff]
  %v2806 = vld [vmem:[%s1 + $0x38] sm:$0xff]
  %v2807 = vld [vmem:[%s1 + $0x40] sm:$0xff]
  %v2808 = vld [vmem:[%s1 + $0x48] sm:$0xff]
  %v2809 = vld [vmem:[%s1 + $0x50] sm:$0xff]
  %v2810 = vld [vmem:[%s1 + $0x58] sm:$0xff]
  %v2811 = vld [vmem:[%s1 + $0x60] sm:$0xff]
  %v2812 = vld [vmem:[%s1 + $0x68] sm:$0xff]
  %v2813 = vld [vmem:[%s1 + $0x70] sm:$0xff]
  %v2814 = vld [vmem:[%s1 + $0x78] sm:$0xff]
  %v2815 = vld [vmem:[%s1 + $0x80] sm:$0xff]
  %v2816 = vld [vmem:[%s1 + $0x88] sm:$0xff]
  %v2817 = vld [vmem:[%s1 + $0x90] sm:$0xff]
  %v2818 = vld [vmem:[%s1 + $0x98] sm:$0xff]
  %v2819 = vld [vmem:[%s1 + $0xa0] sm:$0xff]
  %v2820 = vld [vmem:[%s1 + $0xa8] sm:$0xff]
  %v2821 = vld [vmem:[%s1 + $0xb0] sm:$0xff]
  %v2822 = vld [vmem:[%s1 + $0xb8] sm:$0xff]
  %v2823 = vld [vmem:[%s1 + $0xc0] sm:$0xff]
  %v2824 = vld [vmem:[%s1 + $0xc8] sm:$0xff]
  %v2825 = vld [vmem:[%s1 + $0xd0] sm:$0xff]
  %v2826 = vld [vmem:[%s1 + $0xd8] sm:$0xff]
  %v2827 = vld [vmem:[%s1 + $0xe0] sm:$0xff]
  %v2828 = vld [vmem:[%s1 + $0xe8] sm:$0xff]
  %v2829 = vld [vmem:[%s1 + $0xf0] sm:$0xff]
  %v2830 = vld [vmem:[%s1 + $0xf8] sm:$0xff]
  %v2831 = vld [vmem:[%s1 + $0x100] sm:$0xff]
  %v2832 = vld [vmem:[%s1 + $0x108] sm:$0xff]
  %v2833 = vld [vmem:[%s1 + $0x110] sm:$0xff]
  %v2834 = vld [vmem:[%s1 + $0x118] sm:$0xff]
  %v2835 = vld [vmem:[%s1 + $0x120] sm:$0xff]
  %v2836 = vld [vmem:[%s1 + $0x128] sm:$0xff]
  %v2837 = vld [vmem:[%s1 + $0x130] sm:$0xff]
  %v2838 = vld [vmem:[%s1 + $0x138] sm:$0xff]
  %v2839 = vld [vmem:[%s1 + $0x140] sm:$0xff]
  %v2840 = vld [vmem:[%s1 + $0x148] sm:$0xff]
  %v2841 = vld [vmem:[%s1 + $0x150] sm:$0xff]
  %v2842 = vld [vmem:[%s1 + $0x158] sm:$0xff]
  %v2843 = vld [vmem:[%s1 + $0x160] sm:$0xff]
  %v2844 = vld [vmem:[%s1 + $0x168] sm:$0xff]
  %v2845 = vld [vmem:[%s1 + $0x170] sm:$0xff]
  %v2846 = vld [vmem:[%s1 + $0x178] sm:$0xff]
  %v2847 = vld [vmem:[%s1 + $0x180] sm:$0xff]
  %v2848 = vld [vmem:[%s1 + $0x188] sm:$0xff]
  %v2849 = vld [vmem:[%s1 + $0x190] sm:$0xff]
  %v2850 = vld [vmem:[%s1 + $0x198] sm:$0xff]
  %v2851 = vld [vmem:[%s1 + $0x1a0] sm:$0xff]
  %v2852 = vld [vmem:[%s1 + $0x1a8] sm:$0xff]
  %v2853 = vld [vmem:[%s1 + $0x1b0] sm:$0xff]
  %v2854 = vld [vmem:[%s1 + $0x1b8] sm:$0xff]
  %v2855 = vld [vmem:[%s1 + $0x1c0] sm:$0xff]
  %v2856 = vld [vmem:[%s1 + $0x1c8] sm:$0xff]
  %v2857 = vld [vmem:[%s1 + $0x1d0] sm:$0xff]
  %v2858 = vld [vmem:[%s1 + $0x1d8] sm:$0xff]
  %v2859 = vld [vmem:[%s1 + $0x1e0] sm:$0xff]
  %v2860 = vld [vmem:[%s1 + $0x1e8] sm:$0xff]
  %v2861 = vld [vmem:[%s1 + $0x1f0] sm:$0xff]
  %v2862 = vld [vmem:[%s1 + $0x1f8] sm:$0xff]
  %v2863 = vld [vmem:[%s1 + $0x200] sm:$0xff]
  %v2864 = vld [vmem:[%s1 + $0x208] sm:$0xff]
  %v2865 = vld [vmem:[%s1 + $0x210] sm:$0xff]
  %v2866 = vld [vmem:[%s1 + $0x218] sm:$0xff]
  %v2867 = vld [vmem:[%s1 + $0x220] sm:$0xff]
  %v2868 = vld [vmem:[%s1 + $0x228] sm:$0xff]
  %v2869 = vld [vmem:[%s1 + $0x230] sm:$0xff]
  %v2870 = vld [vmem:[%s1 + $0x238] sm:$0xff]
  %v2871 = vld [vmem:[%s1 + $0x240] sm:$0xff]
  %v2872 = vld [vmem:[%s1 + $0x248] sm:$0xff]
  %v2873 = vld [vmem:[%s1 + $0x250] sm:$0xff]
  %v2874 = vld [vmem:[%s1 + $0x258] sm:$0xff]
  %v2875 = vld [vmem:[%s1 + $0x260] sm:$0xff]
  %v2876 = vld [vmem:[%s1 + $0x268] sm:$0xff]
  %v2877 = vld [vmem:[%s1 + $0x270] sm:$0xff]
  %v2878 = vld [vmem:[%s1 + $0x278] sm:$0xff]
  %v2879 = vld [vmem:[%s1 + $0x280] sm:$0xff]
  %v2880 = vld [vmem:[%s1 + $0x288] sm:$0xff]
  %v2881 = vld [vmem:[%s1 + $0x290] sm:$0xff]
  %v2882 = vld [vmem:[%s1 + $0x298] sm:$0xff]
  %v2883 = vld [vmem:[%s1 + $0x2a0] sm:$0xff]
  %v2884 = vld [vmem:[%s1 + $0x2a8] sm:$0xff]
  %v2885 = vld [vmem:[%s1 + $0x2b0] sm:$0xff]
  %v2886 = vld [vmem:[%s1 + $0x2b8] sm:$0xff]
  %v2887 = vld [vmem:[%s1 + $0x2c0] sm:$0xff]
  %v2888 = vld [vmem:[%s1 + $0x2c8] sm:$0xff]
  %v2889 = vld [vmem:[%s1 + $0x2d0] sm:$0xff]
  %v2890 = vld [vmem:[%s1 + $0x2d8] sm:$0xff]
  %v2891 = vld [vmem:[%s1 + $0x2e0] sm:$0xff]
  %v2892 = vld [vmem:[%s1 + $0x2e8] sm:$0xff]
  %v2893 = vld [vmem:[%s1 + $0x2f0] sm:$0xff]
  %v2894 = vld [vmem:[%s1 + $0x2f8] sm:$0xff]
  %v2895 = vld [vmem:[%s1 + $0x300] sm:$0xff]
  %v2896 = vld [vmem:[%s1 + $0x308] sm:$0xff]
  %v2897 = vld [vmem:[%s1 + $0x310] sm:$0xff]
  %v2898 = vld [vmem:[%s1 + $0x318] sm:$0xff]
  %v2899 = vld [vmem:[%s1 + $0x320] sm:$0xff]
  %v2900 = vld [vmem:[%s1 + $0x328] sm:$0xff]
  %v2901 = vld [vmem:[%s1 + $0x330] sm:$0xff]
  %v2902 = vld [vmem:[%s1 + $0x338] sm:$0xff]
  %v2903 = vld [vmem:[%s1 + $0x340] sm:$0xff]
  %v2904 = vld [vmem:[%s1 + $0x348] sm:$0xff]
  %v2905 = vld [vmem:[%s1 + $0x350] sm:$0xff]
  %v2906 = vld [vmem:[%s1 + $0x358] sm:$0xff]
  %v2907 = vld [vmem:[%s1 + $0x360] sm:$0xff]
  %v2908 = vld [vmem:[%s1 + $0x368] sm:$0xff]
  %v2909 = vld [vmem:[%s1 + $0x370] sm:$0xff]
  %v2910 = vld [vmem:[%s1 + $0x378] sm:$0xff]
  %v2911 = vld [vmem:[%s1 + $0x380] sm:$0xff]
  %v2912 = vld [vmem:[%s1 + $0x388] sm:$0xff]
  %v2913 = vld [vmem:[%s1 + $0x390] sm:$0xff]
  %v2914 = vld [vmem:[%s1 + $0x398] sm:$0xff]
  %v2915 = vld [vmem:[%s1 + $0x3a0] sm:$0xff]
  %v2916 = vld [vmem:[%s1 + $0x3a8] sm:$0xff]
  %v2917 = vld [vmem:[%s1 + $0x3b0] sm:$0xff]
  %v2918 = vld [vmem:[%s1 + $0x3b8] sm:$0xff]
  %v2919 = vld [vmem:[%s1 + $0x3c0] sm:$0xff]
  %v2920 = vld [vmem:[%s1 + $0x3c8] sm:$0xff]
  %v2921 = vld [vmem:[%s1 + $0x3d0] sm:$0xff]
  %v2922 = vld [vmem:[%s1 + $0x3d8] sm:$0xff]
  %v2923 = vld [vmem:[%s1 + $0x3e0] sm:$0xff]
  %v2924 = vld [vmem:[%s1 + $0x3e8] sm:$0xff]
  %v2925 = vld [vmem:[%s1 + $0x3f0] sm:$0xff]
  %v2926 = vld [vmem:[%s1 + $0x3f8] sm:$0xff]
  %v2927 = vld [vmem:[%s1 + $0x400] sm:$0xff]
  %v2928 = vld [vmem:[%s1 + $0x408] sm:$0xff]
  %v2929 = vld [vmem:[%s1 + $0x410] sm:$0xff]
  %v2930 = vld [vmem:[%s1 + $0x418] sm:$0xff]
  %v2931 = vld [vmem:[%s1 + $0x420] sm:$0xff]
  %v2932 = vld [vmem:[%s1 + $0x428] sm:$0xff]
  %v2933 = vld [vmem:[%s1 + $0x430] sm:$0xff]
  %v2934 = vld [vmem:[%s1 + $0x438] sm:$0xff]
  %v2935 = vld [vmem:[%s1 + $0x440] sm:$0xff]
  %v2936 = vld [vmem:[%s1 + $0x448] sm:$0xff]
  %v2937 = vld [vmem:[%s1 + $0x450] sm:$0xff]
  %v2938 = vld [vmem:[%s1 + $0x458] sm:$0xff]
  %v2939 = vld [vmem:[%s1 + $0x460] sm:$0xff]
  %v2940 = vld [vmem:[%s1 + $0x468] sm:$0xff]
  %v2941 = vld [vmem:[%s1 + $0x470] sm:$0xff]
  %v2942 = vld [vmem:[%s1 + $0x478] sm:$0xff]
  %v2943 = vld [vmem:[%s1 + $0x480] sm:$0xff]
  %v2944 = vld [vmem:[%s1 + $0x488] sm:$0xff]
  %v2945 = vld [vmem:[%s1 + $0x490] sm:$0xff]
  %v2946 = vld [vmem:[%s1 + $0x498] sm:$0xff]
  %v2947 = vld [vmem:[%s1 + $0x4a0] sm:$0xff]
  %v2948 = vld [vmem:[%s1 + $0x4a8] sm:$0xff]
  %v2949 = vld [vmem:[%s1 + $0x4b0] sm:$0xff]
  %v2950 = vld [vmem:[%s1 + $0x4b8] sm:$0xff]
  %v2951 = vld [vmem:[%s1 + $0x4c0] sm:$0xff]
  %v2952 = vld [vmem:[%s1 + $0x4c8] sm:$0xff]
  %v2953 = vld [vmem:[%s1 + $0x4d0] sm:$0xff]
  %v2954 = vld [vmem:[%s1 + $0x4d8] sm:$0xff]
  %v2955 = vld [vmem:[%s1 + $0x4e0] sm:$0xff]
  %v2956 = vld [vmem:[%s1 + $0x4e8] sm:$0xff]
  %v2957 = vld [vmem:[%s1 + $0x4f0] sm:$0xff]
  %v2958 = vld [vmem:[%s1 + $0x4f8] sm:$0xff]
  %v2959 = vld [vmem:[%s1 + $0x500] sm:$0xff]
  %v2960 = vld [vmem:[%s1 + $0x508] sm:$0xff]
  %v2961 = vld [vmem:[%s1 + $0x510] sm:$0xff]
  %v2962 = vld [vmem:[%s1 + $0x518] sm:$0xff]
  %v2963 = vld [vmem:[%s1 + $0x520] sm:$0xff]
  %v2964 = vld [vmem:[%s1 + $0x528] sm:$0xff]
  %v2965 = vld [vmem:[%s1 + $0x530] sm:$0xff]
  %v2966 = vld [vmem:[%s1 + $0x538] sm:$0xff]
  %v2967 = vld [vmem:[%s1 + $0x540] sm:$0xff]
  %v2968 = vld [vmem:[%s1 + $0x548] sm:$0xff]
  %v2969 = vld [vmem:[%s1 + $0x550] sm:$0xff]
  %v2970 = vld [vmem:[%s1 + $0x558] sm:$0xff]
  %v2971 = vld [vmem:[%s1 + $0x560] sm:$0xff]
  %v2972 = vld [vmem:[%s1 + $0x568] sm:$0xff]
  %v2973 = vld [vmem:[%s1 + $0x570] sm:$0xff]
  %v2974 = vld [vmem:[%s1 + $0x578] sm:$0xff]
  %v2975 = vld [vmem:[%s1 + $0x580] sm:$0xff]
  %v2976 = vld [vmem:[%s1 + $0x588] sm:$0xff]
  %v2977 = vld [vmem:[%s1 + $0x590] sm:$0xff]
  %v2978 = vld [vmem:[%s1 + $0x598] sm:$0xff]
  %v2979 = vld [vmem:[%s1 + $0x5a0] sm:$0xff]
  %v2980 = vld [vmem:[%s1 + $0x5a8] sm:$0xff]
  %v2981 = vld [vmem:[%s1 + $0x5b0] sm:$0xff]
  %v2982 = vld [vmem:[%s1 + $0x5b8] sm:$0xff]
  %v2983 = vld [vmem:[%s1 + $0x5c0] sm:$0xff]
  %v2984 = vld [vmem:[%s1 + $0x5c8] sm:$0xff]
  %v2985 = vld [vmem:[%s1 + $0x5d0] sm:$0xff]
  %v2986 = vld [vmem:[%s1 + $0x5d8] sm:$0xff]
  %v2987 = vld [vmem:[%s1 + $0x5e0] sm:$0xff]
  %v2988 = vld [vmem:[%s1 + $0x5e8] sm:$0xff]
  %v2989 = vld [vmem:[%s1 + $0x5f0] sm:$0xff]
  %v2990 = vld [vmem:[%s1 + $0x5f8] sm:$0xff]
  %v3183 = vunpack.c.l.b16 %v2799
  %v3184 = vunpack.c.h.b16 %v2799
  %v3185 = vunpack.c.l.b16 %v2800
  %v3186 = vunpack.c.h.b16 %v2800
  %v3187 = vunpack.c.l.b16 %v2801
  %v3188 = vunpack.c.h.b16 %v2801
  %v3189 = vunpack.c.l.b16 %v2802
  %v3190 = vunpack.c.h.b16 %v2802
  %v3191 = vunpack.c.l.b16 %v2803
  %v3192 = vunpack.c.h.b16 %v2803
  %v3193 = vunpack.c.l.b16 %v2804
  %v3194 = vunpack.c.h.b16 %v2804
  %v3195 = vunpack.c.l.b16 %v2805
  %v3196 = vunpack.c.h.b16 %v2805
  %v3197 = vunpack.c.l.b16 %v2806
  %v3198 = vunpack.c.h.b16 %v2806
  %v3199 = vunpack.c.l.b16 %v2807
  %v3200 = vunpack.c.h.b16 %v2807
  %v3201 = vunpack.c.l.b16 %v2808
  %v3202 = vunpack.c.h.b16 %v2808
  %v3203 = vunpack.c.l.b16 %v2809
  %v3204 = vunpack.c.h.b16 %v2809
  %v3205 = vunpack.c.l.b16 %v2810
  %v3206 = vunpack.c.h.b16 %v2810
  %v3207 = vunpack.c.l.b16 %v2811
  %v3208 = vunpack.c.h.b16 %v2811
  %v3209 = vunpack.c.l.b16 %v2812
  %v3210 = vunpack.c.h.b16 %v2812
  %v3211 = vunpack.c.l.b16 %v2813
  %v3212 = vunpack.c.h.b16 %v2813
  %v3213 = vunpack.c.l.b16 %v2814
  %v3214 = vunpack.c.h.b16 %v2814
  %v3215 = vunpack.c.l.b16 %v2815
  %v3216 = vunpack.c.h.b16 %v2815
  %v3217 = vunpack.c.l.b16 %v2816
  %v3218 = vunpack.c.h.b16 %v2816
  %v3219 = vunpack.c.l.b16 %v2817
  %v3220 = vunpack.c.h.b16 %v2817
  %v3221 = vunpack.c.l.b16 %v2818
  %v3222 = vunpack.c.h.b16 %v2818
  %v3223 = vunpack.c.l.b16 %v2819
  %v3224 = vunpack.c.h.b16 %v2819
  %v3225 = vunpack.c.l.b16 %v2820
  %v3226 = vunpack.c.h.b16 %v2820
  %v3227 = vunpack.c.l.b16 %v2821
  %v3228 = vunpack.c.h.b16 %v2821
  %v3229 = vunpack.c.l.b16 %v2822
  %v3230 = vunpack.c.h.b16 %v2822
  %v3231 = vunpack.c.l.b16 %v2823
  %v3232 = vunpack.c.h.b16 %v2823
  %v3233 = vunpack.c.l.b16 %v2824
  %v3234 = vunpack.c.h.b16 %v2824
  %v3235 = vunpack.c.l.b16 %v2825
  %v3236 = vunpack.c.h.b16 %v2825
  %v3237 = vunpack.c.l.b16 %v2826
  %v3238 = vunpack.c.h.b16 %v2826
  %v3239 = vunpack.c.l.b16 %v2827
  %v3240 = vunpack.c.h.b16 %v2827
  %v3241 = vunpack.c.l.b16 %v2828
  %v3242 = vunpack.c.h.b16 %v2828
  %v3243 = vunpack.c.l.b16 %v2829
  %v3244 = vunpack.c.h.b16 %v2829
  %v3245 = vunpack.c.l.b16 %v2830
  %v3246 = vunpack.c.h.b16 %v2830
  %v3247 = vunpack.c.l.b16 %v2831
  %v3248 = vunpack.c.h.b16 %v2831
  %v3249 = vunpack.c.l.b16 %v2832
  %v3250 = vunpack.c.h.b16 %v2832
  %v3251 = vunpack.c.l.b16 %v2833
  %v3252 = vunpack.c.h.b16 %v2833
  %v3253 = vunpack.c.l.b16 %v2834
  %v3254 = vunpack.c.h.b16 %v2834
  %v3255 = vunpack.c.l.b16 %v2835
  %v3256 = vunpack.c.h.b16 %v2835
  %v3257 = vunpack.c.l.b16 %v2836
  %v3258 = vunpack.c.h.b16 %v2836
  %v3259 = vunpack.c.l.b16 %v2837
  %v3260 = vunpack.c.h.b16 %v2837
  %v3261 = vunpack.c.l.b16 %v2838
  %v3262 = vunpack.c.h.b16 %v2838
  %v3263 = vunpack.c.l.b16 %v2839
  %v3264 = vunpack.c.h.b16 %v2839
  %v3265 = vunpack.c.l.b16 %v2840
  %v3266 = vunpack.c.h.b16 %v2840
  %v3267 = vunpack.c.l.b16 %v2841
  %v3268 = vunpack.c.h.b16 %v2841
  %v3269 = vunpack.c.l.b16 %v2842
  %v3270 = vunpack.c.h.b16 %v2842
  %v3271 = vunpack.c.l.b16 %v2843
  %v3272 = vunpack.c.h.b16 %v2843
  %v3273 = vunpack.c.l.b16 %v2844
  %v3274 = vunpack.c.h.b16 %v2844
  %v3275 = vunpack.c.l.b16 %v2845
  %v3276 = vunpack.c.h.b16 %v2845
  %v3277 = vunpack.c.l.b16 %v2846
  %v3278 = vunpack.c.h.b16 %v2846
  %v3279 = vunpack.c.l.b16 %v2847
  %v3280 = vunpack.c.h.b16 %v2847
  %v3281 = vunpack.c.l.b16 %v2848
  %v3282 = vunpack.c.h.b16 %v2848
  %v3283 = vunpack.c.l.b16 %v2849
  %v3284 = vunpack.c.h.b16 %v2849
  %v3285 = vunpack.c.l.b16 %v2850
  %v3286 = vunpack.c.h.b16 %v2850
  %v3287 = vunpack.c.l.b16 %v2851
  %v3288 = vunpack.c.h.b16 %v2851
  %v3289 = vunpack.c.l.b16 %v2852
  %v3290 = vunpack.c.h.b16 %v2852
  %v3291 = vunpack.c.l.b16 %v2853
  %v3292 = vunpack.c.h.b16 %v2853
  %v3293 = vunpack.c.l.b16 %v2854
  %v3294 = vunpack.c.h.b16 %v2854
  %v3295 = vunpack.c.l.b16 %v2855
  %v3296 = vunpack.c.h.b16 %v2855
  %v3297 = vunpack.c.l.b16 %v2856
  %v3298 = vunpack.c.h.b16 %v2856
  %v3299 = vunpack.c.l.b16 %v2857
  %v3300 = vunpack.c.h.b16 %v2857
  %v3301 = vunpack.c.l.b16 %v2858
  %v3302 = vunpack.c.h.b16 %v2858
  %v3303 = vunpack.c.l.b16 %v2859
  %v3304 = vunpack.c.h.b16 %v2859
  %v3305 = vunpack.c.l.b16 %v2860
  %v3306 = vunpack.c.h.b16 %v2860
  %v3307 = vunpack.c.l.b16 %v2861
  %v3308 = vunpack.c.h.b16 %v2861
  %v3309 = vunpack.c.l.b16 %v2862
  %v3310 = vunpack.c.h.b16 %v2862
  %v3311 = vunpack.c.l.b16 %v2863
  %v3312 = vunpack.c.h.b16 %v2863
  %v3313 = vunpack.c.l.b16 %v2864
  %v3314 = vunpack.c.h.b16 %v2864
  %v3315 = vunpack.c.l.b16 %v2865
  %v3316 = vunpack.c.h.b16 %v2865
  %v3317 = vunpack.c.l.b16 %v2866
  %v3318 = vunpack.c.h.b16 %v2866
  %v3319 = vunpack.c.l.b16 %v2867
  %v3320 = vunpack.c.h.b16 %v2867
  %v3321 = vunpack.c.l.b16 %v2868
  %v3322 = vunpack.c.h.b16 %v2868
  %v3323 = vunpack.c.l.b16 %v2869
  %v3324 = vunpack.c.h.b16 %v2869
  %v3325 = vunpack.c.l.b16 %v2870
  %v3326 = vunpack.c.h.b16 %v2870
  %v3327 = vunpack.c.l.b16 %v2871
  %v3328 = vunpack.c.h.b16 %v2871
  %v3329 = vunpack.c.l.b16 %v2872
  %v3330 = vunpack.c.h.b16 %v2872
  %v3331 = vunpack.c.l.b16 %v2873
  %v3332 = vunpack.c.h.b16 %v2873
  %v3333 = vunpack.c.l.b16 %v2874
  %v3334 = vunpack.c.h.b16 %v2874
  %v3335 = vunpack.c.l.b16 %v2875
  %v3336 = vunpack.c.h.b16 %v2875
  %v3337 = vunpack.c.l.b16 %v2876
  %v3338 = vunpack.c.h.b16 %v2876
  %v3339 = vunpack.c.l.b16 %v2877
  %v3340 = vunpack.c.h.b16 %v2877
  %v3341 = vunpack.c.l.b16 %v2878
  %v3342 = vunpack.c.h.b16 %v2878
  %v3343 = vunpack.c.l.b16 %v2879
  %v3344 = vunpack.c.h.b16 %v2879
  %v3345 = vunpack.c.l.b16 %v2880
  %v3346 = vunpack.c.h.b16 %v2880
  %v3347 = vunpack.c.l.b16 %v2881
  %v3348 = vunpack.c.h.b16 %v2881
  %v3349 = vunpack.c.l.b16 %v2882
  %v3350 = vunpack.c.h.b16 %v2882
  %v3351 = vunpack.c.l.b16 %v2883
  %v3352 = vunpack.c.h.b16 %v2883
  %v3353 = vunpack.c.l.b16 %v2884
  %v3354 = vunpack.c.h.b16 %v2884
  %v3355 = vunpack.c.l.b16 %v2885
  %v3356 = vunpack.c.h.b16 %v2885
  %v3357 = vunpack.c.l.b16 %v2886
  %v3358 = vunpack.c.h.b16 %v2886
  %v3359 = vunpack.c.l.b16 %v2887
  %v3360 = vunpack.c.h.b16 %v2887
  %v3361 = vunpack.c.l.b16 %v2888
  %v3362 = vunpack.c.h.b16 %v2888
  %v3363 = vunpack.c.l.b16 %v2889
  %v3364 = vunpack.c.h.b16 %v2889
  %v3365 = vunpack.c.l.b16 %v2890
  %v3366 = vunpack.c.h.b16 %v2890
  %v3367 = vunpack.c.l.b16 %v2891
  %v3368 = vunpack.c.h.b16 %v2891
  %v3369 = vunpack.c.l.b16 %v2892
  %v3370 = vunpack.c.h.b16 %v2892
  %v3371 = vunpack.c.l.b16 %v2893
  %v3372 = vunpack.c.h.b16 %v2893
  %v3373 = vunpack.c.l.b16 %v2894
  %v3374 = vunpack.c.h.b16 %v2894
  %v3375 = vunpack.c.l.b16 %v2895
  %v3376 = vunpack.c.h.b16 %v2895
  %v3377 = vunpack.c.l.b16 %v2896
  %v3378 = vunpack.c.h.b16 %v2896
  %v3379 = vunpack.c.l.b16 %v2897
  %v3380 = vunpack.c.h.b16 %v2897
  %v3381 = vunpack.c.l.b16 %v2898
  %v3382 = vunpack.c.h.b16 %v2898
  %v3383 = vunpack.c.l.b16 %v2899
  %v3384 = vunpack.c.h.b16 %v2899
  %v3385 = vunpack.c.l.b16 %v2900
  %v3386 = vunpack.c.h.b16 %v2900
  %v3387 = vunpack.c.l.b16 %v2901
  %v3388 = vunpack.c.h.b16 %v2901
  %v3389 = vunpack.c.l.b16 %v2902
  %v3390 = vunpack.c.h.b16 %v2902
  %v3391 = vunpack.c.l.b16 %v2903
  %v3392 = vunpack.c.h.b16 %v2903
  %v3393 = vunpack.c.l.b16 %v2904
  %v3394 = vunpack.c.h.b16 %v2904
  %v3395 = vunpack.c.l.b16 %v2905
  %v3396 = vunpack.c.h.b16 %v2905
  %v3397 = vunpack.c.l.b16 %v2906
  %v3398 = vunpack.c.h.b16 %v2906
  %v3399 = vunpack.c.l.b16 %v2907
  %v3400 = vunpack.c.h.b16 %v2907
  %v3401 = vunpack.c.l.b16 %v2908
  %v3402 = vunpack.c.h.b16 %v2908
  %v3403 = vunpack.c.l.b16 %v2909
  %v3404 = vunpack.c.h.b16 %v2909
  %v3405 = vunpack.c.l.b16 %v2910
  %v3406 = vunpack.c.h.b16 %v2910
  %v3407 = vunpack.c.l.b16 %v2911
  %v3408 = vunpack.c.h.b16 %v2911
  %v3409 = vunpack.c.l.b16 %v2912
  %v3410 = vunpack.c.h.b16 %v2912
  %v3411 = vunpack.c.l.b16 %v2913
  %v3412 = vunpack.c.h.b16 %v2913
  %v3413 = vunpack.c.l.b16 %v2914
  %v3414 = vunpack.c.h.b16 %v2914
  %v3415 = vunpack.c.l.b16 %v2915
  %v3416 = vunpack.c.h.b16 %v2915
  %v3417 = vunpack.c.l.b16 %v2916
  %v3418 = vunpack.c.h.b16 %v2916
  %v3419 = vunpack.c.l.b16 %v2917
  %v3420 = vunpack.c.h.b16 %v2917
  %v3421 = vunpack.c.l.b16 %v2918
  %v3422 = vunpack.c.h.b16 %v2918
  %v3423 = vunpack.c.l.b16 %v2919
  %v3424 = vunpack.c.h.b16 %v2919
  %v3425 = vunpack.c.l.b16 %v2920
  %v3426 = vunpack.c.h.b16 %v2920
  %v3427 = vunpack.c.l.b16 %v2921
  %v3428 = vunpack.c.h.b16 %v2921
  %v3429 = vunpack.c.l.b16 %v2922
  %v3430 = vunpack.c.h.b16 %v2922
  %v3431 = vunpack.c.l.b16 %v2923
  %v3432 = vunpack.c.h.b16 %v2923
  %v3433 = vunpack.c.l.b16 %v2924
  %v3434 = vunpack.c.h.b16 %v2924
  %v3435 = vunpack.c.l.b16 %v2925
  %v3436 = vunpack.c.h.b16 %v2925
  %v3437 = vunpack.c.l.b16 %v2926
  %v3438 = vunpack.c.h.b16 %v2926
  %v3439 = vunpack.c.l.b16 %v2927
  %v3440 = vunpack.c.h.b16 %v2927
  %v3441 = vunpack.c.l.b16 %v2928
  %v3442 = vunpack.c.h.b16 %v2928
  %v3443 = vunpack.c.l.b16 %v2929
  %v3444 = vunpack.c.h.b16 %v2929
  %v3445 = vunpack.c.l.b16 %v2930
  %v3446 = vunpack.c.h.b16 %v2930
  %v3447 = vunpack.c.l.b16 %v2931
  %v3448 = vunpack.c.h.b16 %v2931
  %v3449 = vunpack.c.l.b16 %v2932
  %v3450 = vunpack.c.h.b16 %v2932
  %v3451 = vunpack.c.l.b16 %v2933
  %v3452 = vunpack.c.h.b16 %v2933
  %v3453 = vunpack.c.l.b16 %v2934
  %v3454 = vunpack.c.h.b16 %v2934
  %v3455 = vunpack.c.l.b16 %v2935
  %v3456 = vunpack.c.h.b16 %v2935
  %v3457 = vunpack.c.l.b16 %v2936
  %v3458 = vunpack.c.h.b16 %v2936
  %v3459 = vunpack.c.l.b16 %v2937
  %v3460 = vunpack.c.h.b16 %v2937
  %v3461 = vunpack.c.l.b16 %v2938
  %v3462 = vunpack.c.h.b16 %v2938
  %v3463 = vunpack.c.l.b16 %v2939
  %v3464 = vunpack.c.h.b16 %v2939
  %v3465 = vunpack.c.l.b16 %v2940
  %v3466 = vunpack.c.h.b16 %v2940
  %v3467 = vunpack.c.l.b16 %v2941
  %v3468 = vunpack.c.h.b16 %v2941
  %v3469 = vunpack.c.l.b16 %v2942
  %v3470 = vunpack.c.h.b16 %v2942
  %v3471 = vunpack.c.l.b16 %v2943
  %v3472 = vunpack.c.h.b16 %v2943
  %v3473 = vunpack.c.l.b16 %v2944
  %v3474 = vunpack.c.h.b16 %v2944
  %v3475 = vunpack.c.l.b16 %v2945
  %v3476 = vunpack.c.h.b16 %v2945
  %v3477 = vunpack.c.l.b16 %v2946
  %v3478 = vunpack.c.h.b16 %v2946
  %v3479 = vunpack.c.l.b16 %v2947
  %v3480 = vunpack.c.h.b16 %v2947
  %v3481 = vunpack.c.l.b16 %v2948
  %v3482 = vunpack.c.h.b16 %v2948
  %v3483 = vunpack.c.l.b16 %v2949
  %v3484 = vunpack.c.h.b16 %v2949
  %v3485 = vunpack.c.l.b16 %v2950
  %v3486 = vunpack.c.h.b16 %v2950
  %v3487 = vunpack.c.l.b16 %v2951
  %v3488 = vunpack.c.h.b16 %v2951
  %v3489 = vunpack.c.l.b16 %v2952
  %v3490 = vunpack.c.h.b16 %v2952
  %v3491 = vunpack.c.l.b16 %v2953
  %v3492 = vunpack.c.h.b16 %v2953
  %v3493 = vunpack.c.l.b16 %v2954
  %v3494 = vunpack.c.h.b16 %v2954
  %v3495 = vunpack.c.l.b16 %v2955
  %v3496 = vunpack.c.h.b16 %v2955
  %v3497 = vunpack.c.l.b16 %v2956
  %v3498 = vunpack.c.h.b16 %v2956
  %v3499 = vunpack.c.l.b16 %v2957
  %v3500 = vunpack.c.h.b16 %v2957
  %v3501 = vunpack.c.l.b16 %v2958
  %v3502 = vunpack.c.h.b16 %v2958
  %v3503 = vunpack.c.l.b16 %v2959
  %v3504 = vunpack.c.h.b16 %v2959
  %v3505 = vunpack.c.l.b16 %v2960
  %v3506 = vunpack.c.h.b16 %v2960
  %v3507 = vunpack.c.l.b16 %v2961
  %v3508 = vunpack.c.h.b16 %v2961
  %v3509 = vunpack.c.l.b16 %v2962
  %v3510 = vunpack.c.h.b16 %v2962
  %v3511 = vunpack.c.l.b16 %v2963
  %v3512 = vunpack.c.h.b16 %v2963
  %v3513 = vunpack.c.l.b16 %v2964
  %v3514 = vunpack.c.h.b16 %v2964
  %v3515 = vunpack.c.l.b16 %v2965
  %v3516 = vunpack.c.h.b16 %v2965
  %v3517 = vunpack.c.l.b16 %v2966
  %v3518 = vunpack.c.h.b16 %v2966
  %v3519 = vunpack.c.l.b16 %v2967
  %v3520 = vunpack.c.h.b16 %v2967
  %v3521 = vunpack.c.l.b16 %v2968
  %v3522 = vunpack.c.h.b16 %v2968
  %v3523 = vunpack.c.l.b16 %v2969
  %v3524 = vunpack.c.h.b16 %v2969
  %v3525 = vunpack.c.l.b16 %v2970
  %v3526 = vunpack.c.h.b16 %v2970
  %v3527 = vunpack.c.l.b16 %v2971
  %v3528 = vunpack.c.h.b16 %v2971
  %v3529 = vunpack.c.l.b16 %v2972
  %v3530 = vunpack.c.h.b16 %v2972
  %v3531 = vunpack.c.l.b16 %v2973
  %v3532 = vunpack.c.h.b16 %v2973
  %v3533 = vunpack.c.l.b16 %v2974
  %v3534 = vunpack.c.h.b16 %v2974
  %v3535 = vunpack.c.l.b16 %v2975
  %v3536 = vunpack.c.h.b16 %v2975
  %v3537 = vunpack.c.l.b16 %v2976
  %v3538 = vunpack.c.h.b16 %v2976
  %v3539 = vunpack.c.l.b16 %v2977
  %v3540 = vunpack.c.h.b16 %v2977
  %v3541 = vunpack.c.l.b16 %v2978
  %v3542 = vunpack.c.h.b16 %v2978
  %v3543 = vunpack.c.l.b16 %v2979
  %v3544 = vunpack.c.h.b16 %v2979
  %v3545 = vunpack.c.l.b16 %v2980
  %v3546 = vunpack.c.h.b16 %v2980
  %v3547 = vunpack.c.l.b16 %v2981
  %v3548 = vunpack.c.h.b16 %v2981
  %v3549 = vunpack.c.l.b16 %v2982
  %v3550 = vunpack.c.h.b16 %v2982
  %v3551 = vunpack.c.l.b16 %v2983
  %v3552 = vunpack.c.h.b16 %v2983
  %v3553 = vunpack.c.l.b16 %v2984
  %v3554 = vunpack.c.h.b16 %v2984
  %v3555 = vunpack.c.l.b16 %v2985
  %v3556 = vunpack.c.h.b16 %v2985
  %v3557 = vunpack.c.l.b16 %v2986
  %v3558 = vunpack.c.h.b16 %v2986
  %v3559 = vunpack.c.l.b16 %v2987
  %v3560 = vunpack.c.h.b16 %v2987
  %v3561 = vunpack.c.l.b16 %v2988
  %v3562 = vunpack.c.h.b16 %v2988
  %v3563 = vunpack.c.l.b16 %v2989
  %v3564 = vunpack.c.h.b16 %v2989
  %v3565 = vunpack.c.l.b16 %v2990
  %v3566 = vunpack.c.h.b16 %v2990
  %v3567 = vpack.c.b16 %v3195, %v3183
  %v3568 = vpack.c.b16 %v3196, %v3184
  %v3569 = vpack.c.b16 %v3197, %v3185
  %v3570 = vpack.c.b16 %v3198, %v3186
  %v3571 = vpack.c.b16 %v3199, %v3187
  %v3572 = vpack.c.b16 %v3200, %v3188
  %v3573 = vpack.c.b16 %v3201, %v3189
  %v3574 = vpack.c.b16 %v3202, %v3190
  %v3575 = vpack.c.b16 %v3203, %v3191
  %v3576 = vpack.c.b16 %v3204, %v3192
  %v3577 = vpack.c.b16 %v3205, %v3193
  %v3578 = vpack.c.b16 %v3206, %v3194
  %v3579 = vpack.c.b16 %v3219, %v3207
  %v3580 = vpack.c.b16 %v3220, %v3208
  %v3581 = vpack.c.b16 %v3221, %v3209
  %v3582 = vpack.c.b16 %v3222, %v3210
  %v3583 = vpack.c.b16 %v3223, %v3211
  %v3584 = vpack.c.b16 %v3224, %v3212
  %v3585 = vpack.c.b16 %v3225, %v3213
  %v3586 = vpack.c.b16 %v3226, %v3214
  %v3587 = vpack.c.b16 %v3227, %v3215
  %v3588 = vpack.c.b16 %v3228, %v3216
  %v3589 = vpack.c.b16 %v3229, %v3217
  %v3590 = vpack.c.b16 %v3230, %v3218
  %v3591 = vpack.c.b16 %v3243, %v3231
  %v3592 = vpack.c.b16 %v3244, %v3232
  %v3593 = vpack.c.b16 %v3245, %v3233
  %v3594 = vpack.c.b16 %v3246, %v3234
  %v3595 = vpack.c.b16 %v3247, %v3235
  %v3596 = vpack.c.b16 %v3248, %v3236
  %v3597 = vpack.c.b16 %v3249, %v3237
  %v3598 = vpack.c.b16 %v3250, %v3238
  %v3599 = vpack.c.b16 %v3251, %v3239
  %v3600 = vpack.c.b16 %v3252, %v3240
  %v3601 = vpack.c.b16 %v3253, %v3241
  %v3602 = vpack.c.b16 %v3254, %v3242
  %v3603 = vpack.c.b16 %v3267, %v3255
  %v3604 = vpack.c.b16 %v3268, %v3256
  %v3605 = vpack.c.b16 %v3269, %v3257
  %v3606 = vpack.c.b16 %v3270, %v3258
  %v3607 = vpack.c.b16 %v3271, %v3259
  %v3608 = vpack.c.b16 %v3272, %v3260
  %v3609 = vpack.c.b16 %v3273, %v3261
  %v3610 = vpack.c.b16 %v3274, %v3262
  %v3611 = vpack.c.b16 %v3275, %v3263
  %v3612 = vpack.c.b16 %v3276, %v3264
  %v3613 = vpack.c.b16 %v3277, %v3265
  %v3614 = vpack.c.b16 %v3278, %v3266
  %v3615 = vpack.c.b16 %v3291, %v3279
  %v3616 = vpack.c.b16 %v3292, %v3280
  %v3617 = vpack.c.b16 %v3293, %v3281
  %v3618 = vpack.c.b16 %v3294, %v3282
  %v3619 = vpack.c.b16 %v3295, %v3283
  %v3620 = vpack.c.b16 %v3296, %v3284
  %v3621 = vpack.c.b16 %v3297, %v3285
  %v3622 = vpack.c.b16 %v3298, %v3286
  %v3623 = vpack.c.b16 %v3299, %v3287
  %v3624 = vpack.c.b16 %v3300, %v3288
  %v3625 = vpack.c.b16 %v3301, %v3289
  %v3626 = vpack.c.b16 %v3302, %v3290
  %v3627 = vpack.c.b16 %v3315, %v3303
  %v3628 = vpack.c.b16 %v3316, %v3304
  %v3629 = vpack.c.b16 %v3317, %v3305
  %v3630 = vpack.c.b16 %v3318, %v3306
  %v3631 = vpack.c.b16 %v3319, %v3307
  %v3632 = vpack.c.b16 %v3320, %v3308
  %v3633 = vpack.c.b16 %v3321, %v3309
  %v3634 = vpack.c.b16 %v3322, %v3310
  %v3635 = vpack.c.b16 %v3323, %v3311
  %v3636 = vpack.c.b16 %v3324, %v3312
  %v3637 = vpack.c.b16 %v3325, %v3313
  %v3638 = vpack.c.b16 %v3326, %v3314
  %v3639 = vpack.c.b16 %v3339, %v3327
  %v3640 = vpack.c.b16 %v3340, %v3328
  %v3641 = vpack.c.b16 %v3341, %v3329
  %v3642 = vpack.c.b16 %v3342, %v3330
  %v3643 = vpack.c.b16 %v3343, %v3331
  %v3644 = vpack.c.b16 %v3344, %v3332
  %v3645 = vpack.c.b16 %v3345, %v3333
  %v3646 = vpack.c.b16 %v3346, %v3334
  %v3647 = vpack.c.b16 %v3347, %v3335
  %v3648 = vpack.c.b16 %v3348, %v3336
  %v3649 = vpack.c.b16 %v3349, %v3337
  %v3650 = vpack.c.b16 %v3350, %v3338
  %v3651 = vpack.c.b16 %v3363, %v3351
  %v3652 = vpack.c.b16 %v3364, %v3352
  %v3653 = vpack.c.b16 %v3365, %v3353
  %v3654 = vpack.c.b16 %v3366, %v3354
  %v3655 = vpack.c.b16 %v3367, %v3355
  %v3656 = vpack.c.b16 %v3368, %v3356
  %v3657 = vpack.c.b16 %v3369, %v3357
  %v3658 = vpack.c.b16 %v3370, %v3358
  %v3659 = vpack.c.b16 %v3371, %v3359
  %v3660 = vpack.c.b16 %v3372, %v3360
  %v3661 = vpack.c.b16 %v3373, %v3361
  %v3662 = vpack.c.b16 %v3374, %v3362
  %v3663 = vpack.c.b16 %v3387, %v3375
  %v3664 = vpack.c.b16 %v3388, %v3376
  %v3665 = vpack.c.b16 %v3389, %v3377
  %v3666 = vpack.c.b16 %v3390, %v3378
  %v3667 = vpack.c.b16 %v3391, %v3379
  %v3668 = vpack.c.b16 %v3392, %v3380
  %v3669 = vpack.c.b16 %v3393, %v3381
  %v3670 = vpack.c.b16 %v3394, %v3382
  %v3671 = vpack.c.b16 %v3395, %v3383
  %v3672 = vpack.c.b16 %v3396, %v3384
  %v3673 = vpack.c.b16 %v3397, %v3385
  %v3674 = vpack.c.b16 %v3398, %v3386
  %v3675 = vpack.c.b16 %v3411, %v3399
  %v3676 = vpack.c.b16 %v3412, %v3400
  %v3677 = vpack.c.b16 %v3413, %v3401
  %v3678 = vpack.c.b16 %v3414, %v3402
  %v3679 = vpack.c.b16 %v3415, %v3403
  %v3680 = vpack.c.b16 %v3416, %v3404
  %v3681 = vpack.c.b16 %v3417, %v3405
  %v3682 = vpack.c.b16 %v3418, %v3406
  %v3683 = vpack.c.b16 %v3419, %v3407
  %v3684 = vpack.c.b16 %v3420, %v3408
  %v3685 = vpack.c.b16 %v3421, %v3409
  %v3686 = vpack.c.b16 %v3422, %v3410
  %v3687 = vpack.c.b16 %v3435, %v3423
  %v3688 = vpack.c.b16 %v3436, %v3424
  %v3689 = vpack.c.b16 %v3437, %v3425
  %v3690 = vpack.c.b16 %v3438, %v3426
  %v3691 = vpack.c.b16 %v3439, %v3427
  %v3692 = vpack.c.b16 %v3440, %v3428
  %v3693 = vpack.c.b16 %v3441, %v3429
  %v3694 = vpack.c.b16 %v3442, %v3430
  %v3695 = vpack.c.b16 %v3443, %v3431
  %v3696 = vpack.c.b16 %v3444, %v3432
  %v3697 = vpack.c.b16 %v3445, %v3433
  %v3698 = vpack.c.b16 %v3446, %v3434
  %v3699 = vpack.c.b16 %v3459, %v3447
  %v3700 = vpack.c.b16 %v3460, %v3448
  %v3701 = vpack.c.b16 %v3461, %v3449
  %v3702 = vpack.c.b16 %v3462, %v3450
  %v3703 = vpack.c.b16 %v3463, %v3451
  %v3704 = vpack.c.b16 %v3464, %v3452
  %v3705 = vpack.c.b16 %v3465, %v3453
  %v3706 = vpack.c.b16 %v3466, %v3454
  %v3707 = vpack.c.b16 %v3467, %v3455
  %v3708 = vpack.c.b16 %v3468, %v3456
  %v3709 = vpack.c.b16 %v3469, %v3457
  %v3710 = vpack.c.b16 %v3470, %v3458
  %v3711 = vpack.c.b16 %v3483, %v3471
  %v3712 = vpack.c.b16 %v3484, %v3472
  %v3713 = vpack.c.b16 %v3485, %v3473
  %v3714 = vpack.c.b16 %v3486, %v3474
  %v3715 = vpack.c.b16 %v3487, %v3475
  %v3716 = vpack.c.b16 %v3488, %v3476
  %v3717 = vpack.c.b16 %v3489, %v3477
  %v3718 = vpack.c.b16 %v3490, %v3478
  %v3719 = vpack.c.b16 %v3491, %v3479
  %v3720 = vpack.c.b16 %v3492, %v3480
  %v3721 = vpack.c.b16 %v3493, %v3481
  %v3722 = vpack.c.b16 %v3494, %v3482
  %v3723 = vpack.c.b16 %v3507, %v3495
  %v3724 = vpack.c.b16 %v3508, %v3496
  %v3725 = vpack.c.b16 %v3509, %v3497
  %v3726 = vpack.c.b16 %v3510, %v3498
  %v3727 = vpack.c.b16 %v3511, %v3499
  %v3728 = vpack.c.b16 %v3512, %v3500
  %v3729 = vpack.c.b16 %v3513, %v3501
  %v3730 = vpack.c.b16 %v3514, %v3502
  %v3731 = vpack.c.b16 %v3515, %v3503
  %v3732 = vpack.c.b16 %v3516, %v3504
  %v3733 = vpack.c.b16 %v3517, %v3505
  %v3734 = vpack.c.b16 %v3518, %v3506
  %v3735 = vpack.c.b16 %v3531, %v3519
  %v3736 = vpack.c.b16 %v3532, %v3520
  %v3737 = vpack.c.b16 %v3533, %v3521
  %v3738 = vpack.c.b16 %v3534, %v3522
  %v3739 = vpack.c.b16 %v3535, %v3523
  %v3740 = vpack.c.b16 %v3536, %v3524
  %v3741 = vpack.c.b16 %v3537, %v3525
  %v3742 = vpack.c.b16 %v3538, %v3526
  %v3743 = vpack.c.b16 %v3539, %v3527
  %v3744 = vpack.c.b16 %v3540, %v3528
  %v3745 = vpack.c.b16 %v3541, %v3529
  %v3746 = vpack.c.b16 %v3542, %v3530
  %v3747 = vpack.c.b16 %v3555, %v3543
  %v3748 = vpack.c.b16 %v3556, %v3544
  %v3749 = vpack.c.b16 %v3557, %v3545
  %v3750 = vpack.c.b16 %v3558, %v3546
  %v3751 = vpack.c.b16 %v3559, %v3547
  %v3752 = vpack.c.b16 %v3560, %v3548
  %v3753 = vpack.c.b16 %v3561, %v3549
  %v3754 = vpack.c.b16 %v3562, %v3550
  %v3755 = vpack.c.b16 %v3563, %v3551
  %v3756 = vpack.c.b16 %v3564, %v3552
  %v3757 = vpack.c.b16 %v3565, %v3553
  %v3758 = vpack.c.b16 %v3566, %v3554
  %3951 = vmatprep.subr.bf16.mxu0 0
  %3952 = vmatpush1.bf16.msra.mxu0 %v2703
  %3953 = vmatprep.subr.bf16.mxu0 0
  %3954 = vmatpush1.bf16.msra.mxu0 %v2704
  %3955 = vmatprep.subr.bf16.mxu0 0
  %3956 = vmatpush1.bf16.msra.mxu0 %v2705
  %3957 = vmatprep.subr.bf16.mxu0 0
  %3958 = vmatpush1.bf16.msra.mxu0 %v2706
  %3959 = vmatprep.subr.bf16.mxu0 0
  %3960 = vmatpush1.bf16.msra.mxu0 %v2707
  %3961 = vmatprep.subr.bf16.mxu0 0
  %3962 = vmatpush1.bf16.msra.mxu0 %v2708
  %3963 = vmatprep.subr.bf16.mxu0 0
  %3964 = vmatpush1.bf16.msra.mxu0 %v2709
  %3965 = vmatprep.subr.bf16.mxu0 0
  %3966 = vmatpush1.bf16.msra.mxu0 %v2710
  %3967 = vmatprep.subr.bf16.mxu0 0
  %3968 = vmatpush1.bf16.msra.mxu0 %v2711
  %3969 = vmatprep.subr.bf16.mxu0 0
  %3970 = vmatpush1.bf16.msra.mxu0 %v2712
  %3971 = vmatprep.subr.bf16.mxu0 0
  %3972 = vmatpush1.bf16.msra.mxu0 %v2713
  %3973 = vmatprep.subr.bf16.mxu0 0
  %3974 = vmatpush1.bf16.msra.mxu0 %v2714
  %3975 = vmatprep.subr.bf16.mxu0 0
  %3976 = vmatpush1.bf16.msra.mxu0 %v2715
  %3977 = vmatprep.subr.bf16.mxu0 0
  %3978 = vmatpush1.bf16.msra.mxu0 %v2716
  %3979 = vmatprep.subr.bf16.mxu0 0
  %3980 = vmatpush1.bf16.msra.mxu0 %v2717
  %3981 = vmatprep.subr.bf16.mxu0 0
  %3982 = vmatpush1.bf16.msra.mxu0 %v2718
  %3983 = vmatprep.mubr.bf16.mxu0 %v3568
  %3984 = vmatmul.mubr.bf16.gmra.mrb[0].mxu0 %v3567
  %v3985 = vpop.f32.mrb[0].mxu0
  %v3986 = vadd.f32 0.0, %v3985
  %v3987 = vpop.f32.mrb[0].mxu0
  %v3988 = vpop.f32.mrb[0].mxu0
  %v3989 = vadd.f32 0.0, %v3988
  %v3990 = vpop.f32.mrb[0].mxu0
  %3991 = vmatprep.mubr.bf16.mxu0 %v3580
  %3992 = vmatmul.mubr.bf16.gmra.mrb[0].mxu0 %v3579
  %v3993 = vpop.f32.mrb[0].mxu0
  %v3994 = vadd.f32 0.0, %v3993
  %v3995 = vpop.f32.mrb[0].mxu0
  %v3996 = vpop.f32.mrb[0].mxu0
  %v3997 = vadd.f32 0.0, %v3996
  %v3998 = vpop.f32.mrb[0].mxu0
  %3999 = vmatprep.mubr.bf16.mxu0 %v3592
  %4000 = vmatmul.mubr.bf16.gmra.mrb[0].mxu0 %v3591
  %v4001 = vpop.f32.mrb[0].mxu0
  %v4002 = vadd.f32 0.0, %v4001
  %v4003 = vpop.f32.mrb[0].mxu0
  %v4004 = vpop.f32.mrb[0].mxu0
  %v4005 = vadd.f32 0.0, %v4004
  %v4006 = vpop.f32.mrb[0].mxu0
  %4007 = vmatprep.mubr.bf16.mxu0 %v3604
  %4008 = vmatmul.mubr.bf16.gmra.mrb[0].mxu0 %v3603
  %v4009 = vpop.f32.mrb[0].mxu0
  %v4010 = vadd.f32 0.0, %v4009
  %v4011 = vpop.f32.mrb[0].mxu0
  %v4012 = vpop.f32.mrb[0].mxu0
  %v4013 = vadd.f32 0.0, %v4012
  %v4014 = vpop.f32.mrb[0].mxu0
  %4015 = vmatprep.mubr.bf16.mxu0 %v3616
  %4016 = vmatmul.mubr.bf16.gmra.mrb[0].mxu0 %v3615
  %v4017 = vpop.f32.mrb[0].mxu0
  %v4018 = vadd.f32 0.0, %v4017
  %v4019 = vpop.f32.mrb[0].mxu0
  %v4020 = vpop.f32.mrb[0].mxu0
  %v4021 = vadd.f32 0.0, %v4020
  %v4022 = vpop.f32.mrb[0].mxu0
  %4023 = vmatprep.mubr.bf16.mxu0 %v3628
  %4024 = vmatmul.mubr.bf16.gmra.mrb[0].mxu0 %v3627
  %v4025 = vpop.f32.mrb[0].mxu0
  %v4026 = vadd.f32 0.0, %v4025
  %v4027 = vpop.f32.mrb[0].mxu0
  %v4028 = vpop.f32.mrb[0].mxu0
  %v4029 = vadd.f32 0.0, %v4028
  %v4030 = vpop.f32.mrb[0].mxu0
  %4031 = vmatprep.mubr.bf16.mxu0 %v3640
  %4032 = vmatmul.mubr.bf16.gmra.mrb[0].mxu0 %v3639
  %v4033 = vpop.f32.mrb[0].mxu0
  %v4034 = vadd.f32 0.0, %v4033
  %v4035 = vpop.f32.mrb[0].mxu0
  %v4036 = vpop.f32.mrb[0].mxu0
  %v4037 = vadd.f32 0.0, %v4036
  %v4038 = vpop.f32.mrb[0].mxu0
  %4039 = vmatprep.mubr.bf16.mxu0 %v3652
  %4040 = vmatmul.mubr.bf16.gmra.mrb[0].mxu0 %v3651
  %v4041 = vpop.f32.mrb[0].mxu0
  %v4042 = vadd.f32 0.0, %v4041
  %v4043 = vpop.f32.mrb[0].mxu0
  %v4044 = vpop.f32.mrb[0].mxu0
  %v4045 = vadd.f32 0.0, %v4044
  %v4046 = vpop.f32.mrb[0].mxu0
  %4047 = vmatprep.mubr.bf16.mxu0 %v3664
  %4048 = vmatmul.mubr.bf16.gmra.mrb[0].mxu0 %v3663
  %v4049 = vpop.f32.mrb[0].mxu0
  %v4050 = vadd.f32 0.0, %v4049
  %v4051 = vpop.f32.mrb[0].mxu0
  %v4052 = vpop.f32.mrb[0].mxu0
  %v4053 = vadd.f32 0.0, %v4052
  %v4054 = vpop.f32.mrb[0].mxu0
  %4055 = vmatprep.mubr.bf16.mxu0 %v3676
  %4056 = vmatmul.mubr.bf16.gmra.mrb[0].mxu0 %v3675
  %v4057 = vpop.f32.mrb[0].mxu0
  %v4058 = vadd.f32 0.0, %v4057
  %v4059 = vpop.f32.mrb[0].mxu0
  %v4060 = vpop.f32.mrb[0].mxu0
  %v4061 = vadd.f32 0.0, %v4060
  %v4062 = vpop.f32.mrb[0].mxu0
  %4063 = vmatprep.mubr.bf16.mxu0 %v3688
  %4064 = vmatmul.mubr.bf16.gmra.mrb[0].mxu0 %v3687
  %v4065 = vpop.f32.mrb[0].mxu0
  %v4066 = vadd.f32 0.0, %v4065
  %v4067 = vpop.f32.mrb[0].mxu0
  %v4068 = vpop.f32.mrb[0].mxu0
  %v4069 = vadd.f32 0.0, %v4068
  %v4070 = vpop.f32.mrb[0].mxu0
  %4071 = vmatprep.mubr.bf16.mxu0 %v3700
  %4072 = vmatmul.mubr.bf16.gmra.mrb[0].mxu0 %v3699
  %v4073 = vpop.f32.mrb[0].mxu0
  %v4074 = vadd.f32 0.0, %v4073
  %v4075 = vpop.f32.mrb[0].mxu0
  %v4076 = vpop.f32.mrb[0].mxu0
  %v4077 = vadd.f32 0.0, %v4076
  %v4078 = vpop.f32.mrb[0].mxu0
  %4079 = vmatprep.mubr.bf16.mxu0 %v3712
  %4080 = vmatmul.mubr.bf16.gmra.mrb[0].mxu0 %v3711
  %v4081 = vpop.f32.mrb[0].mxu0
  %v4082 = vadd.f32 0.0, %v4081
  %v4083 = vpop.f32.mrb[0].mxu0
  %v4084 = vpop.f32.mrb[0].mxu0
  %v4085 = vadd.f32 0.0, %v4084
  %v4086 = vpop.f32.mrb[0].mxu0
  %4087 = vmatprep.mubr.bf16.mxu0 %v3724
  %4088 = vmatmul.mubr.bf16.gmra.mrb[0].mxu0 %v3723
  %v4089 = vpop.f32.mrb[0].mxu0
  %v4090 = vadd.f32 0.0, %v4089
  %v4091 = vpop.f32.mrb[0].mxu0
  %v4092 = vpop.f32.mrb[0].mxu0
  %v4093 = vadd.f32 0.0, %v4092
  %v4094 = vpop.f32.mrb[0].mxu0
  %4095 = vmatprep.mubr.bf16.mxu0 %v3736
  %4096 = vmatmul.mubr.bf16.gmra.mrb[0].mxu0 %v3735
  %v4097 = vpop.f32.mrb[0].mxu0
  %v4098 = vadd.f32 0.0, %v4097
  %v4099 = vpop.f32.mrb[0].mxu0
  %v4100 = vpop.f32.mrb[0].mxu0
  %v4101 = vadd.f32 0.0, %v4100
  %v4102 = vpop.f32.mrb[0].mxu0
  %4103 = vmatprep.mubr.bf16.mxu0 %v3748
  %4104 = vmatmul.mubr.bf16.gmra.mrb[0].mxu0 %v3747
  %v4105 = vpop.f32.mrb[0].mxu0
  %v4106 = vadd.f32 0.0, %v4105
  %v4107 = vpop.f32.mrb[0].mxu0
  %v4108 = vpop.f32.mrb[0].mxu0
  %v4109 = vadd.f32 0.0, %v4108
  %v4110 = vpop.f32.mrb[0].mxu0
  %4111 = vdwg.mxu0
  %4112 = vmatprep.subr.bf16.mxu0 0
  %4113 = vmatpush1.bf16.msra.mxu0 %v2719
  %4114 = vmatprep.subr.bf16.mxu0 0
  %4115 = vmatpush1.bf16.msra.mxu0 %v2720
  %4116 = vmatprep.subr.bf16.mxu0 0
  %4117 = vmatpush1.bf16.msra.mxu0 %v2721
  %4118 = vmatprep.subr.bf16.mxu0 0
  %4119 = vmatpush1.bf16.msra.mxu0 %v2722
  %4120 = vmatprep.subr.bf16.mxu0 0
  %4121 = vmatpush1.bf16.msra.mxu0 %v2723
  %4122 = vmatprep.subr.bf16.mxu0 0
  %4123 = vmatpush1.bf16.msra.mxu0 %v2724
  %4124 = vmatprep.subr.bf16.mxu0 0
  %4125 = vmatpush1.bf16.msra.mxu0 %v2725
  %4126 = vmatprep.subr.bf16.mxu0 0
  %4127 = vmatpush1.bf16.msra.mxu0 %v2726
  %4128 = vmatprep.subr.bf16.mxu0 0
  %4129 = vmatpush1.bf16.msra.mxu0 %v2727
  %4130 = vmatprep.subr.bf16.mxu0 0
  %4131 = vmatpush1.bf16.msra.mxu0 %v2728
  %4132 = vmatprep.subr.bf16.mxu0 0
  %4133 = vmatpush1.bf16.msra.mxu0 %v2729
  %4134 = vmatprep.subr.bf16.mxu0 0
  %4135 = vmatpush1.bf16.msra.mxu0 %v2730
  %4136 = vmatprep.subr.bf16.mxu0 0
  %4137 = vmatpush1.bf16.msra.mxu0 %v2731
  %4138 = vmatprep.subr.bf16.mxu0 0
  %4139 = vmatpush1.bf16.msra.mxu0 %v2732
  %4140 = vmatprep.subr.bf16.mxu0 0
  %4141 = vmatpush1.bf16.msra.mxu0 %v2733
  %4142 = vmatprep.subr.bf16.mxu0 0
  %4143 = vmatpush1.bf16.msra.mxu0 %v2734
  %4144 = vmatprep.mubr.bf16.mxu0 %v3570
  %4145 = vmatmul.mubr.bf16.gmra.mrb[0].mxu0 %v3569
  %v4146 = vpop.f32.mrb[0].mxu0
  %v4147 = vadd.f32 %v3986, %v4146
  %v4148 = vpop.f32.mrb[0].mxu0
  %v4149 = vpop.f32.mrb[0].mxu0
  %v4150 = vadd.f32 %v3989, %v4149
  %v4151 = vpop.f32.mrb[0].mxu0
  %4152 = vmatprep.mubr.bf16.mxu0 %v3582
  %4153 = vmatmul.mubr.bf16.gmra.mrb[0].mxu0 %v3581
  %v4154 = vpop.f32.mrb[0].mxu0
  %v4155 = vadd.f32 %v3994, %v4154
  %v4156 = vpop.f32.mrb[0].mxu0
  %v4157 = vpop.f32.mrb[0].mxu0
  %v4158 = vadd.f32 %v3997, %v4157
  %v4159 = vpop.f32.mrb[0].mxu0
  %4160 = vmatprep.mubr.bf16.mxu0 %v3594
  %4161 = vmatmul.mubr.bf16.gmra.mrb[0].mxu0 %v3593
  %v4162 = vpop.f32.mrb[0].mxu0
  %v4163 = vadd.f32 %v4002, %v4162
  %v4164 = vpop.f32.mrb[0].mxu0
  %v4165 = vpop.f32.mrb[0].mxu0
  %v4166 = vadd.f32 %v4005, %v4165
  %v4167 = vpop.f32.mrb[0].mxu0
  %4168 = vmatprep.mubr.bf16.mxu0 %v3606
  %4169 = vmatmul.mubr.bf16.gmra.mrb[0].mxu0 %v3605
  %v4170 = vpop.f32.mrb[0].mxu0
  %v4171 = vadd.f32 %v4010, %v4170
  %v4172 = vpop.f32.mrb[0].mxu0
  %v4173 = vpop.f32.mrb[0].mxu0
  %v4174 = vadd.f32 %v4013, %v4173
  %v4175 = vpop.f32.mrb[0].mxu0
  %4176 = vmatprep.mubr.bf16.mxu0 %v3618
  %4177 = vmatmul.mubr.bf16.gmra.mrb[0].mxu0 %v3617
  %v4178 = vpop.f32.mrb[0].mxu0
  %v4179 = vadd.f32 %v4018, %v4178
  %v4180 = vpop.f32.mrb[0].mxu0
  %v4181 = vpop.f32.mrb[0].mxu0
  %v4182 = vadd.f32 %v4021, %v4181
  %v4183 = vpop.f32.mrb[0].mxu0
  %4184 = vmatprep.mubr.bf16.mxu0 %v3630
  %4185 = vmatmul.mubr.bf16.gmra.mrb[0].mxu0 %v3629
  %v4186 = vpop.f32.mrb[0].mxu0
  %v4187 = vadd.f32 %v4026, %v4186
  %v4188 = vpop.f32.mrb[0].mxu0
  %v4189 = vpop.f32.mrb[0].mxu0
  %v4190 = vadd.f32 %v4029, %v4189
  %v4191 = vpop.f32.mrb[0].mxu0
  %4192 = vmatprep.mubr.bf16.mxu0 %v3642
  %4193 = vmatmul.mubr.bf16.gmra.mrb[0].mxu0 %v3641
  %v4194 = vpop.f32.mrb[0].mxu0
  %v4195 = vadd.f32 %v4034, %v4194
  %v4196 = vpop.f32.mrb[0].mxu0
  %v4197 = vpop.f32.mrb[0].mxu0
  %v4198 = vadd.f32 %v4037, %v4197
  %v4199 = vpop.f32.mrb[0].mxu0
  %4200 = vmatprep.mubr.bf16.mxu0 %v3654
  %4201 = vmatmul.mubr.bf16.gmra.mrb[0].mxu0 %v3653
  %v4202 = vpop.f32.mrb[0].mxu0
  %v4203 = vadd.f32 %v4042, %v4202
  %v4204 = vpop.f32.mrb[0].mxu0
  %v4205 = vpop.f32.mrb[0].mxu0
  %v4206 = vadd.f32 %v4045, %v4205
  %v4207 = vpop.f32.mrb[0].mxu0
  %4208 = vmatprep.mubr.bf16.mxu0 %v3666
  %4209 = vmatmul.mubr.bf16.gmra.mrb[0].mxu0 %v3665
  %v4210 = vpop.f32.mrb[0].mxu0
  %v4211 = vadd.f32 %v4050, %v4210
  %v4212 = vpop.f32.mrb[0].mxu0
  %v4213 = vpop.f32.mrb[0].mxu0
  %v4214 = vadd.f32 %v4053, %v4213
  %v4215 = vpop.f32.mrb[0].mxu0
  %4216 = vmatprep.mubr.bf16.mxu0 %v3678
  %4217 = vmatmul.mubr.bf16.gmra.mrb[0].mxu0 %v3677
  %v4218 = vpop.f32.mrb[0].mxu0
  %v4219 = vadd.f32 %v4058, %v4218
  %v4220 = vpop.f32.mrb[0].mxu0
  %v4221 = vpop.f32.mrb[0].mxu0
  %v4222 = vadd.f32 %v4061, %v4221
  %v4223 = vpop.f32.mrb[0].mxu0
  %4224 = vmatprep.mubr.bf16.mxu0 %v3690
  %4225 = vmatmul.mubr.bf16.gmra.mrb[0].mxu0 %v3689
  %v4226 = vpop.f32.mrb[0].mxu0
  %v4227 = vadd.f32 %v4066, %v4226
  %v4228 = vpop.f32.mrb[0].mxu0
  %v4229 = vpop.f32.mrb[0].mxu0
  %v4230 = vadd.f32 %v4069, %v4229
  %v4231 = vpop.f32.mrb[0].mxu0
  %4232 = vmatprep.mubr.bf16.mxu0 %v3702
  %4233 = vmatmul.mubr.bf16.gmra.mrb[0].mxu0 %v3701
  %v4234 = vpop.f32.mrb[0].mxu0
  %v4235 = vadd.f32 %v4074, %v4234
  %v4236 = vpop.f32.mrb[0].mxu0
  %v4237 = vpop.f32.mrb[0].mxu0
  %v4238 = vadd.f32 %v4077, %v4237
  %v4239 = vpop.f32.mrb[0].mxu0
  %4240 = vmatprep.mubr.bf16.mxu0 %v3714
  %4241 = vmatmul.mubr.bf16.gmra.mrb[0].mxu0 %v3713
  %v4242 = vpop.f32.mrb[0].mxu0
  %v4243 = vadd.f32 %v4082, %v4242
  %v4244 = vpop.f32.mrb[0].mxu0
  %v4245 = vpop.f32.mrb[0].mxu0
  %v4246 = vadd.f32 %v4085, %v4245
  %v4247 = vpop.f32.mrb[0].mxu0
  %4248 = vmatprep.mubr.bf16.mxu0 %v3726
  %4249 = vmatmul.mubr.bf16.gmra.mrb[0].mxu0 %v3725
  %v4250 = vpop.f32.mrb[0].mxu0
  %v4251 = vadd.f32 %v4090, %v4250
  %v4252 = vpop.f32.mrb[0].mxu0
  %v4253 = vpop.f32.mrb[0].mxu0
  %v4254 = vadd.f32 %v4093, %v4253
  %v4255 = vpop.f32.mrb[0].mxu0
  %4256 = vmatprep.mubr.bf16.mxu0 %v3738
  %4257 = vmatmul.mubr.bf16.gmra.mrb[0].mxu0 %v3737
  %v4258 = vpop.f32.mrb[0].mxu0
  %v4259 = vadd.f32 %v4098, %v4258
  %v4260 = vpop.f32.mrb[0].mxu0
  %v4261 = vpop.f32.mrb[0].mxu0
  %v4262 = vadd.f32 %v4101, %v4261
  %v4263 = vpop.f32.mrb[0].mxu0
  %4264 = vmatprep.mubr.bf16.mxu0 %v3750
  %4265 = vmatmul.mubr.bf16.gmra.mrb[0].mxu0 %v3749
  %v4266 = vpop.f32.mrb[0].mxu0
  %v4267 = vadd.f32 %v4106, %v4266
  %v4268 = vpop.f32.mrb[0].mxu0
  %v4269 = vpop.f32.mrb[0].mxu0
  %v4270 = vadd.f32 %v4109, %v4269
  %v4271 = vpop.f32.mrb[0].mxu0
  %4272 = vdwg.mxu0
  %4273 = vmatprep.subr.bf16.mxu0 0
  %4274 = vmatpush1.bf16.msra.mxu0 %v2735
  %4275 = vmatprep.subr.bf16.mxu0 0
  %4276 = vmatpush1.bf16.msra.mxu0 %v2736
  %4277 = vmatprep.subr.bf16.mxu0 0
  %4278 = vmatpush1.bf16.msra.mxu0 %v2737
  %4279 = vmatprep.subr.bf16.mxu0 0
  %4280 = vmatpush1.bf16.msra.mxu0 %v2738
  %4281 = vmatprep.subr.bf16.mxu0 0
  %4282 = vmatpush1.bf16.msra.mxu0 %v2739
  %4283 = vmatprep.subr.bf16.mxu0 0
  %4284 = vmatpush1.bf16.msra.mxu0 %v2740
  %4285 = vmatprep.subr.bf16.mxu0 0
  %4286 = vmatpush1.bf16.msra.mxu0 %v2741
  %4287 = vmatprep.subr.bf16.mxu0 0
  %4288 = vmatpush1.bf16.msra.mxu0 %v2742
  %4289 = vmatprep.subr.bf16.mxu0 0
  %4290 = vmatpush1.bf16.msra.mxu0 %v2743
  %4291 = vmatprep.subr.bf16.mxu0 0
  %4292 = vmatpush1.bf16.msra.mxu0 %v2744
  %4293 = vmatprep.subr.bf16.mxu0 0
  %4294 = vmatpush1.bf16.msra.mxu0 %v2745
  %4295 = vmatprep.subr.bf16.mxu0 0
  %4296 = vmatpush1.bf16.msra.mxu0 %v2746
  %4297 = vmatprep.subr.bf16.mxu0 0
  %4298 = vmatpush1.bf16.msra.mxu0 %v2747
  %4299 = vmatprep.subr.bf16.mxu0 0
  %4300 = vmatpush1.bf16.msra.mxu0 %v2748
  %4301 = vmatprep.subr.bf16.mxu0 0
  %4302 = vmatpush1.bf16.msra.mxu0 %v2749
  %4303 = vmatprep.subr.bf16.mxu0 0
  %4304 = vmatpush1.bf16.msra.mxu0 %v2750
  %4305 = vmatprep.mubr.bf16.mxu0 %v3572
  %4306 = vmatmul.mubr.bf16.gmra.mrb[0].mxu0 %v3571
  %v4307 = vpop.f32.mrb[0].mxu0
  %v4308 = vadd.f32 %v4147, %v4307
  %v4309 = vpop.f32.mrb[0].mxu0
  %v4310 = vpop.f32.mrb[0].mxu0
  %v4311 = vadd.f32 %v4150, %v4310
  %v4312 = vpop.f32.mrb[0].mxu0
  %4313 = vmatprep.mubr.bf16.mxu0 %v3584
  %4314 = vmatmul.mubr.bf16.gmra.mrb[0].mxu0 %v3583
  %v4315 = vpop.f32.mrb[0].mxu0
  %v4316 = vadd.f32 %v4155, %v4315
  %v4317 = vpop.f32.mrb[0].mxu0
  %v4318 = vpop.f32.mrb[0].mxu0
  %v4319 = vadd.f32 %v4158, %v4318
  %v4320 = vpop.f32.mrb[0].mxu0
  %4321 = vmatprep.mubr.bf16.mxu0 %v3596
  %4322 = vmatmul.mubr.bf16.gmra.mrb[0].mxu0 %v3595
  %v4323 = vpop.f32.mrb[0].mxu0
  %v4324 = vadd.f32 %v4163, %v4323
  %v4325 = vpop.f32.mrb[0].mxu0
  %v4326 = vpop.f32.mrb[0].mxu0
  %v4327 = vadd.f32 %v4166, %v4326
  %v4328 = vpop.f32.mrb[0].mxu0
  %4329 = vmatprep.mubr.bf16.mxu0 %v3608
  %4330 = vmatmul.mubr.bf16.gmra.mrb[0].mxu0 %v3607
  %v4331 = vpop.f32.mrb[0].mxu0
  %v4332 = vadd.f32 %v4171, %v4331
  %v4333 = vpop.f32.mrb[0].mxu0
  %v4334 = vpop.f32.mrb[0].mxu0
  %v4335 = vadd.f32 %v4174, %v4334
  %v4336 = vpop.f32.mrb[0].mxu0
  %4337 = vmatprep.mubr.bf16.mxu0 %v3620
  %4338 = vmatmul.mubr.bf16.gmra.mrb[0].mxu0 %v3619
  %v4339 = vpop.f32.mrb[0].mxu0
  %v4340 = vadd.f32 %v4179, %v4339
  %v4341 = vpop.f32.mrb[0].mxu0
  %v4342 = vpop.f32.mrb[0].mxu0
  %v4343 = vadd.f32 %v4182, %v4342
  %v4344 = vpop.f32.mrb[0].mxu0
  %4345 = vmatprep.mubr.bf16.mxu0 %v3632
  %4346 = vmatmul.mubr.bf16.gmra.mrb[0].mxu0 %v3631
  %v4347 = vpop.f32.mrb[0].mxu0
  %v4348 = vadd.f32 %v4187, %v4347
  %v4349 = vpop.f32.mrb[0].mxu0
  %v4350 = vpop.f32.mrb[0].mxu0
  %v4351 = vadd.f32 %v4190, %v4350
  %v4352 = vpop.f32.mrb[0].mxu0
  %4353 = vmatprep.mubr.bf16.mxu0 %v3644
  %4354 = vmatmul.mubr.bf16.gmra.mrb[0].mxu0 %v3643
  %v4355 = vpop.f32.mrb[0].mxu0
  %v4356 = vadd.f32 %v4195, %v4355
  %v4357 = vpop.f32.mrb[0].mxu0
  %v4358 = vpop.f32.mrb[0].mxu0
  %v4359 = vadd.f32 %v4198, %v4358
  %v4360 = vpop.f32.mrb[0].mxu0
  %4361 = vmatprep.mubr.bf16.mxu0 %v3656
  %4362 = vmatmul.mubr.bf16.gmra.mrb[0].mxu0 %v3655
  %v4363 = vpop.f32.mrb[0].mxu0
  %v4364 = vadd.f32 %v4203, %v4363
  %v4365 = vpop.f32.mrb[0].mxu0
  %v4366 = vpop.f32.mrb[0].mxu0
  %v4367 = vadd.f32 %v4206, %v4366
  %v4368 = vpop.f32.mrb[0].mxu0
  %4369 = vmatprep.mubr.bf16.mxu0 %v3668
  %4370 = vmatmul.mubr.bf16.gmra.mrb[0].mxu0 %v3667
  %v4371 = vpop.f32.mrb[0].mxu0
  %v4372 = vadd.f32 %v4211, %v4371
  %v4373 = vpop.f32.mrb[0].mxu0
  %v4374 = vpop.f32.mrb[0].mxu0
  %v4375 = vadd.f32 %v4214, %v4374
  %v4376 = vpop.f32.mrb[0].mxu0
  %4377 = vmatprep.mubr.bf16.mxu0 %v3680
  %4378 = vmatmul.mubr.bf16.gmra.mrb[0].mxu0 %v3679
  %v4379 = vpop.f32.mrb[0].mxu0
  %v4380 = vadd.f32 %v4219, %v4379
  %v4381 = vpop.f32.mrb[0].mxu0
  %v4382 = vpop.f32.mrb[0].mxu0
  %v4383 = vadd.f32 %v4222, %v4382
  %v4384 = vpop.f32.mrb[0].mxu0
  %4385 = vmatprep.mubr.bf16.mxu0 %v3692
  %4386 = vmatmul.mubr.bf16.gmra.mrb[0].mxu0 %v3691
  %v4387 = vpop.f32.mrb[0].mxu0
  %v4388 = vadd.f32 %v4227, %v4387
  %v4389 = vpop.f32.mrb[0].mxu0
  %v4390 = vpop.f32.mrb[0].mxu0
  %v4391 = vadd.f32 %v4230, %v4390
  %v4392 = vpop.f32.mrb[0].mxu0
  %4393 = vmatprep.mubr.bf16.mxu0 %v3704
  %4394 = vmatmul.mubr.bf16.gmra.mrb[0].mxu0 %v3703
  %v4395 = vpop.f32.mrb[0].mxu0
  %v4396 = vadd.f32 %v4235, %v4395
  %v4397 = vpop.f32.mrb[0].mxu0
  %v4398 = vpop.f32.mrb[0].mxu0
  %v4399 = vadd.f32 %v4238, %v4398
  %v4400 = vpop.f32.mrb[0].mxu0
  %4401 = vmatprep.mubr.bf16.mxu0 %v3716
  %4402 = vmatmul.mubr.bf16.gmra.mrb[0].mxu0 %v3715
  %v4403 = vpop.f32.mrb[0].mxu0
  %v4404 = vadd.f32 %v4243, %v4403
  %v4405 = vpop.f32.mrb[0].mxu0
  %v4406 = vpop.f32.mrb[0].mxu0
  %v4407 = vadd.f32 %v4246, %v4406
  %v4408 = vpop.f32.mrb[0].mxu0
  %4409 = vmatprep.mubr.bf16.mxu0 %v3728
  %4410 = vmatmul.mubr.bf16.gmra.mrb[0].mxu0 %v3727
  %v4411 = vpop.f32.mrb[0].mxu0
  %v4412 = vadd.f32 %v4251, %v4411
  %v4413 = vpop.f32.mrb[0].mxu0
  %v4414 = vpop.f32.mrb[0].mxu0
  %v4415 = vadd.f32 %v4254, %v4414
  %v4416 = vpop.f32.mrb[0].mxu0
  %4417 = vmatprep.mubr.bf16.mxu0 %v3740
  %4418 = vmatmul.mubr.bf16.gmra.mrb[0].mxu0 %v3739
  %v4419 = vpop.f32.mrb[0].mxu0
  %v4420 = vadd.f32 %v4259, %v4419
  %v4421 = vpop.f32.mrb[0].mxu0
  %v4422 = vpop.f32.mrb[0].mxu0
  %v4423 = vadd.f32 %v4262, %v4422
  %v4424 = vpop.f32.mrb[0].mxu0
  %4425 = vmatprep.mubr.bf16.mxu0 %v3752
  %4426 = vmatmul.mubr.bf16.gmra.mrb[0].mxu0 %v3751
  %v4427 = vpop.f32.mrb[0].mxu0
  %v4428 = vadd.f32 %v4267, %v4427
  %v4429 = vpop.f32.mrb[0].mxu0
  %v4430 = vpop.f32.mrb[0].mxu0
  %v4431 = vadd.f32 %v4270, %v4430
  %v4432 = vpop.f32.mrb[0].mxu0
  %4433 = vdwg.mxu0
  %4434 = vmatprep.subr.bf16.mxu0 0
  %4435 = vmatpush1.bf16.msra.mxu0 %v2751
  %4436 = vmatprep.subr.bf16.mxu0 0
  %4437 = vmatpush1.bf16.msra.mxu0 %v2752
  %4438 = vmatprep.subr.bf16.mxu0 0
  %4439 = vmatpush1.bf16.msra.mxu0 %v2753
  %4440 = vmatprep.subr.bf16.mxu0 0
  %4441 = vmatpush1.bf16.msra.mxu0 %v2754
  %4442 = vmatprep.subr.bf16.mxu0 0
  %4443 = vmatpush1.bf16.msra.mxu0 %v2755
  %4444 = vmatprep.subr.bf16.mxu0 0
  %4445 = vmatpush1.bf16.msra.mxu0 %v2756
  %4446 = vmatprep.subr.bf16.mxu0 0
  %4447 = vmatpush1.bf16.msra.mxu0 %v2757
  %4448 = vmatprep.subr.bf16.mxu0 0
  %4449 = vmatpush1.bf16.msra.mxu0 %v2758
  %4450 = vmatprep.subr.bf16.mxu0 0
  %4451 = vmatpush1.bf16.msra.mxu0 %v2759
  %4452 = vmatprep.subr.bf16.mxu0 0
  %4453 = vmatpush1.bf16.msra.mxu0 %v2760
  %4454 = vmatprep.subr.bf16.mxu0 0
  %4455 = vmatpush1.bf16.msra.mxu0 %v2761
  %4456 = vmatprep.subr.bf16.mxu0 0
  %4457 = vmatpush1.bf16.msra.mxu0 %v2762
  %4458 = vmatprep.subr.bf16.mxu0 0
  %4459 = vmatpush1.bf16.msra.mxu0 %v2763
  %4460 = vmatprep.subr.bf16.mxu0 0
  %4461 = vmatpush1.bf16.msra.mxu0 %v2764
  %4462 = vmatprep.subr.bf16.mxu0 0
  %4463 = vmatpush1.bf16.msra.mxu0 %v2765
  %4464 = vmatprep.subr.bf16.mxu0 0
  %4465 = vmatpush1.bf16.msra.mxu0 %v2766
  %4466 = vmatprep.mubr.bf16.mxu0 %v3574
  %4467 = vmatmul.mubr.bf16.gmra.mrb[0].mxu0 %v3573
  %v4468 = vpop.f32.mrb[0].mxu0
  %v4469 = vadd.f32 %v4308, %v4468
  %v4470 = vpop.f32.mrb[0].mxu0
  %v4471 = vpop.f32.mrb[0].mxu0
  %v4472 = vadd.f32 %v4311, %v4471
  %v4473 = vpop.f32.mrb[0].mxu0
  %4474 = vmatprep.mubr.bf16.mxu0 %v3586
  %4475 = vmatmul.mubr.bf16.gmra.mrb[0].mxu0 %v3585
  %v4476 = vpop.f32.mrb[0].mxu0
  %v4477 = vadd.f32 %v4316, %v4476
  %v4478 = vpop.f32.mrb[0].mxu0
  %v4479 = vpop.f32.mrb[0].mxu0
  %v4480 = vadd.f32 %v4319, %v4479
  %v4481 = vpop.f32.mrb[0].mxu0
  %4482 = vmatprep.mubr.bf16.mxu0 %v3598
  %4483 = vmatmul.mubr.bf16.gmra.mrb[0].mxu0 %v3597
  %v4484 = vpop.f32.mrb[0].mxu0
  %v4485 = vadd.f32 %v4324, %v4484
  %v4486 = vpop.f32.mrb[0].mxu0
  %v4487 = vpop.f32.mrb[0].mxu0
  %v4488 = vadd.f32 %v4327, %v4487
  %v4489 = vpop.f32.mrb[0].mxu0
  %4490 = vmatprep.mubr.bf16.mxu0 %v3610
  %4491 = vmatmul.mubr.bf16.gmra.mrb[0].mxu0 %v3609
  %v4492 = vpop.f32.mrb[0].mxu0
  %v4493 = vadd.f32 %v4332, %v4492
  %v4494 = vpop.f32.mrb[0].mxu0
  %v4495 = vpop.f32.mrb[0].mxu0
  %v4496 = vadd.f32 %v4335, %v4495
  %v4497 = vpop.f32.mrb[0].mxu0
  %4498 = vmatprep.mubr.bf16.mxu0 %v3622
  %4499 = vmatmul.mubr.bf16.gmra.mrb[0].mxu0 %v3621
  %v4500 = vpop.f32.mrb[0].mxu0
  %v4501 = vadd.f32 %v4340, %v4500
  %v4502 = vpop.f32.mrb[0].mxu0
  %v4503 = vpop.f32.mrb[0].mxu0
  %v4504 = vadd.f32 %v4343, %v4503
  %v4505 = vpop.f32.mrb[0].mxu0
  %4506 = vmatprep.mubr.bf16.mxu0 %v3634
  %4507 = vmatmul.mubr.bf16.gmra.mrb[0].mxu0 %v3633
  %v4508 = vpop.f32.mrb[0].mxu0
  %v4509 = vadd.f32 %v4348, %v4508
  %v4510 = vpop.f32.mrb[0].mxu0
  %v4511 = vpop.f32.mrb[0].mxu0
  %v4512 = vadd.f32 %v4351, %v4511
  %v4513 = vpop.f32.mrb[0].mxu0
  %4514 = vmatprep.mubr.bf16.mxu0 %v3646
  %4515 = vmatmul.mubr.bf16.gmra.mrb[0].mxu0 %v3645
  %v4516 = vpop.f32.mrb[0].mxu0
  %v4517 = vadd.f32 %v4356, %v4516
  %v4518 = vpop.f32.mrb[0].mxu0
  %v4519 = vpop.f32.mrb[0].mxu0
  %v4520 = vadd.f32 %v4359, %v4519
  %v4521 = vpop.f32.mrb[0].mxu0
  %4522 = vmatprep.mubr.bf16.mxu0 %v3658
  %4523 = vmatmul.mubr.bf16.gmra.mrb[0].mxu0 %v3657
  %v4524 = vpop.f32.mrb[0].mxu0
  %v4525 = vadd.f32 %v4364, %v4524
  %v4526 = vpop.f32.mrb[0].mxu0
  %v4527 = vpop.f32.mrb[0].mxu0
  %v4528 = vadd.f32 %v4367, %v4527
  %v4529 = vpop.f32.mrb[0].mxu0
  %4530 = vmatprep.mubr.bf16.mxu0 %v3670
  %4531 = vmatmul.mubr.bf16.gmra.mrb[0].mxu0 %v3669
  %v4532 = vpop.f32.mrb[0].mxu0
  %v4533 = vadd.f32 %v4372, %v4532
  %v4534 = vpop.f32.mrb[0].mxu0
  %v4535 = vpop.f32.mrb[0].mxu0
  %v4536 = vadd.f32 %v4375, %v4535
  %v4537 = vpop.f32.mrb[0].mxu0
  %4538 = vmatprep.mubr.bf16.mxu0 %v3682
  %4539 = vmatmul.mubr.bf16.gmra.mrb[0].mxu0 %v3681
  %v4540 = vpop.f32.mrb[0].mxu0
  %v4541 = vadd.f32 %v4380, %v4540
  %v4542 = vpop.f32.mrb[0].mxu0
  %v4543 = vpop.f32.mrb[0].mxu0
  %v4544 = vadd.f32 %v4383, %v4543
  %v4545 = vpop.f32.mrb[0].mxu0
  %4546 = vmatprep.mubr.bf16.mxu0 %v3694
  %4547 = vmatmul.mubr.bf16.gmra.mrb[0].mxu0 %v3693
  %v4548 = vpop.f32.mrb[0].mxu0
  %v4549 = vadd.f32 %v4388, %v4548
  %v4550 = vpop.f32.mrb[0].mxu0
  %v4551 = vpop.f32.mrb[0].mxu0
  %v4552 = vadd.f32 %v4391, %v4551
  %v4553 = vpop.f32.mrb[0].mxu0
  %4554 = vmatprep.mubr.bf16.mxu0 %v3706
  %4555 = vmatmul.mubr.bf16.gmra.mrb[0].mxu0 %v3705
  %v4556 = vpop.f32.mrb[0].mxu0
  %v4557 = vadd.f32 %v4396, %v4556
  %v4558 = vpop.f32.mrb[0].mxu0
  %v4559 = vpop.f32.mrb[0].mxu0
  %v4560 = vadd.f32 %v4399, %v4559
  %v4561 = vpop.f32.mrb[0].mxu0
  %4562 = vmatprep.mubr.bf16.mxu0 %v3718
  %4563 = vmatmul.mubr.bf16.gmra.mrb[0].mxu0 %v3717
  %v4564 = vpop.f32.mrb[0].mxu0
  %v4565 = vadd.f32 %v4404, %v4564
  %v4566 = vpop.f32.mrb[0].mxu0
  %v4567 = vpop.f32.mrb[0].mxu0
  %v4568 = vadd.f32 %v4407, %v4567
  %v4569 = vpop.f32.mrb[0].mxu0
  %4570 = vmatprep.mubr.bf16.mxu0 %v3730
  %4571 = vmatmul.mubr.bf16.gmra.mrb[0].mxu0 %v3729
  %v4572 = vpop.f32.mrb[0].mxu0
  %v4573 = vadd.f32 %v4412, %v4572
  %v4574 = vpop.f32.mrb[0].mxu0
  %v4575 = vpop.f32.mrb[0].mxu0
  %v4576 = vadd.f32 %v4415, %v4575
  %v4577 = vpop.f32.mrb[0].mxu0
  %4578 = vmatprep.mubr.bf16.mxu0 %v3742
  %4579 = vmatmul.mubr.bf16.gmra.mrb[0].mxu0 %v3741
  %v4580 = vpop.f32.mrb[0].mxu0
  %v4581 = vadd.f32 %v4420, %v4580
  %v4582 = vpop.f32.mrb[0].mxu0
  %v4583 = vpop.f32.mrb[0].mxu0
  %v4584 = vadd.f32 %v4423, %v4583
  %v4585 = vpop.f32.mrb[0].mxu0
  %4586 = vmatprep.mubr.bf16.mxu0 %v3754
  %4587 = vmatmul.mubr.bf16.gmra.mrb[0].mxu0 %v3753
  %v4588 = vpop.f32.mrb[0].mxu0
  %v4589 = vadd.f32 %v4428, %v4588
  %v4590 = vpop.f32.mrb[0].mxu0
  %v4591 = vpop.f32.mrb[0].mxu0
  %v4592 = vadd.f32 %v4431, %v4591
  %v4593 = vpop.f32.mrb[0].mxu0
  %4594 = vdwg.mxu0
  %4595 = vmatprep.subr.bf16.mxu0 0
  %4596 = vmatpush1.bf16.msra.mxu0 %v2767
  %4597 = vmatprep.subr.bf16.mxu0 0
  %4598 = vmatpush1.bf16.msra.mxu0 %v2768
  %4599 = vmatprep.subr.bf16.mxu0 0
  %4600 = vmatpush1.bf16.msra.mxu0 %v2769
  %4601 = vmatprep.subr.bf16.mxu0 0
  %4602 = vmatpush1.bf16.msra.mxu0 %v2770
  %4603 = vmatprep.subr.bf16.mxu0 0
  %4604 = vmatpush1.bf16.msra.mxu0 %v2771
  %4605 = vmatprep.subr.bf16.mxu0 0
  %4606 = vmatpush1.bf16.msra.mxu0 %v2772
  %4607 = vmatprep.subr.bf16.mxu0 0
  %4608 = vmatpush1.bf16.msra.mxu0 %v2773
  %4609 = vmatprep.subr.bf16.mxu0 0
  %4610 = vmatpush1.bf16.msra.mxu0 %v2774
  %4611 = vmatprep.subr.bf16.mxu0 0
  %4612 = vmatpush1.bf16.msra.mxu0 %v2775
  %4613 = vmatprep.subr.bf16.mxu0 0
  %4614 = vmatpush1.bf16.msra.mxu0 %v2776
  %4615 = vmatprep.subr.bf16.mxu0 0
  %4616 = vmatpush1.bf16.msra.mxu0 %v2777
  %4617 = vmatprep.subr.bf16.mxu0 0
  %4618 = vmatpush1.bf16.msra.mxu0 %v2778
  %4619 = vmatprep.subr.bf16.mxu0 0
  %4620 = vmatpush1.bf16.msra.mxu0 %v2779
  %4621 = vmatprep.subr.bf16.mxu0 0
  %4622 = vmatpush1.bf16.msra.mxu0 %v2780
  %4623 = vmatprep.subr.bf16.mxu0 0
  %4624 = vmatpush1.bf16.msra.mxu0 %v2781
  %4625 = vmatprep.subr.bf16.mxu0 0
  %4626 = vmatpush1.bf16.msra.mxu0 %v2782
  %4627 = vmatprep.mubr.bf16.mxu0 %v3576
  %4628 = vmatmul.mubr.bf16.gmra.mrb[0].mxu0 %v3575
  %v4629 = vpop.f32.mrb[0].mxu0
  %v4630 = vadd.f32 %v4469, %v4629
  %v4631 = vpop.f32.mrb[0].mxu0
  %v4632 = vpop.f32.mrb[0].mxu0
  %v4633 = vadd.f32 %v4472, %v4632
  %v4634 = vpop.f32.mrb[0].mxu0
  %4635 = vmatprep.mubr.bf16.mxu0 %v3588
  %4636 = vmatmul.mubr.bf16.gmra.mrb[0].mxu0 %v3587
  %v4637 = vpop.f32.mrb[0].mxu0
  %v4638 = vadd.f32 %v4477, %v4637
  %v4639 = vpop.f32.mrb[0].mxu0
  %v4640 = vpop.f32.mrb[0].mxu0
  %v4641 = vadd.f32 %v4480, %v4640
  %v4642 = vpop.f32.mrb[0].mxu0
  %4643 = vmatprep.mubr.bf16.mxu0 %v3600
  %4644 = vmatmul.mubr.bf16.gmra.mrb[0].mxu0 %v3599
  %v4645 = vpop.f32.mrb[0].mxu0
  %v4646 = vadd.f32 %v4485, %v4645
  %v4647 = vpop.f32.mrb[0].mxu0
  %v4648 = vpop.f32.mrb[0].mxu0
  %v4649 = vadd.f32 %v4488, %v4648
  %v4650 = vpop.f32.mrb[0].mxu0
  %4651 = vmatprep.mubr.bf16.mxu0 %v3612
  %4652 = vmatmul.mubr.bf16.gmra.mrb[0].mxu0 %v3611
  %v4653 = vpop.f32.mrb[0].mxu0
  %v4654 = vadd.f32 %v4493, %v4653
  %v4655 = vpop.f32.mrb[0].mxu0
  %v4656 = vpop.f32.mrb[0].mxu0
  %v4657 = vadd.f32 %v4496, %v4656
  %v4658 = vpop.f32.mrb[0].mxu0
  %4659 = vmatprep.mubr.bf16.mxu0 %v3624
  %4660 = vmatmul.mubr.bf16.gmra.mrb[0].mxu0 %v3623
  %v4661 = vpop.f32.mrb[0].mxu0
  %v4662 = vadd.f32 %v4501, %v4661
  %v4663 = vpop.f32.mrb[0].mxu0
  %v4664 = vpop.f32.mrb[0].mxu0
  %v4665 = vadd.f32 %v4504, %v4664
  %v4666 = vpop.f32.mrb[0].mxu0
  %4667 = vmatprep.mubr.bf16.mxu0 %v3636
  %4668 = vmatmul.mubr.bf16.gmra.mrb[0].mxu0 %v3635
  %v4669 = vpop.f32.mrb[0].mxu0
  %v4670 = vadd.f32 %v4509, %v4669
  %v4671 = vpop.f32.mrb[0].mxu0
  %v4672 = vpop.f32.mrb[0].mxu0
  %v4673 = vadd.f32 %v4512, %v4672
  %v4674 = vpop.f32.mrb[0].mxu0
  %4675 = vmatprep.mubr.bf16.mxu0 %v3648
  %4676 = vmatmul.mubr.bf16.gmra.mrb[0].mxu0 %v3647
  %v4677 = vpop.f32.mrb[0].mxu0
  %v4678 = vadd.f32 %v4517, %v4677
  %v4679 = vpop.f32.mrb[0].mxu0
  %v4680 = vpop.f32.mrb[0].mxu0
  %v4681 = vadd.f32 %v4520, %v4680
  %v4682 = vpop.f32.mrb[0].mxu0
  %4683 = vmatprep.mubr.bf16.mxu0 %v3660
  %4684 = vmatmul.mubr.bf16.gmra.mrb[0].mxu0 %v3659
  %v4685 = vpop.f32.mrb[0].mxu0
  %v4686 = vadd.f32 %v4525, %v4685
  %v4687 = vpop.f32.mrb[0].mxu0
  %v4688 = vpop.f32.mrb[0].mxu0
  %v4689 = vadd.f32 %v4528, %v4688
  %v4690 = vpop.f32.mrb[0].mxu0
  %4691 = vmatprep.mubr.bf16.mxu0 %v3672
  %4692 = vmatmul.mubr.bf16.gmra.mrb[0].mxu0 %v3671
  %v4693 = vpop.f32.mrb[0].mxu0
  %v4694 = vadd.f32 %v4533, %v4693
  %v4695 = vpop.f32.mrb[0].mxu0
  %v4696 = vpop.f32.mrb[0].mxu0
  %v4697 = vadd.f32 %v4536, %v4696
  %v4698 = vpop.f32.mrb[0].mxu0
  %4699 = vmatprep.mubr.bf16.mxu0 %v3684
  %4700 = vmatmul.mubr.bf16.gmra.mrb[0].mxu0 %v3683
  %v4701 = vpop.f32.mrb[0].mxu0
  %v4702 = vadd.f32 %v4541, %v4701
  %v4703 = vpop.f32.mrb[0].mxu0
  %v4704 = vpop.f32.mrb[0].mxu0
  %v4705 = vadd.f32 %v4544, %v4704
  %v4706 = vpop.f32.mrb[0].mxu0
  %4707 = vmatprep.mubr.bf16.mxu0 %v3696
  %4708 = vmatmul.mubr.bf16.gmra.mrb[0].mxu0 %v3695
  %v4709 = vpop.f32.mrb[0].mxu0
  %v4710 = vadd.f32 %v4549, %v4709
  %v4711 = vpop.f32.mrb[0].mxu0
  %v4712 = vpop.f32.mrb[0].mxu0
  %v4713 = vadd.f32 %v4552, %v4712
  %v4714 = vpop.f32.mrb[0].mxu0
  %4715 = vmatprep.mubr.bf16.mxu0 %v3708
  %4716 = vmatmul.mubr.bf16.gmra.mrb[0].mxu0 %v3707
  %v4717 = vpop.f32.mrb[0].mxu0
  %v4718 = vadd.f32 %v4557, %v4717
  %v4719 = vpop.f32.mrb[0].mxu0
  %v4720 = vpop.f32.mrb[0].mxu0
  %v4721 = vadd.f32 %v4560, %v4720
  %v4722 = vpop.f32.mrb[0].mxu0
  %4723 = vmatprep.mubr.bf16.mxu0 %v3720
  %4724 = vmatmul.mubr.bf16.gmra.mrb[0].mxu0 %v3719
  %v4725 = vpop.f32.mrb[0].mxu0
  %v4726 = vadd.f32 %v4565, %v4725
  %v4727 = vpop.f32.mrb[0].mxu0
  %v4728 = vpop.f32.mrb[0].mxu0
  %v4729 = vadd.f32 %v4568, %v4728
  %v4730 = vpop.f32.mrb[0].mxu0
  %4731 = vmatprep.mubr.bf16.mxu0 %v3732
  %4732 = vmatmul.mubr.bf16.gmra.mrb[0].mxu0 %v3731
  %v4733 = vpop.f32.mrb[0].mxu0
  %v4734 = vadd.f32 %v4573, %v4733
  %v4735 = vpop.f32.mrb[0].mxu0
  %v4736 = vpop.f32.mrb[0].mxu0
  %v4737 = vadd.f32 %v4576, %v4736
  %v4738 = vpop.f32.mrb[0].mxu0
  %4739 = vmatprep.mubr.bf16.mxu0 %v3744
  %4740 = vmatmul.mubr.bf16.gmra.mrb[0].mxu0 %v3743
  %v4741 = vpop.f32.mrb[0].mxu0
  %v4742 = vadd.f32 %v4581, %v4741
  %v4743 = vpop.f32.mrb[0].mxu0
  %v4744 = vpop.f32.mrb[0].mxu0
  %v4745 = vadd.f32 %v4584, %v4744
  %v4746 = vpop.f32.mrb[0].mxu0
  %4747 = vmatprep.mubr.bf16.mxu0 %v3756
  %4748 = vmatmul.mubr.bf16.gmra.mrb[0].mxu0 %v3755
  %v4749 = vpop.f32.mrb[0].mxu0
  %v4750 = vadd.f32 %v4589, %v4749
  %v4751 = vpop.f32.mrb[0].mxu0
  %v4752 = vpop.f32.mrb[0].mxu0
  %v4753 = vadd.f32 %v4592, %v4752
  %v4754 = vpop.f32.mrb[0].mxu0
  %4755 = vdwg.mxu0
  %4756 = vmatprep.subr.bf16.mxu0 0
  %4757 = vmatpush1.bf16.msra.mxu0 %v2783
  %4758 = vmatprep.subr.bf16.mxu0 0
  %4759 = vmatpush1.bf16.msra.mxu0 %v2784
  %4760 = vmatprep.subr.bf16.mxu0 0
  %4761 = vmatpush1.bf16.msra.mxu0 %v2785
  %4762 = vmatprep.subr.bf16.mxu0 0
  %4763 = vmatpush1.bf16.msra.mxu0 %v2786
  %4764 = vmatprep.subr.bf16.mxu0 0
  %4765 = vmatpush1.bf16.msra.mxu0 %v2787
  %4766 = vmatprep.subr.bf16.mxu0 0
  %4767 = vmatpush1.bf16.msra.mxu0 %v2788
  %4768 = vmatprep.subr.bf16.mxu0 0
  %4769 = vmatpush1.bf16.msra.mxu0 %v2789
  %4770 = vmatprep.subr.bf16.mxu0 0
  %4771 = vmatpush1.bf16.msra.mxu0 %v2790
  %4772 = vmatprep.subr.bf16.mxu0 0
  %4773 = vmatpush1.bf16.msra.mxu0 %v2791
  %4774 = vmatprep.subr.bf16.mxu0 0
  %4775 = vmatpush1.bf16.msra.mxu0 %v2792
  %4776 = vmatprep.subr.bf16.mxu0 0
  %4777 = vmatpush1.bf16.msra.mxu0 %v2793
  %4778 = vmatprep.subr.bf16.mxu0 0
  %4779 = vmatpush1.bf16.msra.mxu0 %v2794
  %4780 = vmatprep.subr.bf16.mxu0 0
  %4781 = vmatpush1.bf16.msra.mxu0 %v2795
  %4782 = vmatprep.subr.bf16.mxu0 0
  %4783 = vmatpush1.bf16.msra.mxu0 %v2796
  %4784 = vmatprep.subr.bf16.mxu0 0
  %4785 = vmatpush1.bf16.msra.mxu0 %v2797
  %4786 = vmatprep.subr.bf16.mxu0 0
  %4787 = vmatpush1.bf16.msra.mxu0 %v2798
  %4788 = vmatprep.mubr.bf16.mxu0 %v3578
  %4789 = vmatmul.mubr.bf16.gmra.mrb[0].mxu0 %v3577
  %v4790 = vpop.f32.mrb[0].mxu0
  %v4791 = vadd.f32 %v4630, %v4790
  %v4792 = vpop.f32.mrb[0].mxu0
  %v4793 = vpop.f32.mrb[0].mxu0
  %v4794 = vadd.f32 %v4633, %v4793
  %v4795 = vpop.f32.mrb[0].mxu0
  %4796 = vmatprep.mubr.bf16.mxu0 %v3590
  %4797 = vmatmul.mubr.bf16.gmra.mrb[0].mxu0 %v3589
  %v4798 = vpop.f32.mrb[0].mxu0
  %v4799 = vadd.f32 %v4638, %v4798
  %v4800 = vpop.f32.mrb[0].mxu0
  %v4801 = vpop.f32.mrb[0].mxu0
  %v4802 = vadd.f32 %v4641, %v4801
  %v4803 = vpop.f32.mrb[0].mxu0
  %4804 = vmatprep.mubr.bf16.mxu0 %v3602
  %4805 = vmatmul.mubr.bf16.gmra.mrb[0].mxu0 %v3601
  %v4806 = vpop.f32.mrb[0].mxu0
  %v4807 = vadd.f32 %v4646, %v4806
  %v4808 = vpop.f32.mrb[0].mxu0
  %v4809 = vpop.f32.mrb[0].mxu0
  %v4810 = vadd.f32 %v4649, %v4809
  %v4811 = vpop.f32.mrb[0].mxu0
  %4812 = vmatprep.mubr.bf16.mxu0 %v3614
  %4813 = vmatmul.mubr.bf16.gmra.mrb[0].mxu0 %v3613
  %v4814 = vpop.f32.mrb[0].mxu0
  %v4815 = vadd.f32 %v4654, %v4814
  %v4816 = vpop.f32.mrb[0].mxu0
  %v4817 = vpop.f32.mrb[0].mxu0
  %v4818 = vadd.f32 %v4657, %v4817
  %v4819 = vpop.f32.mrb[0].mxu0
  %4820 = vmatprep.mubr.bf16.mxu0 %v3626
  %4821 = vmatmul.mubr.bf16.gmra.mrb[0].mxu0 %v3625
  %v4822 = vpop.f32.mrb[0].mxu0
  %v4823 = vadd.f32 %v4662, %v4822
  %v4824 = vpop.f32.mrb[0].mxu0
  %v4825 = vpop.f32.mrb[0].mxu0
  %v4826 = vadd.f32 %v4665, %v4825
  %v4827 = vpop.f32.mrb[0].mxu0
  %4828 = vmatprep.mubr.bf16.mxu0 %v3638
  %4829 = vmatmul.mubr.bf16.gmra.mrb[0].mxu0 %v3637
  %v4830 = vpop.f32.mrb[0].mxu0
  %v4831 = vadd.f32 %v4670, %v4830
  %v4832 = vpop.f32.mrb[0].mxu0
  %v4833 = vpop.f32.mrb[0].mxu0
  %v4834 = vadd.f32 %v4673, %v4833
  %v4835 = vpop.f32.mrb[0].mxu0
  %4836 = vmatprep.mubr.bf16.mxu0 %v3650
  %4837 = vmatmul.mubr.bf16.gmra.mrb[0].mxu0 %v3649
  %v4838 = vpop.f32.mrb[0].mxu0
  %v4839 = vadd.f32 %v4678, %v4838
  %v4840 = vpop.f32.mrb[0].mxu0
  %v4841 = vpop.f32.mrb[0].mxu0
  %v4842 = vadd.f32 %v4681, %v4841
  %v4843 = vpop.f32.mrb[0].mxu0
  %4844 = vmatprep.mubr.bf16.mxu0 %v3662
  %4845 = vmatmul.mubr.bf16.gmra.mrb[0].mxu0 %v3661
  %v4846 = vpop.f32.mrb[0].mxu0
  %v4847 = vadd.f32 %v4686, %v4846
  %v4848 = vpop.f32.mrb[0].mxu0
  %v4849 = vpop.f32.mrb[0].mxu0
  %v4850 = vadd.f32 %v4689, %v4849
  %v4851 = vpop.f32.mrb[0].mxu0
  %4852 = vmatprep.mubr.bf16.mxu0 %v3674
  %4853 = vmatmul.mubr.bf16.gmra.mrb[0].mxu0 %v3673
  %v4854 = vpop.f32.mrb[0].mxu0
  %v4855 = vadd.f32 %v4694, %v4854
  %v4856 = vpop.f32.mrb[0].mxu0
  %v4857 = vpop.f32.mrb[0].mxu0
  %v4858 = vadd.f32 %v4697, %v4857
  %v4859 = vpop.f32.mrb[0].mxu0
  %4860 = vmatprep.mubr.bf16.mxu0 %v3686
  %4861 = vmatmul.mubr.bf16.gmra.mrb[0].mxu0 %v3685
  %v4862 = vpop.f32.mrb[0].mxu0
  %v4863 = vadd.f32 %v4702, %v4862
  %v4864 = vpop.f32.mrb[0].mxu0
  %v4865 = vpop.f32.mrb[0].mxu0
  %v4866 = vadd.f32 %v4705, %v4865
  %v4867 = vpop.f32.mrb[0].mxu0
  %4868 = vmatprep.mubr.bf16.mxu0 %v3698
  %4869 = vmatmul.mubr.bf16.gmra.mrb[0].mxu0 %v3697
  %v4870 = vpop.f32.mrb[0].mxu0
  %v4871 = vadd.f32 %v4710, %v4870
  %v4872 = vpop.f32.mrb[0].mxu0
  %v4873 = vpop.f32.mrb[0].mxu0
  %v4874 = vadd.f32 %v4713, %v4873
  %v4875 = vpop.f32.mrb[0].mxu0
  %4876 = vmatprep.mubr.bf16.mxu0 %v3710
  %4877 = vmatmul.mubr.bf16.gmra.mrb[0].mxu0 %v3709
  %v4878 = vpop.f32.mrb[0].mxu0
  %v4879 = vadd.f32 %v4718, %v4878
  %v4880 = vpop.f32.mrb[0].mxu0
  %v4881 = vpop.f32.mrb[0].mxu0
  %v4882 = vadd.f32 %v4721, %v4881
  %v4883 = vpop.f32.mrb[0].mxu0
  %4884 = vmatprep.mubr.bf16.mxu0 %v3722
  %4885 = vmatmul.mubr.bf16.gmra.mrb[0].mxu0 %v3721
  %v4886 = vpop.f32.mrb[0].mxu0
  %v4887 = vadd.f32 %v4726, %v4886
  %v4888 = vpop.f32.mrb[0].mxu0
  %v4889 = vpop.f32.mrb[0].mxu0
  %v4890 = vadd.f32 %v4729, %v4889
  %v4891 = vpop.f32.mrb[0].mxu0
  %4892 = vmatprep.mubr.bf16.mxu0 %v3734
  %4893 = vmatmul.mubr.bf16.gmra.mrb[0].mxu0 %v3733
  %v4894 = vpop.f32.mrb[0].mxu0
  %v4895 = vadd.f32 %v4734, %v4894
  %v4896 = vpop.f32.mrb[0].mxu0
  %v4897 = vpop.f32.mrb[0].mxu0
  %v4898 = vadd.f32 %v4737, %v4897
  %v4899 = vpop.f32.mrb[0].mxu0
  %4900 = vmatprep.mubr.bf16.mxu0 %v3746
  %4901 = vmatmul.mubr.bf16.gmra.mrb[0].mxu0 %v3745
  %v4902 = vpop.f32.mrb[0].mxu0
  %v4903 = vadd.f32 %v4742, %v4902
  %v4904 = vpop.f32.mrb[0].mxu0
  %v4905 = vpop.f32.mrb[0].mxu0
  %v4906 = vadd.f32 %v4745, %v4905
  %v4907 = vpop.f32.mrb[0].mxu0
  %4908 = vmatprep.mubr.bf16.mxu0 %v3758
  %4909 = vmatmul.mubr.bf16.gmra.mrb[0].mxu0 %v3757
  %v4910 = vpop.f32.mrb[0].mxu0
  %v4911 = vadd.f32 %v4750, %v4910
  %v4912 = vpop.f32.mrb[0].mxu0
  %v4913 = vpop.f32.mrb[0].mxu0
  %v4914 = vadd.f32 %v4753, %v4913
  %v4915 = vpop.f32.mrb[0].mxu0
  %4916 = vdwg.mxu0
  %vm4917 = vcmask 400384
  %4918 = vst.msk [vmem:[%s3] sm:$0xff] %vm4917, %v4791
  %4919 = vst.msk [vmem:[%s3 + $0x8] sm:$0xff] %vm4917, %v4794
  %4920 = vst.msk [vmem:[%s3 + $0x10] sm:$0xff] %vm4917, %v4799
  %4921 = vst.msk [vmem:[%s3 + $0x18] sm:$0xff] %vm4917, %v4802
  %4922 = vst.msk [vmem:[%s3 + $0x20] sm:$0xff] %vm4917, %v4807
  %4923 = vst.msk [vmem:[%s3 + $0x28] sm:$0xff] %vm4917, %v4810
  %4924 = vst.msk [vmem:[%s3 + $0x30] sm:$0xff] %vm4917, %v4815
  %4925 = vst.msk [vmem:[%s3 + $0x38] sm:$0xff] %vm4917, %v4818
  %4926 = vst.msk [vmem:[%s3 + $0x40] sm:$0xff] %vm4917, %v4823
  %4927 = vst.msk [vmem:[%s3 + $0x48] sm:$0xff] %vm4917, %v4826
  %4928 = vst.msk [vmem:[%s3 + $0x50] sm:$0xff] %vm4917, %v4831
  %4929 = vst.msk [vmem:[%s3 + $0x58] sm:$0xff] %vm4917, %v4834
  %4930 = vst.msk [vmem:[%s3 + $0x60] sm:$0xff] %vm4917, %v4839
  %4931 = vst.msk [vmem:[%s3 + $0x68] sm:$0xff] %vm4917, %v4842
  %4932 = vst.msk [vmem:[%s3 + $0x70] sm:$0xff] %vm4917, %v4847
  %4933 = vst.msk [vmem:[%s3 + $0x78] sm:$0xff] %vm4917, %v4850
  %4934 = vst.msk [vmem:[%s3 + $0x80] sm:$0xff] %vm4917, %v4855
  %4935 = vst.msk [vmem:[%s3 + $0x88] sm:$0xff] %vm4917, %v4858
  %4936 = vst.msk [vmem:[%s3 + $0x90] sm:$0xff] %vm4917, %v4863
  %4937 = vst.msk [vmem:[%s3 + $0x98] sm:$0xff] %vm4917, %v4866
  %4938 = vst.msk [vmem:[%s3 + $0xa0] sm:$0xff] %vm4917, %v4871
  %4939 = vst.msk [vmem:[%s3 + $0xa8] sm:$0xff] %vm4917, %v4874
  %4940 = vst.msk [vmem:[%s3 + $0xb0] sm:$0xff] %vm4917, %v4879
  %4941 = vst.msk [vmem:[%s3 + $0xb8] sm:$0xff] %vm4917, %v4882
  %4942 = vst.msk [vmem:[%s3 + $0xc0] sm:$0xff] %vm4917, %v4887
  %4943 = vst.msk [vmem:[%s3 + $0xc8] sm:$0xff] %vm4917, %v4890
  %4944 = vst.msk [vmem:[%s3 + $0xd0] sm:$0xff] %vm4917, %v4895
  %4945 = vst.msk [vmem:[%s3 + $0xd8] sm:$0xff] %vm4917, %v4898
  %4946 = vst.msk [vmem:[%s3 + $0xe0] sm:$0xff] %vm4917, %v4903
  %4947 = vst.msk [vmem:[%s3 + $0xe8] sm:$0xff] %vm4917, %v4906
  %4948 = vst.msk [vmem:[%s3 + $0xf0] sm:$0xff] %vm4917, %v4911
  %4949 = vst.msk [vmem:[%s3 + $0xf8] sm:$0xff] %vm4917, %v4914
  // Predicated region
  $region14: #{sigmoid_mul_conv1x1.1} parent=0 // pred_check
    _
  $region15: #{sigmoid_mul_conv1x1.1} parent=0 // pred_check_branch
    %4951 = sbr.rel (0) target = $region17
  $region16: #{sigmoid_mul_conv1x1.1} parent=0 // pred_region
    _
  $region17: #{sigmoid_mul_conv1x1.1} parent=0 // pred_fallthru
    _
  // Predicated region
  $region18: #{sigmoid_mul_conv1x1.1} parent=0 // pred_check
    _
  $region19: #{sigmoid_mul_conv1x1.1} parent=0 // pred_check_branch
    %4953 = sbr.rel (0) target = $region21
  $region20: #{sigmoid_mul_conv1x1.1} parent=0 // pred_region
    _
  $region21: #{sigmoid_mul_conv1x1.1} parent=0 // pred_fallthru
    _

</llo_original>
